<compile_context>
chip_gen: v7x
topology: tpu7x:2x2x1
jax: 0.10.0
libtpu: 0.0.40
codegen_flags: <defaults>
</compile_context>

<pallas_src>
import math

import jax
import jax.numpy as jnp
from jax.experimental import pallas as pl
from jax.experimental.pallas import tpu as pltpu

HIDDEN = 32
HEADS = 4
HEAD_DIM = HIDDEN // HEADS
NUM_LAYERS = 2

NODE_TYPES = ("law_cases", "keywords")
NUM_NODES = {"law_cases": 8, "keywords": 16}
IN_DIMS = {"law_cases": 16, "keywords": 24}
EDGE_TYPES = (
    ("law_cases", "mentions", "keywords"),     # src=law_cases,  dst=keywords
    ("keywords", "rev_mentions", "law_cases"),  # src=keywords,   dst=law_cases
)

_VMEM_SPEC = pl.BlockSpec(memory_space=pltpu.MemorySpace.VMEM)

# exact (erf-based) gelu; erf via Abramowitz & Stegun 7.1.26, |err| < 1.5e-7
# (~f32 eps), built only from exp / div / select which lower cleanly in Mosaic.
_ERF_P = 0.3275911
_ERF_A = (0.254829592, -0.284496736, 1.421413741, -1.453152027, 1.061405429)


def _erf_approx(x):
    a1, a2, a3, a4, a5 = _ERF_A
    ax = jnp.abs(x)
    t = 1.0 / (1.0 + _ERF_P * ax)
    poly = ((((a5 * t + a4) * t + a3) * t + a2) * t + a1) * t
    y = 1.0 - poly * jnp.exp(-(ax * ax))
    return jnp.where(x >= 0.0, y, -y)


def _gelu_exact(x):
    return 0.5 * x * (1.0 + _erf_approx(x * (1.0 / math.sqrt(2.0))))


def _mlp2_relu(x, w1, b1, w2, b2):
    h = jnp.maximum(jnp.dot(x, w1, preferred_element_type=jnp.float32) + b1, 0.0)
    return jnp.maximum(jnp.dot(h, w2, preferred_element_type=jnp.float32) + b2, 0.0)


def _hgt_edge_attention(q, k, v, a_rel_bd, m_rel_bd, mask):
    # q: (Nd, H*D), k/v: (Ns, H*D), a_rel_bd/m_rel_bd: (H*D, H*D) block-diagonal
    # (a_rel already scaled by p_rel/sqrt(D)); mask: (Nd, Ns) dense adjacency.
    k_rel = jnp.dot(k, a_rel_bd, preferred_element_type=jnp.float32)   # (Ns, H*D)
    v_rel = jnp.dot(v, m_rel_bd, preferred_element_type=jnp.float32)   # (Ns, H*D)
    on_edge = mask > 0.0
    msgs = []
    for h in range(HEADS):                      # static unroll, all in one body
        lo, hi = h * HEAD_DIM, (h + 1) * HEAD_DIM
        s = jax.lax.dot_general(                # (Nd, Ns) scores for head h
            q[:, lo:hi], k_rel[:, lo:hi],
            (((1,), (1,)), ((), ())),
            preferred_element_type=jnp.float32)
        s = jnp.where(on_edge, s, -1e30)
        s = s - jnp.max(s, axis=-1, keepdims=True)
        e = jnp.where(on_edge, jnp.exp(s), 0.0)
        denom = jnp.sum(e, axis=-1, keepdims=True)
        denom = jnp.where(denom > 0.0, denom, 1.0)   # isolated dst -> zero msg
        alpha = e * pl.reciprocal(denom, approx=True)
        msgs.append(jnp.dot(alpha, v_rel[:, lo:hi],
                            preferred_element_type=jnp.float32))
    return jnp.concatenate(msgs, axis=-1)       # (Nd, H*D)


# ------------------------- single fused Pallas kernel ----------------------- #

def _fused_forward_kernel(*refs):
    (x_law_ref, x_kw_ref, m_l2k_ref, m_k2l_ref,
     ll_w1, ll_b1, ll_w2, ll_b2,
     lk_w1, lk_b1, lk_w2, lk_b2,
     kqvw_l, kqvb_l, kqvw_k, kqvb_k,
     A_lk, M_lk, A_kl, M_kl,
     aw_l, ab_l, aw_k, ab_k,
     sk_l, sk_k,
     c1w_l, c1b_l, c2w_l, c2b_l,
     c1w_k, c1b_k, c2w_k, c2b_k,
     out_law_ref) = refs

    # 1. per-node-type input MLP (+ relu_)
    x_law = _mlp2_relu(x_law_ref[...], ll_w1[...], ll_b1[...], ll_w2[...], ll_b2[...])
    x_kw = _mlp2_relu(x_kw_ref[...], lk_w1[...], lk_b1[...], lk_w2[...], lk_b2[...])

    mask_l2k = m_l2k_ref[...]   # (Nk, Nl): dst=keywords,  src=law_cases
    mask_k2l = m_k2l_ref[...]   # (Nl, Nk): dst=law_cases, src=keywords

    # 2. HGTConv stack (statically unrolled over layers)
    for l in range(NUM_LAYERS):
        # fused k/q/v projection per node type: one (N,32)@(32,96) matmul
        kqv_l = jnp.dot(x_law, kqvw_l[l], preferred_element_type=jnp.float32) + kqvb_l[l]
        kqv_k = jnp.dot(x_kw, kqvw_k[l], preferred_element_type=jnp.float32) + kqvb_k[l]
        k_l, q_l, v_l = (kqv_l[:, :HIDDEN], kqv_l[:, HIDDEN:2 * HIDDEN],
                         kqv_l[:, 2 * HIDDEN:])
        k_k, q_k, v_k = (kqv_k[:, :HIDDEN], kqv_k[:, HIDDEN:2 * HIDDEN],
                         kqv_k[:, 2 * HIDDEN:])

        # edge ('law_cases','mentions','keywords'): messages into keywords
        msg_kw = _hgt_edge_attention(q_k, k_l, v_l, A_lk[l], M_lk[l], mask_l2k)
        # edge ('keywords','rev_mentions','law_cases'): messages into law_cases
        msg_law = _hgt_edge_attention(q_l, k_k, v_k, A_kl[l], M_kl[l], mask_k2l)

        # group='mean' over incoming edge types (each dst type has exactly one),
        # then gelu -> a_lin -> sigmoid-skip mix.
        def node_update(msg, a_w, a_b, alpha_skip, x_prev):
            o = _gelu_exact(msg)
            o = jnp.dot(o, a_w, preferred_element_type=jnp.float32) + a_b
            return alpha_skip * o + (1.0 - alpha_skip) * x_prev

        x_law = node_update(msg_law, aw_l[l], ab_l[l], sk_l[l], x_law)
        x_kw = node_update(msg_kw, aw_k[l], ab_k[l], sk_k[l], x_kw)

        # convs_lin: per-node-type MLP (+ relu_)
        x_law = _mlp2_relu(x_law, c1w_l[l], c1b_l[l], c2w_l[l], c2b_l[l])
        x_kw = _mlp2_relu(x_kw, c1w_k[l], c1b_k[l], c2w_k[l], c2b_k[l])

    out_law_ref[...] = x_law


# ------------------------------ model forward ------------------------------ #

def match_hgt_forward(prep, x_dict_raw, edge_masks, doc_id_A, doc_id_B):
    law_feat = pl.pallas_call(
        _fused_forward_kernel,
        out_shape=jax.ShapeDtypeStruct((NUM_NODES["law_cases"], HIDDEN), jnp.float32),
        in_specs=[_VMEM_SPEC] * (4 + len(prep)),
        out_specs=_VMEM_SPEC,
    )(x_dict_raw["law_cases"], x_dict_raw["keywords"],
      edge_masks[EDGE_TYPES[0]], edge_masks[EDGE_TYPES[1]], *prep)
    return law_feat[doc_id_A], law_feat[doc_id_B]


# ----------------------------- parameter setup ------------------------------ #

def _glorot(key, shape):
    fan_in, fan_out = shape[-2], shape[-1]
    lim = math.sqrt(6.0 / (fan_in + fan_out))
    return jax.random.uniform(key, shape, jnp.float32, -lim, lim)


def _init_linear(key, fan_in, fan_out):
    k1, k2 = jax.random.split(key)
    return {"w": _glorot(k1, (fan_in, fan_out)),
            "b": jax.random.uniform(k2, (fan_out,), jnp.float32, -0.1, 0.1)}


def _init_mlp(key, fan_in, hidden):
    k1, k2 = jax.random.split(key)
    l1 = _init_linear(k1, fan_in, hidden)
    l2 = _init_linear(k2, hidden, hidden)
    return {"w1": l1["w"], "b1": l1["b"], "w2": l2["w"], "b2": l2["b"]}


def _init_conv(key):
    p = {"k_lin": {}, "q_lin": {}, "v_lin": {}, "a_lin": {}, "skip": {},
         "a_rel": {}, "m_rel": {}, "p_rel": {}}
    keys = iter(jax.random.split(key, 4 * len(NODE_TYPES) + 2 * len(EDGE_TYPES)))
    for nt in NODE_TYPES:
        p["k_lin"][nt] = _init_linear(next(keys), HIDDEN, HIDDEN)
        p["q_lin"][nt] = _init_linear(next(keys), HIDDEN, HIDDEN)
        p["v_lin"][nt] = _init_linear(next(keys), HIDDEN, HIDDEN)
        p["a_lin"][nt] = _init_linear(next(keys), HIDDEN, HIDDEN)
        p["skip"][nt] = jnp.asarray(1.0, jnp.float32)           # torch.ones(1)
    for et in EDGE_TYPES:
        p["a_rel"][et] = _glorot(next(keys), (HEADS, HEAD_DIM, HEAD_DIM))
        p["m_rel"][et] = _glorot(next(keys), (HEADS, HEAD_DIM, HEAD_DIM))
        p["p_rel"][et] = jnp.ones((HEADS,), jnp.float32)
    return p


def init_params(key):
    k_lin, k_conv, k_clin = jax.random.split(key, 3)
    lin_keys = jax.random.split(k_lin, len(NODE_TYPES))
    params = {"lin_dict": {nt: _init_mlp(lk, IN_DIMS[nt], HIDDEN)
                           for nt, lk in zip(NODE_TYPES, lin_keys)}}
    conv_keys = jax.random.split(k_conv, NUM_LAYERS)
    params["convs"] = [_init_conv(ck) for ck in conv_keys]
    clin_keys = jax.random.split(k_clin, NUM_LAYERS * len(NODE_TYPES))
    params["convs_lin"] = []
    ki = iter(clin_keys)
    for _ in range(NUM_LAYERS):
        params["convs_lin"].append(
            {nt: _init_mlp(next(ki), HIDDEN, HIDDEN) for nt in NODE_TYPES})
    return params


def _block_diag_heads(blocks):
    # blocks: (H, D, D) -> block-diagonal (H*D, H*D)
    H, D, _ = blocks.shape
    out = jnp.zeros((H * D, H * D), jnp.float32)
    for h in range(H):
        out = out.at[h * D:(h + 1) * D, h * D:(h + 1) * D].set(blocks[h])
    return out


def prepare_fused_params(params):
    """One-time packing: fused kqv weights, block-diag scaled relation mats,
    pre-sigmoided skips, row-vector biases, layer-stacked arrays (kernel order)."""
    p = params

    def lin_mlp(d):
        return [d["w1"], d["b1"].reshape(1, -1), d["w2"], d["b2"].reshape(1, -1)]

    prep = []
    prep += lin_mlp(p["lin_dict"]["law_cases"])
    prep += lin_mlp(p["lin_dict"]["keywords"])

    kqvw = {nt: [] for nt in NODE_TYPES}
    kqvb = {nt: [] for nt in NODE_TYPES}
    A = {et: [] for et in EDGE_TYPES}
    M = {et: [] for et in EDGE_TYPES}
    aw = {nt: [] for nt in NODE_TYPES}
    ab = {nt: [] for nt in NODE_TYPES}
    sk = {nt: [] for nt in NODE_TYPES}
    for l in range(NUM_LAYERS):
        c = p["convs"][l]
        for nt in NODE_TYPES:
            kqvw[nt].append(jnp.concatenate(
                [c["k_lin"][nt]["w"], c["q_lin"][nt]["w"], c["v_lin"][nt]["w"]],
                axis=1))
            kqvb[nt].append(jnp.concatenate(
                [c["k_lin"][nt]["b"], c["q_lin"][nt]["b"], c["v_lin"][nt]["b"]]
            ).reshape(1, -1))
            aw[nt].append(c["a_lin"][nt]["w"])
            ab[nt].append(c["a_lin"][nt]["b"].reshape(1, -1))
            sk[nt].append(jax.nn.sigmoid(c["skip"][nt]).reshape(1, 1))
        for et in EDGE_TYPES:
            scale = (c["p_rel"][et] / math.sqrt(HEAD_DIM)).reshape(HEADS, 1, 1)
            A[et].append(_block_diag_heads(c["a_rel"][et] * scale))
            M[et].append(_block_diag_heads(c["m_rel"][et]))

    stack = lambda xs: jnp.stack(xs, axis=0)
    prep += [stack(kqvw["law_cases"]), stack(kqvb["law_cases"]),
             stack(kqvw["keywords"]), stack(kqvb["keywords"])]
    prep += [stack(A[EDGE_TYPES[0]]), stack(M[EDGE_TYPES[0]]),
             stack(A[EDGE_TYPES[1]]), stack(M[EDGE_TYPES[1]])]
    prep += [stack(aw["law_cases"]), stack(ab["law_cases"]),
             stack(aw["keywords"]), stack(ab["keywords"])]
    prep += [stack(sk["law_cases"]), stack(sk["keywords"])]

    cl = {nt: {k: [] for k in ("w1", "b1", "w2", "b2")} for nt in NODE_TYPES}
    for l in range(NUM_LAYERS):
        for nt in NODE_TYPES:
            d = p["convs_lin"][l][nt]
            cl[nt]["w1"].append(d["w1"])
            cl[nt]["b1"].append(d["b1"].reshape(1, -1))
            cl[nt]["w2"].append(d["w2"])
            cl[nt]["b2"].append(d["b2"].reshape(1, -1))
    for nt in NODE_TYPES:
        prep += [stack(cl[nt]["w1"]), stack(cl[nt]["b1"]),
                 stack(cl[nt]["w2"]), stack(cl[nt]["b2"])]

    return [jnp.asarray(a, jnp.float32) for a in prep]


def make_mask(n_dst, n_src, stride, deg=3):
    # dense adjacency: each dst node receives `deg` distinct src nodes.
    d_idx, s_idx = [], []
    for d in range(n_dst):
        for t in range(deg):
            d_idx.append(d)
            s_idx.append((d * stride + t) % n_src)
    mask = jnp.zeros((n_dst, n_src), jnp.float32)
    return mask.at[jnp.array(d_idx), jnp.array(s_idx)].set(1.0)


# ---------------------------------- main ----------------------------------- #

if __name__ == "__main__":
    key = jax.random.PRNGKey(0)
    k_feat, k_par = jax.random.split(key)
    feat_keys = jax.random.split(k_feat, len(NODE_TYPES))
    x_dict = {nt: jax.random.normal(fk, (NUM_NODES[nt], IN_DIMS[nt]), jnp.float32)
              for nt, fk in zip(NODE_TYPES, feat_keys)}

    edge_masks = {
        EDGE_TYPES[0]: make_mask(NUM_NODES["keywords"], NUM_NODES["law_cases"], stride=3),
        EDGE_TYPES[1]: make_mask(NUM_NODES["law_cases"], NUM_NODES["keywords"], stride=5),
    }

    params = init_params(k_par)
    prep = prepare_fused_params(params)   # one-time param packing, not per-forward

    doc_id_A, doc_id_B = 1, 3
    emb_a, emb_b = match_hgt_forward(prep, x_dict, edge_masks, doc_id_A, doc_id_B)
    jax.block_until_ready((emb_a, emb_b))

    assert emb_a.shape == (HIDDEN,) and emb_b.shape == (HIDDEN,)
    assert bool(jnp.all(jnp.isfinite(emb_a))) and bool(jnp.all(jnp.isfinite(emb_b)))
    print("KERNEL_OK")
</pallas_src>

<mosaic_0001>
module attributes {stable_mosaic.version = 11 : i64} {
  func.func @_fused_forward_kernel(%arg0: memref<8x16xf32, #tpu.memory_space<vmem>>, %arg1: memref<16x24xf32, #tpu.memory_space<vmem>>, %arg2: memref<16x8xf32, #tpu.memory_space<vmem>>, %arg3: memref<8x16xf32, #tpu.memory_space<vmem>>, %arg4: memref<16x32xf32, #tpu.memory_space<vmem>>, %arg5: memref<1x32xf32, #tpu.memory_space<vmem>>, %arg6: memref<32x32xf32, #tpu.memory_space<vmem>>, %arg7: memref<1x32xf32, #tpu.memory_space<vmem>>, %arg8: memref<24x32xf32, #tpu.memory_space<vmem>>, %arg9: memref<1x32xf32, #tpu.memory_space<vmem>>, %arg10: memref<32x32xf32, #tpu.memory_space<vmem>>, %arg11: memref<1x32xf32, #tpu.memory_space<vmem>>, %arg12: memref<2x32x96xf32, #tpu.memory_space<vmem>>, %arg13: memref<2x1x96xf32, #tpu.memory_space<vmem>>, %arg14: memref<2x32x96xf32, #tpu.memory_space<vmem>>, %arg15: memref<2x1x96xf32, #tpu.memory_space<vmem>>, %arg16: memref<2x32x32xf32, #tpu.memory_space<vmem>>, %arg17: memref<2x32x32xf32, #tpu.memory_space<vmem>>, %arg18: memref<2x32x32xf32, #tpu.memory_space<vmem>>, %arg19: memref<2x32x32xf32, #tpu.memory_space<vmem>>, %arg20: memref<2x32x32xf32, #tpu.memory_space<vmem>>, %arg21: memref<2x1x32xf32, #tpu.memory_space<vmem>>, %arg22: memref<2x32x32xf32, #tpu.memory_space<vmem>>, %arg23: memref<2x1x32xf32, #tpu.memory_space<vmem>>, %arg24: memref<2x1x1xf32, #tpu.memory_space<vmem>>, %arg25: memref<2x1x1xf32, #tpu.memory_space<vmem>>, %arg26: memref<2x32x32xf32, #tpu.memory_space<vmem>>, %arg27: memref<2x1x32xf32, #tpu.memory_space<vmem>>, %arg28: memref<2x32x32xf32, #tpu.memory_space<vmem>>, %arg29: memref<2x1x32xf32, #tpu.memory_space<vmem>>, %arg30: memref<2x32x32xf32, #tpu.memory_space<vmem>>, %arg31: memref<2x1x32xf32, #tpu.memory_space<vmem>>, %arg32: memref<2x32x32xf32, #tpu.memory_space<vmem>>, %arg33: memref<2x1x32xf32, #tpu.memory_space<vmem>>, %arg34: memref<8x32xf32, #tpu.memory_space<vmem>>) attributes {dimension_semantics = [], scalar_prefetch = 0 : i64, scratch_operands = 0 : i64, tpu.core_type = #tpu.core_type<tc>} {
    %c0 = arith.constant 0 : index
    %c0_0 = arith.constant 0 : index
    %0 = vector.load %arg0[%c0, %c0_0] : memref<8x16xf32, #tpu.memory_space<vmem>>, vector<8x16xf32>
    %c0_1 = arith.constant 0 : index
    %c0_2 = arith.constant 0 : index
    %1 = vector.load %arg4[%c0_1, %c0_2] : memref<16x32xf32, #tpu.memory_space<vmem>>, vector<16x32xf32>
    %c0_3 = arith.constant 0 : index
    %c0_4 = arith.constant 0 : index
    %2 = vector.load %arg5[%c0_3, %c0_4] : memref<1x32xf32, #tpu.memory_space<vmem>>, vector<1x32xf32>
    %c0_5 = arith.constant 0 : index
    %c0_6 = arith.constant 0 : index
    %3 = vector.load %arg6[%c0_5, %c0_6] : memref<32x32xf32, #tpu.memory_space<vmem>>, vector<32x32xf32>
    %c0_7 = arith.constant 0 : index
    %c0_8 = arith.constant 0 : index
    %4 = vector.load %arg7[%c0_7, %c0_8] : memref<1x32xf32, #tpu.memory_space<vmem>>, vector<1x32xf32>
    %cst = arith.constant dense<0.000000e+00> : vector<8x32xf32>
    %5 = tpu.matmul %0, %1, %cst {dimension_numbers = #tpu.dot_dimension_numbers<[1], [0], [0], [1], [0, 0, 1, 1], [], []>} : vector<8x16xf32>, vector<16x32xf32>, vector<8x32xf32> -> vector<8x32xf32>
    %6 = vector.broadcast %2 : vector<1x32xf32> to vector<8x32xf32>
    %7 = arith.addf %5, %6 : vector<8x32xf32>
    %cst_9 = arith.constant 0.000000e+00 : f32
    %8 = vector.broadcast %cst_9 : f32 to vector<8x32xf32>
    %9 = arith.maximumf %7, %8 : vector<8x32xf32>
    %cst_10 = arith.constant dense<0.000000e+00> : vector<8x32xf32>
    %10 = tpu.matmul %9, %3, %cst_10 {dimension_numbers = #tpu.dot_dimension_numbers<[1], [0], [0], [1], [0, 0, 1, 1], [], []>} : vector<8x32xf32>, vector<32x32xf32>, vector<8x32xf32> -> vector<8x32xf32>
    %11 = vector.broadcast %4 : vector<1x32xf32> to vector<8x32xf32>
    %12 = arith.addf %10, %11 : vector<8x32xf32>
    %cst_11 = arith.constant 0.000000e+00 : f32
    %13 = vector.broadcast %cst_11 : f32 to vector<8x32xf32>
    %14 = arith.maximumf %12, %13 : vector<8x32xf32>
    %c0_12 = arith.constant 0 : index
    %c0_13 = arith.constant 0 : index
    %15 = vector.load %arg1[%c0_12, %c0_13] : memref<16x24xf32, #tpu.memory_space<vmem>>, vector<16x24xf32>
    %c0_14 = arith.constant 0 : index
    %c0_15 = arith.constant 0 : index
    %16 = vector.load %arg8[%c0_14, %c0_15] : memref<24x32xf32, #tpu.memory_space<vmem>>, vector<24x32xf32>
    %c0_16 = arith.constant 0 : index
    %c0_17 = arith.constant 0 : index
    %17 = vector.load %arg9[%c0_16, %c0_17] : memref<1x32xf32, #tpu.memory_space<vmem>>, vector<1x32xf32>
    %c0_18 = arith.constant 0 : index
    %c0_19 = arith.constant 0 : index
    %18 = vector.load %arg10[%c0_18, %c0_19] : memref<32x32xf32, #tpu.memory_space<vmem>>, vector<32x32xf32>
    %c0_20 = arith.constant 0 : index
    %c0_21 = arith.constant 0 : index
    %19 = vector.load %arg11[%c0_20, %c0_21] : memref<1x32xf32, #tpu.memory_space<vmem>>, vector<1x32xf32>
    %cst_22 = arith.constant dense<0.000000e+00> : vector<16x32xf32>
    %20 = tpu.matmul %15, %16, %cst_22 {dimension_numbers = #tpu.dot_dimension_numbers<[1], [0], [0], [1], [0, 0, 1, 1], [], []>} : vector<16x24xf32>, vector<24x32xf32>, vector<16x32xf32> -> vector<16x32xf32>
    %21 = vector.broadcast %17 : vector<1x32xf32> to vector<16x32xf32>
    %22 = arith.addf %20, %21 : vector<16x32xf32>
    %cst_23 = arith.constant 0.000000e+00 : f32
    %23 = vector.broadcast %cst_23 : f32 to vector<16x32xf32>
    %24 = arith.maximumf %22, %23 : vector<16x32xf32>
    %cst_24 = arith.constant dense<0.000000e+00> : vector<16x32xf32>
    %25 = tpu.matmul %24, %18, %cst_24 {dimension_numbers = #tpu.dot_dimension_numbers<[1], [0], [0], [1], [0, 0, 1, 1], [], []>} : vector<16x32xf32>, vector<32x32xf32>, vector<16x32xf32> -> vector<16x32xf32>
    %26 = vector.broadcast %19 : vector<1x32xf32> to vector<16x32xf32>
    %27 = arith.addf %25, %26 : vector<16x32xf32>
    %cst_25 = arith.constant 0.000000e+00 : f32
    %28 = vector.broadcast %cst_25 : f32 to vector<16x32xf32>
    %29 = arith.maximumf %27, %28 : vector<16x32xf32>
    %c0_26 = arith.constant 0 : index
    %c0_27 = arith.constant 0 : index
    %30 = vector.load %arg2[%c0_26, %c0_27] : memref<16x8xf32, #tpu.memory_space<vmem>>, vector<16x8xf32>
    %c0_28 = arith.constant 0 : index
    %c0_29 = arith.constant 0 : index
    %31 = vector.load %arg3[%c0_28, %c0_29] : memref<8x16xf32, #tpu.memory_space<vmem>>, vector<8x16xf32>
    %c0_30 = arith.constant 0 : index
    %c0_31 = arith.constant 0 : index
    %c0_32 = arith.constant 0 : index
    %32 = vector.load %arg12[%c0_30, %c0_31, %c0_32] : memref<2x32x96xf32, #tpu.memory_space<vmem>>, vector<1x32x96xf32>
    %33 = vector.shape_cast %32 : vector<1x32x96xf32> to vector<32x96xf32>
    %cst_33 = arith.constant dense<0.000000e+00> : vector<8x96xf32>
    %34 = tpu.matmul %14, %33, %cst_33 {dimension_numbers = #tpu.dot_dimension_numbers<[1], [0], [0], [1], [0, 0, 1, 1], [], []>} : vector<8x32xf32>, vector<32x96xf32>, vector<8x96xf32> -> vector<8x96xf32>
    %c0_34 = arith.constant 0 : index
    %c0_35 = arith.constant 0 : index
    %c0_36 = arith.constant 0 : index
    %35 = vector.load %arg13[%c0_34, %c0_35, %c0_36] : memref<2x1x96xf32, #tpu.memory_space<vmem>>, vector<1x1x96xf32>
    %36 = vector.shape_cast %35 : vector<1x1x96xf32> to vector<1x96xf32>
    %37 = vector.broadcast %36 : vector<1x96xf32> to vector<8x96xf32>
    %38 = arith.addf %34, %37 : vector<8x96xf32>
    %c0_37 = arith.constant 0 : index
    %c0_38 = arith.constant 0 : index
    %c0_39 = arith.constant 0 : index
    %39 = vector.load %arg14[%c0_37, %c0_38, %c0_39] : memref<2x32x96xf32, #tpu.memory_space<vmem>>, vector<1x32x96xf32>
    %40 = vector.shape_cast %39 : vector<1x32x96xf32> to vector<32x96xf32>
    %cst_40 = arith.constant dense<0.000000e+00> : vector<16x96xf32>
    %41 = tpu.matmul %29, %40, %cst_40 {dimension_numbers = #tpu.dot_dimension_numbers<[1], [0], [0], [1], [0, 0, 1, 1], [], []>} : vector<16x32xf32>, vector<32x96xf32>, vector<16x96xf32> -> vector<16x96xf32>
    %c0_41 = arith.constant 0 : index
    %c0_42 = arith.constant 0 : index
    %c0_43 = arith.constant 0 : index
    %42 = vector.load %arg15[%c0_41, %c0_42, %c0_43] : memref<2x1x96xf32, #tpu.memory_space<vmem>>, vector<1x1x96xf32>
    %43 = vector.shape_cast %42 : vector<1x1x96xf32> to vector<1x96xf32>
    %44 = vector.broadcast %43 : vector<1x96xf32> to vector<16x96xf32>
    %45 = arith.addf %41, %44 : vector<16x96xf32>
    %46 = vector.extract_strided_slice %38 {offsets = [0, 0], sizes = [8, 32], strides = [1, 1]} : vector<8x96xf32> to vector<8x32xf32>
    %47 = vector.extract_strided_slice %38 {offsets = [0, 32], sizes = [8, 32], strides = [1, 1]} : vector<8x96xf32> to vector<8x32xf32>
    %48 = vector.extract_strided_slice %38 {offsets = [0, 64], sizes = [8, 32], strides = [1, 1]} : vector<8x96xf32> to vector<8x32xf32>
    %49 = vector.extract_strided_slice %45 {offsets = [0, 0], sizes = [16, 32], strides = [1, 1]} : vector<16x96xf32> to vector<16x32xf32>
    %50 = vector.extract_strided_slice %45 {offsets = [0, 32], sizes = [16, 32], strides = [1, 1]} : vector<16x96xf32> to vector<16x32xf32>
    %51 = vector.extract_strided_slice %45 {offsets = [0, 64], sizes = [16, 32], strides = [1, 1]} : vector<16x96xf32> to vector<16x32xf32>
    %c0_44 = arith.constant 0 : index
    %c0_45 = arith.constant 0 : index
    %c0_46 = arith.constant 0 : index
    %52 = vector.load %arg16[%c0_44, %c0_45, %c0_46] : memref<2x32x32xf32, #tpu.memory_space<vmem>>, vector<1x32x32xf32>
    %53 = vector.shape_cast %52 : vector<1x32x32xf32> to vector<32x32xf32>
    %c0_47 = arith.constant 0 : index
    %c0_48 = arith.constant 0 : index
    %c0_49 = arith.constant 0 : index
    %54 = vector.load %arg17[%c0_47, %c0_48, %c0_49] : memref<2x32x32xf32, #tpu.memory_space<vmem>>, vector<1x32x32xf32>
    %55 = vector.shape_cast %54 : vector<1x32x32xf32> to vector<32x32xf32>
    %cst_50 = arith.constant dense<0.000000e+00> : vector<8x32xf32>
    %56 = tpu.matmul %46, %53, %cst_50 {dimension_numbers = #tpu.dot_dimension_numbers<[1], [0], [0], [1], [0, 0, 1, 1], [], []>} : vector<8x32xf32>, vector<32x32xf32>, vector<8x32xf32> -> vector<8x32xf32>
    %cst_51 = arith.constant dense<0.000000e+00> : vector<8x32xf32>
    %57 = tpu.matmul %48, %55, %cst_51 {dimension_numbers = #tpu.dot_dimension_numbers<[1], [0], [0], [1], [0, 0, 1, 1], [], []>} : vector<8x32xf32>, vector<32x32xf32>, vector<8x32xf32> -> vector<8x32xf32>
    %cst_52 = arith.constant 0.000000e+00 : f32
    %58 = vector.broadcast %cst_52 : f32 to vector<16x8xf32>
    %59 = arith.cmpf ogt, %30, %58 : vector<16x8xf32>
    %60 = vector.extract_strided_slice %50 {offsets = [0, 0], sizes = [16, 8], strides = [1, 1]} : vector<16x32xf32> to vector<16x8xf32>
    %61 = vector.extract_strided_slice %56 {offsets = [0, 0], sizes = [8, 8], strides = [1, 1]} : vector<8x32xf32> to vector<8x8xf32>
    %cst_53 = arith.constant dense<0.000000e+00> : vector<16x8xf32>
    %62 = tpu.matmul %60, %61, %cst_53 {dimension_numbers = #tpu.dot_dimension_numbers<[1], [1], [0], [0], [0, 0, 1, 0], [], []>} : vector<16x8xf32>, vector<8x8xf32>, vector<16x8xf32> -> vector<16x8xf32>
    %cst_54 = arith.constant -1.000000e+30 : f32
    %63 = vector.broadcast %cst_54 : f32 to vector<16x8xf32>
    %64 = arith.select %59, %62, %63 : vector<16x8xi1>, vector<16x8xf32>
    %cst_55 = arith.constant dense<0xFF800000> : vector<16xf32>
    %65 = vector.multi_reduction <maximumf>, %64, %cst_55 [1] : vector<16x8xf32> to vector<16xf32>
    %66 = vector.shape_cast %65 : vector<16xf32> to vector<16x1xf32>
    %67 = vector.broadcast %66 : vector<16x1xf32> to vector<16x8xf32>
    %68 = arith.subf %64, %67 : vector<16x8xf32>
    %69 = math.exp %68 : vector<16x8xf32>
    %cst_56 = arith.constant 0.000000e+00 : f32
    %70 = vector.broadcast %cst_56 : f32 to vector<16x8xf32>
    %71 = arith.select %59, %69, %70 : vector<16x8xi1>, vector<16x8xf32>
    %cst_57 = arith.constant dense<0.000000e+00> : vector<16xf32>
    %72 = vector.multi_reduction <add>, %71, %cst_57 [1] : vector<16x8xf32> to vector<16xf32>
    %73 = vector.shape_cast %72 : vector<16xf32> to vector<16x1xf32>
    %cst_58 = arith.constant 0.000000e+00 : f32
    %74 = vector.broadcast %cst_58 : f32 to vector<16x1xf32>
    %75 = arith.cmpf ogt, %73, %74 : vector<16x1xf32>
    %cst_59 = arith.constant 1.000000e+00 : f32
    %76 = vector.broadcast %cst_59 : f32 to vector<16x1xf32>
    %77 = arith.select %75, %73, %76 : vector<16x1xi1>, vector<16x1xf32>
    %78 = tpu.reciprocal %77 {approx = true} : vector<16x1xf32> -> vector<16x1xf32>
    %79 = vector.broadcast %78 : vector<16x1xf32> to vector<16x8xf32>
    %80 = arith.mulf %71, %79 : vector<16x8xf32>
    %81 = vector.extract_strided_slice %57 {offsets = [0, 0], sizes = [8, 8], strides = [1, 1]} : vector<8x32xf32> to vector<8x8xf32>
    %cst_60 = arith.constant dense<0.000000e+00> : vector<16x8xf32>
    %82 = tpu.matmul %80, %81, %cst_60 {dimension_numbers = #tpu.dot_dimension_numbers<[1], [0], [0], [1], [0, 0, 1, 1], [], []>} : vector<16x8xf32>, vector<8x8xf32>, vector<16x8xf32> -> vector<16x8xf32>
    %83 = vector.extract_strided_slice %50 {offsets = [0, 8], sizes = [16, 8], strides = [1, 1]} : vector<16x32xf32> to vector<16x8xf32>
    %84 = vector.extract_strided_slice %56 {offsets = [0, 8], sizes = [8, 8], strides = [1, 1]} : vector<8x32xf32> to vector<8x8xf32>
    %cst_61 = arith.constant dense<0.000000e+00> : vector<16x8xf32>
    %85 = tpu.matmul %83, %84, %cst_61 {dimension_numbers = #tpu.dot_dimension_numbers<[1], [1], [0], [0], [0, 0, 1, 0], [], []>} : vector<16x8xf32>, vector<8x8xf32>, vector<16x8xf32> -> vector<16x8xf32>
    %cst_62 = arith.constant -1.000000e+30 : f32
    %86 = vector.broadcast %cst_62 : f32 to vector<16x8xf32>
    %87 = arith.select %59, %85, %86 : vector<16x8xi1>, vector<16x8xf32>
    %cst_63 = arith.constant dense<0xFF800000> : vector<16xf32>
    %88 = vector.multi_reduction <maximumf>, %87, %cst_63 [1] : vector<16x8xf32> to vector<16xf32>
    %89 = vector.shape_cast %88 : vector<16xf32> to vector<16x1xf32>
    %90 = vector.broadcast %89 : vector<16x1xf32> to vector<16x8xf32>
    %91 = arith.subf %87, %90 : vector<16x8xf32>
    %92 = math.exp %91 : vector<16x8xf32>
    %cst_64 = arith.constant 0.000000e+00 : f32
    %93 = vector.broadcast %cst_64 : f32 to vector<16x8xf32>
    %94 = arith.select %59, %92, %93 : vector<16x8xi1>, vector<16x8xf32>
    %cst_65 = arith.constant dense<0.000000e+00> : vector<16xf32>
    %95 = vector.multi_reduction <add>, %94, %cst_65 [1] : vector<16x8xf32> to vector<16xf32>
    %96 = vector.shape_cast %95 : vector<16xf32> to vector<16x1xf32>
    %cst_66 = arith.constant 0.000000e+00 : f32
    %97 = vector.broadcast %cst_66 : f32 to vector<16x1xf32>
    %98 = arith.cmpf ogt, %96, %97 : vector<16x1xf32>
    %cst_67 = arith.constant 1.000000e+00 : f32
    %99 = vector.broadcast %cst_67 : f32 to vector<16x1xf32>
    %100 = arith.select %98, %96, %99 : vector<16x1xi1>, vector<16x1xf32>
    %101 = tpu.reciprocal %100 {approx = true} : vector<16x1xf32> -> vector<16x1xf32>
    %102 = vector.broadcast %101 : vector<16x1xf32> to vector<16x8xf32>
    %103 = arith.mulf %94, %102 : vector<16x8xf32>
    %104 = vector.extract_strided_slice %57 {offsets = [0, 8], sizes = [8, 8], strides = [1, 1]} : vector<8x32xf32> to vector<8x8xf32>
    %cst_68 = arith.constant dense<0.000000e+00> : vector<16x8xf32>
    %105 = tpu.matmul %103, %104, %cst_68 {dimension_numbers = #tpu.dot_dimension_numbers<[1], [0], [0], [1], [0, 0, 1, 1], [], []>} : vector<16x8xf32>, vector<8x8xf32>, vector<16x8xf32> -> vector<16x8xf32>
    %106 = vector.extract_strided_slice %50 {offsets = [0, 16], sizes = [16, 8], strides = [1, 1]} : vector<16x32xf32> to vector<16x8xf32>
    %107 = vector.extract_strided_slice %56 {offsets = [0, 16], sizes = [8, 8], strides = [1, 1]} : vector<8x32xf32> to vector<8x8xf32>
    %cst_69 = arith.constant dense<0.000000e+00> : vector<16x8xf32>
    %108 = tpu.matmul %106, %107, %cst_69 {dimension_numbers = #tpu.dot_dimension_numbers<[1], [1], [0], [0], [0, 0, 1, 0], [], []>} : vector<16x8xf32>, vector<8x8xf32>, vector<16x8xf32> -> vector<16x8xf32>
    %cst_70 = arith.constant -1.000000e+30 : f32
    %109 = vector.broadcast %cst_70 : f32 to vector<16x8xf32>
    %110 = arith.select %59, %108, %109 : vector<16x8xi1>, vector<16x8xf32>
    %cst_71 = arith.constant dense<0xFF800000> : vector<16xf32>
    %111 = vector.multi_reduction <maximumf>, %110, %cst_71 [1] : vector<16x8xf32> to vector<16xf32>
    %112 = vector.shape_cast %111 : vector<16xf32> to vector<16x1xf32>
    %113 = vector.broadcast %112 : vector<16x1xf32> to vector<16x8xf32>
    %114 = arith.subf %110, %113 : vector<16x8xf32>
    %115 = math.exp %114 : vector<16x8xf32>
    %cst_72 = arith.constant 0.000000e+00 : f32
    %116 = vector.broadcast %cst_72 : f32 to vector<16x8xf32>
    %117 = arith.select %59, %115, %116 : vector<16x8xi1>, vector<16x8xf32>
    %cst_73 = arith.constant dense<0.000000e+00> : vector<16xf32>
    %118 = vector.multi_reduction <add>, %117, %cst_73 [1] : vector<16x8xf32> to vector<16xf32>
    %119 = vector.shape_cast %118 : vector<16xf32> to vector<16x1xf32>
    %cst_74 = arith.constant 0.000000e+00 : f32
    %120 = vector.broadcast %cst_74 : f32 to vector<16x1xf32>
    %121 = arith.cmpf ogt, %119, %120 : vector<16x1xf32>
    %cst_75 = arith.constant 1.000000e+00 : f32
    %122 = vector.broadcast %cst_75 : f32 to vector<16x1xf32>
    %123 = arith.select %121, %119, %122 : vector<16x1xi1>, vector<16x1xf32>
    %124 = tpu.reciprocal %123 {approx = true} : vector<16x1xf32> -> vector<16x1xf32>
    %125 = vector.broadcast %124 : vector<16x1xf32> to vector<16x8xf32>
    %126 = arith.mulf %117, %125 : vector<16x8xf32>
    %127 = vector.extract_strided_slice %57 {offsets = [0, 16], sizes = [8, 8], strides = [1, 1]} : vector<8x32xf32> to vector<8x8xf32>
    %cst_76 = arith.constant dense<0.000000e+00> : vector<16x8xf32>
    %128 = tpu.matmul %126, %127, %cst_76 {dimension_numbers = #tpu.dot_dimension_numbers<[1], [0], [0], [1], [0, 0, 1, 1], [], []>} : vector<16x8xf32>, vector<8x8xf32>, vector<16x8xf32> -> vector<16x8xf32>
    %129 = vector.extract_strided_slice %50 {offsets = [0, 24], sizes = [16, 8], strides = [1, 1]} : vector<16x32xf32> to vector<16x8xf32>
    %130 = vector.extract_strided_slice %56 {offsets = [0, 24], sizes = [8, 8], strides = [1, 1]} : vector<8x32xf32> to vector<8x8xf32>
    %cst_77 = arith.constant dense<0.000000e+00> : vector<16x8xf32>
    %131 = tpu.matmul %129, %130, %cst_77 {dimension_numbers = #tpu.dot_dimension_numbers<[1], [1], [0], [0], [0, 0, 1, 0], [], []>} : vector<16x8xf32>, vector<8x8xf32>, vector<16x8xf32> -> vector<16x8xf32>
    %cst_78 = arith.constant -1.000000e+30 : f32
    %132 = vector.broadcast %cst_78 : f32 to vector<16x8xf32>
    %133 = arith.select %59, %131, %132 : vector<16x8xi1>, vector<16x8xf32>
    %cst_79 = arith.constant dense<0xFF800000> : vector<16xf32>
    %134 = vector.multi_reduction <maximumf>, %133, %cst_79 [1] : vector<16x8xf32> to vector<16xf32>
    %135 = vector.shape_cast %134 : vector<16xf32> to vector<16x1xf32>
    %136 = vector.broadcast %135 : vector<16x1xf32> to vector<16x8xf32>
    %137 = arith.subf %133, %136 : vector<16x8xf32>
    %138 = math.exp %137 : vector<16x8xf32>
    %cst_80 = arith.constant 0.000000e+00 : f32
    %139 = vector.broadcast %cst_80 : f32 to vector<16x8xf32>
    %140 = arith.select %59, %138, %139 : vector<16x8xi1>, vector<16x8xf32>
    %cst_81 = arith.constant dense<0.000000e+00> : vector<16xf32>
    %141 = vector.multi_reduction <add>, %140, %cst_81 [1] : vector<16x8xf32> to vector<16xf32>
    %142 = vector.shape_cast %141 : vector<16xf32> to vector<16x1xf32>
    %cst_82 = arith.constant 0.000000e+00 : f32
    %143 = vector.broadcast %cst_82 : f32 to vector<16x1xf32>
    %144 = arith.cmpf ogt, %142, %143 : vector<16x1xf32>
    %cst_83 = arith.constant 1.000000e+00 : f32
    %145 = vector.broadcast %cst_83 : f32 to vector<16x1xf32>
    %146 = arith.select %144, %142, %145 : vector<16x1xi1>, vector<16x1xf32>
    %147 = tpu.reciprocal %146 {approx = true} : vector<16x1xf32> -> vector<16x1xf32>
    %148 = vector.broadcast %147 : vector<16x1xf32> to vector<16x8xf32>
    %149 = arith.mulf %140, %148 : vector<16x8xf32>
    %150 = vector.extract_strided_slice %57 {offsets = [0, 24], sizes = [8, 8], strides = [1, 1]} : vector<8x32xf32> to vector<8x8xf32>
    %cst_84 = arith.constant dense<0.000000e+00> : vector<16x8xf32>
    %151 = tpu.matmul %149, %150, %cst_84 {dimension_numbers = #tpu.dot_dimension_numbers<[1], [0], [0], [1], [0, 0, 1, 1], [], []>} : vector<16x8xf32>, vector<8x8xf32>, vector<16x8xf32> -> vector<16x8xf32>
    %152 = tpu.concatenate %82, %105, %128, %151 in 1 : vector<16x8xf32>, vector<16x8xf32>, vector<16x8xf32>, vector<16x8xf32> -> vector<16x32xf32>
    %c0_85 = arith.constant 0 : index
    %c0_86 = arith.constant 0 : index
    %c0_87 = arith.constant 0 : index
    %153 = vector.load %arg18[%c0_85, %c0_86, %c0_87] : memref<2x32x32xf32, #tpu.memory_space<vmem>>, vector<1x32x32xf32>
    %154 = vector.shape_cast %153 : vector<1x32x32xf32> to vector<32x32xf32>
    %c0_88 = arith.constant 0 : index
    %c0_89 = arith.constant 0 : index
    %c0_90 = arith.constant 0 : index
    %155 = vector.load %arg19[%c0_88, %c0_89, %c0_90] : memref<2x32x32xf32, #tpu.memory_space<vmem>>, vector<1x32x32xf32>
    %156 = vector.shape_cast %155 : vector<1x32x32xf32> to vector<32x32xf32>
    %cst_91 = arith.constant dense<0.000000e+00> : vector<16x32xf32>
    %157 = tpu.matmul %49, %154, %cst_91 {dimension_numbers = #tpu.dot_dimension_numbers<[1], [0], [0], [1], [0, 0, 1, 1], [], []>} : vector<16x32xf32>, vector<32x32xf32>, vector<16x32xf32> -> vector<16x32xf32>
    %cst_92 = arith.constant dense<0.000000e+00> : vector<16x32xf32>
    %158 = tpu.matmul %51, %156, %cst_92 {dimension_numbers = #tpu.dot_dimension_numbers<[1], [0], [0], [1], [0, 0, 1, 1], [], []>} : vector<16x32xf32>, vector<32x32xf32>, vector<16x32xf32> -> vector<16x32xf32>
    %cst_93 = arith.constant 0.000000e+00 : f32
    %159 = vector.broadcast %cst_93 : f32 to vector<8x16xf32>
    %160 = arith.cmpf ogt, %31, %159 : vector<8x16xf32>
    %161 = vector.extract_strided_slice %47 {offsets = [0, 0], sizes = [8, 8], strides = [1, 1]} : vector<8x32xf32> to vector<8x8xf32>
    %162 = vector.extract_strided_slice %157 {offsets = [0, 0], sizes = [16, 8], strides = [1, 1]} : vector<16x32xf32> to vector<16x8xf32>
    %cst_94 = arith.constant dense<0.000000e+00> : vector<8x16xf32>
    %163 = tpu.matmul %161, %162, %cst_94 {dimension_numbers = #tpu.dot_dimension_numbers<[1], [1], [0], [0], [0, 0, 1, 0], [], []>} : vector<8x8xf32>, vector<16x8xf32>, vector<8x16xf32> -> vector<8x16xf32>
    %cst_95 = arith.constant -1.000000e+30 : f32
    %164 = vector.broadcast %cst_95 : f32 to vector<8x16xf32>
    %165 = arith.select %160, %163, %164 : vector<8x16xi1>, vector<8x16xf32>
    %cst_96 = arith.constant dense<0xFF800000> : vector<8xf32>
    %166 = vector.multi_reduction <maximumf>, %165, %cst_96 [1] : vector<8x16xf32> to vector<8xf32>
    %167 = vector.shape_cast %166 : vector<8xf32> to vector<8x1xf32>
    %168 = vector.broadcast %167 : vector<8x1xf32> to vector<8x16xf32>
    %169 = arith.subf %165, %168 : vector<8x16xf32>
    %170 = math.exp %169 : vector<8x16xf32>
    %cst_97 = arith.constant 0.000000e+00 : f32
    %171 = vector.broadcast %cst_97 : f32 to vector<8x16xf32>
    %172 = arith.select %160, %170, %171 : vector<8x16xi1>, vector<8x16xf32>
    %cst_98 = arith.constant dense<0.000000e+00> : vector<8xf32>
    %173 = vector.multi_reduction <add>, %172, %cst_98 [1] : vector<8x16xf32> to vector<8xf32>
    %174 = vector.shape_cast %173 : vector<8xf32> to vector<8x1xf32>
    %cst_99 = arith.constant 0.000000e+00 : f32
    %175 = vector.broadcast %cst_99 : f32 to vector<8x1xf32>
    %176 = arith.cmpf ogt, %174, %175 : vector<8x1xf32>
    %cst_100 = arith.constant 1.000000e+00 : f32
    %177 = vector.broadcast %cst_100 : f32 to vector<8x1xf32>
    %178 = arith.select %176, %174, %177 : vector<8x1xi1>, vector<8x1xf32>
    %179 = tpu.reciprocal %178 {approx = true} : vector<8x1xf32> -> vector<8x1xf32>
    %180 = vector.broadcast %179 : vector<8x1xf32> to vector<8x16xf32>
    %181 = arith.mulf %172, %180 : vector<8x16xf32>
    %182 = vector.extract_strided_slice %158 {offsets = [0, 0], sizes = [16, 8], strides = [1, 1]} : vector<16x32xf32> to vector<16x8xf32>
    %cst_101 = arith.constant dense<0.000000e+00> : vector<8x8xf32>
    %183 = tpu.matmul %181, %182, %cst_101 {dimension_numbers = #tpu.dot_dimension_numbers<[1], [0], [0], [1], [0, 0, 1, 1], [], []>} : vector<8x16xf32>, vector<16x8xf32>, vector<8x8xf32> -> vector<8x8xf32>
    %184 = vector.extract_strided_slice %47 {offsets = [0, 8], sizes = [8, 8], strides = [1, 1]} : vector<8x32xf32> to vector<8x8xf32>
    %185 = vector.extract_strided_slice %157 {offsets = [0, 8], sizes = [16, 8], strides = [1, 1]} : vector<16x32xf32> to vector<16x8xf32>
    %cst_102 = arith.constant dense<0.000000e+00> : vector<8x16xf32>
    %186 = tpu.matmul %184, %185, %cst_102 {dimension_numbers = #tpu.dot_dimension_numbers<[1], [1], [0], [0], [0, 0, 1, 0], [], []>} : vector<8x8xf32>, vector<16x8xf32>, vector<8x16xf32> -> vector<8x16xf32>
    %cst_103 = arith.constant -1.000000e+30 : f32
    %187 = vector.broadcast %cst_103 : f32 to vector<8x16xf32>
    %188 = arith.select %160, %186, %187 : vector<8x16xi1>, vector<8x16xf32>
    %cst_104 = arith.constant dense<0xFF800000> : vector<8xf32>
    %189 = vector.multi_reduction <maximumf>, %188, %cst_104 [1] : vector<8x16xf32> to vector<8xf32>
    %190 = vector.shape_cast %189 : vector<8xf32> to vector<8x1xf32>
    %191 = vector.broadcast %190 : vector<8x1xf32> to vector<8x16xf32>
    %192 = arith.subf %188, %191 : vector<8x16xf32>
    %193 = math.exp %192 : vector<8x16xf32>
    %cst_105 = arith.constant 0.000000e+00 : f32
    %194 = vector.broadcast %cst_105 : f32 to vector<8x16xf32>
    %195 = arith.select %160, %193, %194 : vector<8x16xi1>, vector<8x16xf32>
    %cst_106 = arith.constant dense<0.000000e+00> : vector<8xf32>
    %196 = vector.multi_reduction <add>, %195, %cst_106 [1] : vector<8x16xf32> to vector<8xf32>
    %197 = vector.shape_cast %196 : vector<8xf32> to vector<8x1xf32>
    %cst_107 = arith.constant 0.000000e+00 : f32
    %198 = vector.broadcast %cst_107 : f32 to vector<8x1xf32>
    %199 = arith.cmpf ogt, %197, %198 : vector<8x1xf32>
    %cst_108 = arith.constant 1.000000e+00 : f32
    %200 = vector.broadcast %cst_108 : f32 to vector<8x1xf32>
    %201 = arith.select %199, %197, %200 : vector<8x1xi1>, vector<8x1xf32>
    %202 = tpu.reciprocal %201 {approx = true} : vector<8x1xf32> -> vector<8x1xf32>
    %203 = vector.broadcast %202 : vector<8x1xf32> to vector<8x16xf32>
    %204 = arith.mulf %195, %203 : vector<8x16xf32>
    %205 = vector.extract_strided_slice %158 {offsets = [0, 8], sizes = [16, 8], strides = [1, 1]} : vector<16x32xf32> to vector<16x8xf32>
    %cst_109 = arith.constant dense<0.000000e+00> : vector<8x8xf32>
    %206 = tpu.matmul %204, %205, %cst_109 {dimension_numbers = #tpu.dot_dimension_numbers<[1], [0], [0], [1], [0, 0, 1, 1], [], []>} : vector<8x16xf32>, vector<16x8xf32>, vector<8x8xf32> -> vector<8x8xf32>
    %207 = vector.extract_strided_slice %47 {offsets = [0, 16], sizes = [8, 8], strides = [1, 1]} : vector<8x32xf32> to vector<8x8xf32>
    %208 = vector.extract_strided_slice %157 {offsets = [0, 16], sizes = [16, 8], strides = [1, 1]} : vector<16x32xf32> to vector<16x8xf32>
    %cst_110 = arith.constant dense<0.000000e+00> : vector<8x16xf32>
    %209 = tpu.matmul %207, %208, %cst_110 {dimension_numbers = #tpu.dot_dimension_numbers<[1], [1], [0], [0], [0, 0, 1, 0], [], []>} : vector<8x8xf32>, vector<16x8xf32>, vector<8x16xf32> -> vector<8x16xf32>
    %cst_111 = arith.constant -1.000000e+30 : f32
    %210 = vector.broadcast %cst_111 : f32 to vector<8x16xf32>
    %211 = arith.select %160, %209, %210 : vector<8x16xi1>, vector<8x16xf32>
    %cst_112 = arith.constant dense<0xFF800000> : vector<8xf32>
    %212 = vector.multi_reduction <maximumf>, %211, %cst_112 [1] : vector<8x16xf32> to vector<8xf32>
    %213 = vector.shape_cast %212 : vector<8xf32> to vector<8x1xf32>
    %214 = vector.broadcast %213 : vector<8x1xf32> to vector<8x16xf32>
    %215 = arith.subf %211, %214 : vector<8x16xf32>
    %216 = math.exp %215 : vector<8x16xf32>
    %cst_113 = arith.constant 0.000000e+00 : f32
    %217 = vector.broadcast %cst_113 : f32 to vector<8x16xf32>
    %218 = arith.select %160, %216, %217 : vector<8x16xi1>, vector<8x16xf32>
    %cst_114 = arith.constant dense<0.000000e+00> : vector<8xf32>
    %219 = vector.multi_reduction <add>, %218, %cst_114 [1] : vector<8x16xf32> to vector<8xf32>
    %220 = vector.shape_cast %219 : vector<8xf32> to vector<8x1xf32>
    %cst_115 = arith.constant 0.000000e+00 : f32
    %221 = vector.broadcast %cst_115 : f32 to vector<8x1xf32>
    %222 = arith.cmpf ogt, %220, %221 : vector<8x1xf32>
    %cst_116 = arith.constant 1.000000e+00 : f32
    %223 = vector.broadcast %cst_116 : f32 to vector<8x1xf32>
    %224 = arith.select %222, %220, %223 : vector<8x1xi1>, vector<8x1xf32>
    %225 = tpu.reciprocal %224 {approx = true} : vector<8x1xf32> -> vector<8x1xf32>
    %226 = vector.broadcast %225 : vector<8x1xf32> to vector<8x16xf32>
    %227 = arith.mulf %218, %226 : vector<8x16xf32>
    %228 = vector.extract_strided_slice %158 {offsets = [0, 16], sizes = [16, 8], strides = [1, 1]} : vector<16x32xf32> to vector<16x8xf32>
    %cst_117 = arith.constant dense<0.000000e+00> : vector<8x8xf32>
    %229 = tpu.matmul %227, %228, %cst_117 {dimension_numbers = #tpu.dot_dimension_numbers<[1], [0], [0], [1], [0, 0, 1, 1], [], []>} : vector<8x16xf32>, vector<16x8xf32>, vector<8x8xf32> -> vector<8x8xf32>
    %230 = vector.extract_strided_slice %47 {offsets = [0, 24], sizes = [8, 8], strides = [1, 1]} : vector<8x32xf32> to vector<8x8xf32>
    %231 = vector.extract_strided_slice %157 {offsets = [0, 24], sizes = [16, 8], strides = [1, 1]} : vector<16x32xf32> to vector<16x8xf32>
    %cst_118 = arith.constant dense<0.000000e+00> : vector<8x16xf32>
    %232 = tpu.matmul %230, %231, %cst_118 {dimension_numbers = #tpu.dot_dimension_numbers<[1], [1], [0], [0], [0, 0, 1, 0], [], []>} : vector<8x8xf32>, vector<16x8xf32>, vector<8x16xf32> -> vector<8x16xf32>
    %cst_119 = arith.constant -1.000000e+30 : f32
    %233 = vector.broadcast %cst_119 : f32 to vector<8x16xf32>
    %234 = arith.select %160, %232, %233 : vector<8x16xi1>, vector<8x16xf32>
    %cst_120 = arith.constant dense<0xFF800000> : vector<8xf32>
    %235 = vector.multi_reduction <maximumf>, %234, %cst_120 [1] : vector<8x16xf32> to vector<8xf32>
    %236 = vector.shape_cast %235 : vector<8xf32> to vector<8x1xf32>
    %237 = vector.broadcast %236 : vector<8x1xf32> to vector<8x16xf32>
    %238 = arith.subf %234, %237 : vector<8x16xf32>
    %239 = math.exp %238 : vector<8x16xf32>
    %cst_121 = arith.constant 0.000000e+00 : f32
    %240 = vector.broadcast %cst_121 : f32 to vector<8x16xf32>
    %241 = arith.select %160, %239, %240 : vector<8x16xi1>, vector<8x16xf32>
    %cst_122 = arith.constant dense<0.000000e+00> : vector<8xf32>
    %242 = vector.multi_reduction <add>, %241, %cst_122 [1] : vector<8x16xf32> to vector<8xf32>
    %243 = vector.shape_cast %242 : vector<8xf32> to vector<8x1xf32>
    %cst_123 = arith.constant 0.000000e+00 : f32
    %244 = vector.broadcast %cst_123 : f32 to vector<8x1xf32>
    %245 = arith.cmpf ogt, %243, %244 : vector<8x1xf32>
    %cst_124 = arith.constant 1.000000e+00 : f32
    %246 = vector.broadcast %cst_124 : f32 to vector<8x1xf32>
    %247 = arith.select %245, %243, %246 : vector<8x1xi1>, vector<8x1xf32>
    %248 = tpu.reciprocal %247 {approx = true} : vector<8x1xf32> -> vector<8x1xf32>
    %249 = vector.broadcast %248 : vector<8x1xf32> to vector<8x16xf32>
    %250 = arith.mulf %241, %249 : vector<8x16xf32>
    %251 = vector.extract_strided_slice %158 {offsets = [0, 24], sizes = [16, 8], strides = [1, 1]} : vector<16x32xf32> to vector<16x8xf32>
    %cst_125 = arith.constant dense<0.000000e+00> : vector<8x8xf32>
    %252 = tpu.matmul %250, %251, %cst_125 {dimension_numbers = #tpu.dot_dimension_numbers<[1], [0], [0], [1], [0, 0, 1, 1], [], []>} : vector<8x16xf32>, vector<16x8xf32>, vector<8x8xf32> -> vector<8x8xf32>
    %253 = tpu.concatenate %183, %206, %229, %252 in 1 : vector<8x8xf32>, vector<8x8xf32>, vector<8x8xf32>, vector<8x8xf32> -> vector<8x32xf32>
    %c0_126 = arith.constant 0 : index
    %c0_127 = arith.constant 0 : index
    %c0_128 = arith.constant 0 : index
    %254 = vector.load %arg20[%c0_126, %c0_127, %c0_128] : memref<2x32x32xf32, #tpu.memory_space<vmem>>, vector<1x32x32xf32>
    %255 = vector.shape_cast %254 : vector<1x32x32xf32> to vector<32x32xf32>
    %c0_129 = arith.constant 0 : index
    %c0_130 = arith.constant 0 : index
    %c0_131 = arith.constant 0 : index
    %256 = vector.load %arg21[%c0_129, %c0_130, %c0_131] : memref<2x1x32xf32, #tpu.memory_space<vmem>>, vector<1x1x32xf32>
    %257 = vector.shape_cast %256 : vector<1x1x32xf32> to vector<1x32xf32>
    %c0_132 = arith.constant 0 : index
    %c0_133 = arith.constant 0 : index
    %c0_134 = arith.constant 0 : index
    %258 = vector.load %arg24[%c0_132, %c0_133, %c0_134] : memref<2x1x1xf32, #tpu.memory_space<vmem>>, vector<1x1x1xf32>
    %259 = vector.shape_cast %258 : vector<1x1x1xf32> to vector<1x1xf32>
    %cst_135 = arith.constant 5.000000e-01 : f32
    %260 = vector.broadcast %cst_135 : f32 to vector<8x32xf32>
    %261 = arith.mulf %260, %253 : vector<8x32xf32>
    %cst_136 = arith.constant 0.707106769 : f32
    %262 = vector.broadcast %cst_136 : f32 to vector<8x32xf32>
    %263 = arith.mulf %253, %262 : vector<8x32xf32>
    %264 = math.absf %263 : vector<8x32xf32>
    %cst_137 = arith.constant 0.327591091 : f32
    %265 = vector.broadcast %cst_137 : f32 to vector<8x32xf32>
    %266 = arith.mulf %265, %264 : vector<8x32xf32>
    %cst_138 = arith.constant 1.000000e+00 : f32
    %267 = vector.broadcast %cst_138 : f32 to vector<8x32xf32>
    %268 = arith.addf %267, %266 : vector<8x32xf32>
    %cst_139 = arith.constant 1.000000e+00 : f32
    %269 = vector.broadcast %cst_139 : f32 to vector<8x32xf32>
    %270 = arith.divf %269, %268 : vector<8x32xf32>
    %cst_140 = arith.constant 1.06140542 : f32
    %271 = vector.broadcast %cst_140 : f32 to vector<8x32xf32>
    %272 = arith.mulf %271, %270 : vector<8x32xf32>
    %cst_141 = arith.constant -1.45315206 : f32
    %273 = vector.broadcast %cst_141 : f32 to vector<8x32xf32>
    %274 = arith.addf %272, %273 : vector<8x32xf32>
    %275 = arith.mulf %274, %270 : vector<8x32xf32>
    %cst_142 = arith.constant 1.42141378 : f32
    %276 = vector.broadcast %cst_142 : f32 to vector<8x32xf32>
    %277 = arith.addf %275, %276 : vector<8x32xf32>
    %278 = arith.mulf %277, %270 : vector<8x32xf32>
    %cst_143 = arith.constant -0.284496725 : f32
    %279 = vector.broadcast %cst_143 : f32 to vector<8x32xf32>
    %280 = arith.addf %278, %279 : vector<8x32xf32>
    %281 = arith.mulf %280, %270 : vector<8x32xf32>
    %cst_144 = arith.constant 0.254829586 : f32
    %282 = vector.broadcast %cst_144 : f32 to vector<8x32xf32>
    %283 = arith.addf %281, %282 : vector<8x32xf32>
    %284 = arith.mulf %283, %270 : vector<8x32xf32>
    %285 = arith.mulf %264, %264 : vector<8x32xf32>
    %cst_145 = arith.constant 0.000000e+00 : f32
    %286 = vector.broadcast %cst_145 : f32 to vector<8x32xf32>
    %287 = arith.subf %286, %285 : vector<8x32xf32>
    %288 = math.exp %287 : vector<8x32xf32>
    %289 = arith.mulf %284, %288 : vector<8x32xf32>
    %cst_146 = arith.constant 1.000000e+00 : f32
    %290 = vector.broadcast %cst_146 : f32 to vector<8x32xf32>
    %291 = arith.subf %290, %289 : vector<8x32xf32>
    %cst_147 = arith.constant 0.000000e+00 : f32
    %292 = vector.broadcast %cst_147 : f32 to vector<8x32xf32>
    %293 = arith.cmpf oge, %263, %292 : vector<8x32xf32>
    %cst_148 = arith.constant 0.000000e+00 : f32
    %294 = vector.broadcast %cst_148 : f32 to vector<8x32xf32>
    %295 = arith.subf %294, %291 : vector<8x32xf32>
    %296 = arith.select %293, %291, %295 : vector<8x32xi1>, vector<8x32xf32>
    %cst_149 = arith.constant 1.000000e+00 : f32
    %297 = vector.broadcast %cst_149 : f32 to vector<8x32xf32>
    %298 = arith.addf %297, %296 : vector<8x32xf32>
    %299 = arith.mulf %261, %298 : vector<8x32xf32>
    %cst_150 = arith.constant dense<0.000000e+00> : vector<8x32xf32>
    %300 = tpu.matmul %299, %255, %cst_150 {dimension_numbers = #tpu.dot_dimension_numbers<[1], [0], [0], [1], [0, 0, 1, 1], [], []>} : vector<8x32xf32>, vector<32x32xf32>, vector<8x32xf32> -> vector<8x32xf32>
    %301 = vector.broadcast %257 : vector<1x32xf32> to vector<8x32xf32>
    %302 = arith.addf %300, %301 : vector<8x32xf32>
    %303 = vector.broadcast %259 : vector<1x1xf32> to vector<8x32xf32>
    %304 = arith.mulf %303, %302 : vector<8x32xf32>
    %cst_151 = arith.constant 1.000000e+00 : f32
    %305 = vector.broadcast %cst_151 : f32 to vector<1x1xf32>
    %306 = arith.subf %305, %259 : vector<1x1xf32>
    %307 = vector.broadcast %306 : vector<1x1xf32> to vector<8x32xf32>
    %308 = arith.mulf %307, %14 : vector<8x32xf32>
    %309 = arith.addf %304, %308 : vector<8x32xf32>
    %c0_152 = arith.constant 0 : index
    %c0_153 = arith.constant 0 : index
    %c0_154 = arith.constant 0 : index
    %310 = vector.load %arg22[%c0_152, %c0_153, %c0_154] : memref<2x32x32xf32, #tpu.memory_space<vmem>>, vector<1x32x32xf32>
    %311 = vector.shape_cast %310 : vector<1x32x32xf32> to vector<32x32xf32>
    %c0_155 = arith.constant 0 : index
    %c0_156 = arith.constant 0 : index
    %c0_157 = arith.constant 0 : index
    %312 = vector.load %arg23[%c0_155, %c0_156, %c0_157] : memref<2x1x32xf32, #tpu.memory_space<vmem>>, vector<1x1x32xf32>
    %313 = vector.shape_cast %312 : vector<1x1x32xf32> to vector<1x32xf32>
    %c0_158 = arith.constant 0 : index
    %c0_159 = arith.constant 0 : index
    %c0_160 = arith.constant 0 : index
    %314 = vector.load %arg25[%c0_158, %c0_159, %c0_160] : memref<2x1x1xf32, #tpu.memory_space<vmem>>, vector<1x1x1xf32>
    %315 = vector.shape_cast %314 : vector<1x1x1xf32> to vector<1x1xf32>
    %cst_161 = arith.constant 5.000000e-01 : f32
    %316 = vector.broadcast %cst_161 : f32 to vector<16x32xf32>
    %317 = arith.mulf %316, %152 : vector<16x32xf32>
    %cst_162 = arith.constant 0.707106769 : f32
    %318 = vector.broadcast %cst_162 : f32 to vector<16x32xf32>
    %319 = arith.mulf %152, %318 : vector<16x32xf32>
    %320 = math.absf %319 : vector<16x32xf32>
    %cst_163 = arith.constant 0.327591091 : f32
    %321 = vector.broadcast %cst_163 : f32 to vector<16x32xf32>
    %322 = arith.mulf %321, %320 : vector<16x32xf32>
    %cst_164 = arith.constant 1.000000e+00 : f32
    %323 = vector.broadcast %cst_164 : f32 to vector<16x32xf32>
    %324 = arith.addf %323, %322 : vector<16x32xf32>
    %cst_165 = arith.constant 1.000000e+00 : f32
    %325 = vector.broadcast %cst_165 : f32 to vector<16x32xf32>
    %326 = arith.divf %325, %324 : vector<16x32xf32>
    %cst_166 = arith.constant 1.06140542 : f32
    %327 = vector.broadcast %cst_166 : f32 to vector<16x32xf32>
    %328 = arith.mulf %327, %326 : vector<16x32xf32>
    %cst_167 = arith.constant -1.45315206 : f32
    %329 = vector.broadcast %cst_167 : f32 to vector<16x32xf32>
    %330 = arith.addf %328, %329 : vector<16x32xf32>
    %331 = arith.mulf %330, %326 : vector<16x32xf32>
    %cst_168 = arith.constant 1.42141378 : f32
    %332 = vector.broadcast %cst_168 : f32 to vector<16x32xf32>
    %333 = arith.addf %331, %332 : vector<16x32xf32>
    %334 = arith.mulf %333, %326 : vector<16x32xf32>
    %cst_169 = arith.constant -0.284496725 : f32
    %335 = vector.broadcast %cst_169 : f32 to vector<16x32xf32>
    %336 = arith.addf %334, %335 : vector<16x32xf32>
    %337 = arith.mulf %336, %326 : vector<16x32xf32>
    %cst_170 = arith.constant 0.254829586 : f32
    %338 = vector.broadcast %cst_170 : f32 to vector<16x32xf32>
    %339 = arith.addf %337, %338 : vector<16x32xf32>
    %340 = arith.mulf %339, %326 : vector<16x32xf32>
    %341 = arith.mulf %320, %320 : vector<16x32xf32>
    %cst_171 = arith.constant 0.000000e+00 : f32
    %342 = vector.broadcast %cst_171 : f32 to vector<16x32xf32>
    %343 = arith.subf %342, %341 : vector<16x32xf32>
    %344 = math.exp %343 : vector<16x32xf32>
    %345 = arith.mulf %340, %344 : vector<16x32xf32>
    %cst_172 = arith.constant 1.000000e+00 : f32
    %346 = vector.broadcast %cst_172 : f32 to vector<16x32xf32>
    %347 = arith.subf %346, %345 : vector<16x32xf32>
    %cst_173 = arith.constant 0.000000e+00 : f32
    %348 = vector.broadcast %cst_173 : f32 to vector<16x32xf32>
    %349 = arith.cmpf oge, %319, %348 : vector<16x32xf32>
    %cst_174 = arith.constant 0.000000e+00 : f32
    %350 = vector.broadcast %cst_174 : f32 to vector<16x32xf32>
    %351 = arith.subf %350, %347 : vector<16x32xf32>
    %352 = arith.select %349, %347, %351 : vector<16x32xi1>, vector<16x32xf32>
    %cst_175 = arith.constant 1.000000e+00 : f32
    %353 = vector.broadcast %cst_175 : f32 to vector<16x32xf32>
    %354 = arith.addf %353, %352 : vector<16x32xf32>
    %355 = arith.mulf %317, %354 : vector<16x32xf32>
    %cst_176 = arith.constant dense<0.000000e+00> : vector<16x32xf32>
    %356 = tpu.matmul %355, %311, %cst_176 {dimension_numbers = #tpu.dot_dimension_numbers<[1], [0], [0], [1], [0, 0, 1, 1], [], []>} : vector<16x32xf32>, vector<32x32xf32>, vector<16x32xf32> -> vector<16x32xf32>
    %357 = vector.broadcast %313 : vector<1x32xf32> to vector<16x32xf32>
    %358 = arith.addf %356, %357 : vector<16x32xf32>
    %359 = vector.broadcast %315 : vector<1x1xf32> to vector<16x32xf32>
    %360 = arith.mulf %359, %358 : vector<16x32xf32>
    %cst_177 = arith.constant 1.000000e+00 : f32
    %361 = vector.broadcast %cst_177 : f32 to vector<1x1xf32>
    %362 = arith.subf %361, %315 : vector<1x1xf32>
    %363 = vector.broadcast %362 : vector<1x1xf32> to vector<16x32xf32>
    %364 = arith.mulf %363, %29 : vector<16x32xf32>
    %365 = arith.addf %360, %364 : vector<16x32xf32>
    %c0_178 = arith.constant 0 : index
    %c0_179 = arith.constant 0 : index
    %c0_180 = arith.constant 0 : index
    %366 = vector.load %arg26[%c0_178, %c0_179, %c0_180] : memref<2x32x32xf32, #tpu.memory_space<vmem>>, vector<1x32x32xf32>
    %367 = vector.shape_cast %366 : vector<1x32x32xf32> to vector<32x32xf32>
    %c0_181 = arith.constant 0 : index
    %c0_182 = arith.constant 0 : index
    %c0_183 = arith.constant 0 : index
    %368 = vector.load %arg27[%c0_181, %c0_182, %c0_183] : memref<2x1x32xf32, #tpu.memory_space<vmem>>, vector<1x1x32xf32>
    %369 = vector.shape_cast %368 : vector<1x1x32xf32> to vector<1x32xf32>
    %c0_184 = arith.constant 0 : index
    %c0_185 = arith.constant 0 : index
    %c0_186 = arith.constant 0 : index
    %370 = vector.load %arg28[%c0_184, %c0_185, %c0_186] : memref<2x32x32xf32, #tpu.memory_space<vmem>>, vector<1x32x32xf32>
    %371 = vector.shape_cast %370 : vector<1x32x32xf32> to vector<32x32xf32>
    %c0_187 = arith.constant 0 : index
    %c0_188 = arith.constant 0 : index
    %c0_189 = arith.constant 0 : index
    %372 = vector.load %arg29[%c0_187, %c0_188, %c0_189] : memref<2x1x32xf32, #tpu.memory_space<vmem>>, vector<1x1x32xf32>
    %373 = vector.shape_cast %372 : vector<1x1x32xf32> to vector<1x32xf32>
    %cst_190 = arith.constant dense<0.000000e+00> : vector<8x32xf32>
    %374 = tpu.matmul %309, %367, %cst_190 {dimension_numbers = #tpu.dot_dimension_numbers<[1], [0], [0], [1], [0, 0, 1, 1], [], []>} : vector<8x32xf32>, vector<32x32xf32>, vector<8x32xf32> -> vector<8x32xf32>
    %375 = vector.broadcast %369 : vector<1x32xf32> to vector<8x32xf32>
    %376 = arith.addf %374, %375 : vector<8x32xf32>
    %cst_191 = arith.constant 0.000000e+00 : f32
    %377 = vector.broadcast %cst_191 : f32 to vector<8x32xf32>
    %378 = arith.maximumf %376, %377 : vector<8x32xf32>
    %cst_192 = arith.constant dense<0.000000e+00> : vector<8x32xf32>
    %379 = tpu.matmul %378, %371, %cst_192 {dimension_numbers = #tpu.dot_dimension_numbers<[1], [0], [0], [1], [0, 0, 1, 1], [], []>} : vector<8x32xf32>, vector<32x32xf32>, vector<8x32xf32> -> vector<8x32xf32>
    %380 = vector.broadcast %373 : vector<1x32xf32> to vector<8x32xf32>
    %381 = arith.addf %379, %380 : vector<8x32xf32>
    %cst_193 = arith.constant 0.000000e+00 : f32
    %382 = vector.broadcast %cst_193 : f32 to vector<8x32xf32>
    %383 = arith.maximumf %381, %382 : vector<8x32xf32>
    %c0_194 = arith.constant 0 : index
    %c0_195 = arith.constant 0 : index
    %c0_196 = arith.constant 0 : index
    %384 = vector.load %arg30[%c0_194, %c0_195, %c0_196] : memref<2x32x32xf32, #tpu.memory_space<vmem>>, vector<1x32x32xf32>
    %385 = vector.shape_cast %384 : vector<1x32x32xf32> to vector<32x32xf32>
    %c0_197 = arith.constant 0 : index
    %c0_198 = arith.constant 0 : index
    %c0_199 = arith.constant 0 : index
    %386 = vector.load %arg31[%c0_197, %c0_198, %c0_199] : memref<2x1x32xf32, #tpu.memory_space<vmem>>, vector<1x1x32xf32>
    %387 = vector.shape_cast %386 : vector<1x1x32xf32> to vector<1x32xf32>
    %c0_200 = arith.constant 0 : index
    %c0_201 = arith.constant 0 : index
    %c0_202 = arith.constant 0 : index
    %388 = vector.load %arg32[%c0_200, %c0_201, %c0_202] : memref<2x32x32xf32, #tpu.memory_space<vmem>>, vector<1x32x32xf32>
    %389 = vector.shape_cast %388 : vector<1x32x32xf32> to vector<32x32xf32>
    %c0_203 = arith.constant 0 : index
    %c0_204 = arith.constant 0 : index
    %c0_205 = arith.constant 0 : index
    %390 = vector.load %arg33[%c0_203, %c0_204, %c0_205] : memref<2x1x32xf32, #tpu.memory_space<vmem>>, vector<1x1x32xf32>
    %391 = vector.shape_cast %390 : vector<1x1x32xf32> to vector<1x32xf32>
    %cst_206 = arith.constant dense<0.000000e+00> : vector<16x32xf32>
    %392 = tpu.matmul %365, %385, %cst_206 {dimension_numbers = #tpu.dot_dimension_numbers<[1], [0], [0], [1], [0, 0, 1, 1], [], []>} : vector<16x32xf32>, vector<32x32xf32>, vector<16x32xf32> -> vector<16x32xf32>
    %393 = vector.broadcast %387 : vector<1x32xf32> to vector<16x32xf32>
    %394 = arith.addf %392, %393 : vector<16x32xf32>
    %cst_207 = arith.constant 0.000000e+00 : f32
    %395 = vector.broadcast %cst_207 : f32 to vector<16x32xf32>
    %396 = arith.maximumf %394, %395 : vector<16x32xf32>
    %cst_208 = arith.constant dense<0.000000e+00> : vector<16x32xf32>
    %397 = tpu.matmul %396, %389, %cst_208 {dimension_numbers = #tpu.dot_dimension_numbers<[1], [0], [0], [1], [0, 0, 1, 1], [], []>} : vector<16x32xf32>, vector<32x32xf32>, vector<16x32xf32> -> vector<16x32xf32>
    %398 = vector.broadcast %391 : vector<1x32xf32> to vector<16x32xf32>
    %399 = arith.addf %397, %398 : vector<16x32xf32>
    %cst_209 = arith.constant 0.000000e+00 : f32
    %400 = vector.broadcast %cst_209 : f32 to vector<16x32xf32>
    %401 = arith.maximumf %399, %400 : vector<16x32xf32>
    %c1 = arith.constant 1 : index
    %c0_210 = arith.constant 0 : index
    %c0_211 = arith.constant 0 : index
    %402 = vector.load %arg12[%c1, %c0_210, %c0_211] : memref<2x32x96xf32, #tpu.memory_space<vmem>>, vector<1x32x96xf32>
    %403 = vector.shape_cast %402 : vector<1x32x96xf32> to vector<32x96xf32>
    %cst_212 = arith.constant dense<0.000000e+00> : vector<8x96xf32>
    %404 = tpu.matmul %383, %403, %cst_212 {dimension_numbers = #tpu.dot_dimension_numbers<[1], [0], [0], [1], [0, 0, 1, 1], [], []>} : vector<8x32xf32>, vector<32x96xf32>, vector<8x96xf32> -> vector<8x96xf32>
    %c1_213 = arith.constant 1 : index
    %c0_214 = arith.constant 0 : index
    %c0_215 = arith.constant 0 : index
    %405 = vector.load %arg13[%c1_213, %c0_214, %c0_215] : memref<2x1x96xf32, #tpu.memory_space<vmem>>, vector<1x1x96xf32>
    %406 = vector.shape_cast %405 : vector<1x1x96xf32> to vector<1x96xf32>
    %407 = vector.broadcast %406 : vector<1x96xf32> to vector<8x96xf32>
    %408 = arith.addf %404, %407 : vector<8x96xf32>
    %c1_216 = arith.constant 1 : index
    %c0_217 = arith.constant 0 : index
    %c0_218 = arith.constant 0 : index
    %409 = vector.load %arg14[%c1_216, %c0_217, %c0_218] : memref<2x32x96xf32, #tpu.memory_space<vmem>>, vector<1x32x96xf32>
    %410 = vector.shape_cast %409 : vector<1x32x96xf32> to vector<32x96xf32>
    %cst_219 = arith.constant dense<0.000000e+00> : vector<16x96xf32>
    %411 = tpu.matmul %401, %410, %cst_219 {dimension_numbers = #tpu.dot_dimension_numbers<[1], [0], [0], [1], [0, 0, 1, 1], [], []>} : vector<16x32xf32>, vector<32x96xf32>, vector<16x96xf32> -> vector<16x96xf32>
    %c1_220 = arith.constant 1 : index
    %c0_221 = arith.constant 0 : index
    %c0_222 = arith.constant 0 : index
    %412 = vector.load %arg15[%c1_220, %c0_221, %c0_222] : memref<2x1x96xf32, #tpu.memory_space<vmem>>, vector<1x1x96xf32>
    %413 = vector.shape_cast %412 : vector<1x1x96xf32> to vector<1x96xf32>
    %414 = vector.broadcast %413 : vector<1x96xf32> to vector<16x96xf32>
    %415 = arith.addf %411, %414 : vector<16x96xf32>
    %416 = vector.extract_strided_slice %408 {offsets = [0, 32], sizes = [8, 32], strides = [1, 1]} : vector<8x96xf32> to vector<8x32xf32>
    %417 = vector.extract_strided_slice %415 {offsets = [0, 0], sizes = [16, 32], strides = [1, 1]} : vector<16x96xf32> to vector<16x32xf32>
    %418 = vector.extract_strided_slice %415 {offsets = [0, 64], sizes = [16, 32], strides = [1, 1]} : vector<16x96xf32> to vector<16x32xf32>
    %c1_223 = arith.constant 1 : index
    %c0_224 = arith.constant 0 : index
    %c0_225 = arith.constant 0 : index
    %419 = vector.load %arg18[%c1_223, %c0_224, %c0_225] : memref<2x32x32xf32, #tpu.memory_space<vmem>>, vector<1x32x32xf32>
    %420 = vector.shape_cast %419 : vector<1x32x32xf32> to vector<32x32xf32>
    %c1_226 = arith.constant 1 : index
    %c0_227 = arith.constant 0 : index
    %c0_228 = arith.constant 0 : index
    %421 = vector.load %arg19[%c1_226, %c0_227, %c0_228] : memref<2x32x32xf32, #tpu.memory_space<vmem>>, vector<1x32x32xf32>
    %422 = vector.shape_cast %421 : vector<1x32x32xf32> to vector<32x32xf32>
    %cst_229 = arith.constant dense<0.000000e+00> : vector<16x32xf32>
    %423 = tpu.matmul %417, %420, %cst_229 {dimension_numbers = #tpu.dot_dimension_numbers<[1], [0], [0], [1], [0, 0, 1, 1], [], []>} : vector<16x32xf32>, vector<32x32xf32>, vector<16x32xf32> -> vector<16x32xf32>
    %cst_230 = arith.constant dense<0.000000e+00> : vector<16x32xf32>
    %424 = tpu.matmul %418, %422, %cst_230 {dimension_numbers = #tpu.dot_dimension_numbers<[1], [0], [0], [1], [0, 0, 1, 1], [], []>} : vector<16x32xf32>, vector<32x32xf32>, vector<16x32xf32> -> vector<16x32xf32>
    %cst_231 = arith.constant 0.000000e+00 : f32
    %425 = vector.broadcast %cst_231 : f32 to vector<8x16xf32>
    %426 = arith.cmpf ogt, %31, %425 : vector<8x16xf32>
    %427 = vector.extract_strided_slice %416 {offsets = [0, 0], sizes = [8, 8], strides = [1, 1]} : vector<8x32xf32> to vector<8x8xf32>
    %428 = vector.extract_strided_slice %423 {offsets = [0, 0], sizes = [16, 8], strides = [1, 1]} : vector<16x32xf32> to vector<16x8xf32>
    %cst_232 = arith.constant dense<0.000000e+00> : vector<8x16xf32>
    %429 = tpu.matmul %427, %428, %cst_232 {dimension_numbers = #tpu.dot_dimension_numbers<[1], [1], [0], [0], [0, 0, 1, 0], [], []>} : vector<8x8xf32>, vector<16x8xf32>, vector<8x16xf32> -> vector<8x16xf32>
    %cst_233 = arith.constant -1.000000e+30 : f32
    %430 = vector.broadcast %cst_233 : f32 to vector<8x16xf32>
    %431 = arith.select %426, %429, %430 : vector<8x16xi1>, vector<8x16xf32>
    %cst_234 = arith.constant dense<0xFF800000> : vector<8xf32>
    %432 = vector.multi_reduction <maximumf>, %431, %cst_234 [1] : vector<8x16xf32> to vector<8xf32>
    %433 = vector.shape_cast %432 : vector<8xf32> to vector<8x1xf32>
    %434 = vector.broadcast %433 : vector<8x1xf32> to vector<8x16xf32>
    %435 = arith.subf %431, %434 : vector<8x16xf32>
    %436 = math.exp %435 : vector<8x16xf32>
    %cst_235 = arith.constant 0.000000e+00 : f32
    %437 = vector.broadcast %cst_235 : f32 to vector<8x16xf32>
    %438 = arith.select %426, %436, %437 : vector<8x16xi1>, vector<8x16xf32>
    %cst_236 = arith.constant dense<0.000000e+00> : vector<8xf32>
    %439 = vector.multi_reduction <add>, %438, %cst_236 [1] : vector<8x16xf32> to vector<8xf32>
    %440 = vector.shape_cast %439 : vector<8xf32> to vector<8x1xf32>
    %cst_237 = arith.constant 0.000000e+00 : f32
    %441 = vector.broadcast %cst_237 : f32 to vector<8x1xf32>
    %442 = arith.cmpf ogt, %440, %441 : vector<8x1xf32>
    %cst_238 = arith.constant 1.000000e+00 : f32
    %443 = vector.broadcast %cst_238 : f32 to vector<8x1xf32>
    %444 = arith.select %442, %440, %443 : vector<8x1xi1>, vector<8x1xf32>
    %445 = tpu.reciprocal %444 {approx = true} : vector<8x1xf32> -> vector<8x1xf32>
    %446 = vector.broadcast %445 : vector<8x1xf32> to vector<8x16xf32>
    %447 = arith.mulf %438, %446 : vector<8x16xf32>
    %448 = vector.extract_strided_slice %424 {offsets = [0, 0], sizes = [16, 8], strides = [1, 1]} : vector<16x32xf32> to vector<16x8xf32>
    %cst_239 = arith.constant dense<0.000000e+00> : vector<8x8xf32>
    %449 = tpu.matmul %447, %448, %cst_239 {dimension_numbers = #tpu.dot_dimension_numbers<[1], [0], [0], [1], [0, 0, 1, 1], [], []>} : vector<8x16xf32>, vector<16x8xf32>, vector<8x8xf32> -> vector<8x8xf32>
    %450 = vector.extract_strided_slice %416 {offsets = [0, 8], sizes = [8, 8], strides = [1, 1]} : vector<8x32xf32> to vector<8x8xf32>
    %451 = vector.extract_strided_slice %423 {offsets = [0, 8], sizes = [16, 8], strides = [1, 1]} : vector<16x32xf32> to vector<16x8xf32>
    %cst_240 = arith.constant dense<0.000000e+00> : vector<8x16xf32>
    %452 = tpu.matmul %450, %451, %cst_240 {dimension_numbers = #tpu.dot_dimension_numbers<[1], [1], [0], [0], [0, 0, 1, 0], [], []>} : vector<8x8xf32>, vector<16x8xf32>, vector<8x16xf32> -> vector<8x16xf32>
    %cst_241 = arith.constant -1.000000e+30 : f32
    %453 = vector.broadcast %cst_241 : f32 to vector<8x16xf32>
    %454 = arith.select %426, %452, %453 : vector<8x16xi1>, vector<8x16xf32>
    %cst_242 = arith.constant dense<0xFF800000> : vector<8xf32>
    %455 = vector.multi_reduction <maximumf>, %454, %cst_242 [1] : vector<8x16xf32> to vector<8xf32>
    %456 = vector.shape_cast %455 : vector<8xf32> to vector<8x1xf32>
    %457 = vector.broadcast %456 : vector<8x1xf32> to vector<8x16xf32>
    %458 = arith.subf %454, %457 : vector<8x16xf32>
    %459 = math.exp %458 : vector<8x16xf32>
    %cst_243 = arith.constant 0.000000e+00 : f32
    %460 = vector.broadcast %cst_243 : f32 to vector<8x16xf32>
    %461 = arith.select %426, %459, %460 : vector<8x16xi1>, vector<8x16xf32>
    %cst_244 = arith.constant dense<0.000000e+00> : vector<8xf32>
    %462 = vector.multi_reduction <add>, %461, %cst_244 [1] : vector<8x16xf32> to vector<8xf32>
    %463 = vector.shape_cast %462 : vector<8xf32> to vector<8x1xf32>
    %cst_245 = arith.constant 0.000000e+00 : f32
    %464 = vector.broadcast %cst_245 : f32 to vector<8x1xf32>
    %465 = arith.cmpf ogt, %463, %464 : vector<8x1xf32>
    %cst_246 = arith.constant 1.000000e+00 : f32
    %466 = vector.broadcast %cst_246 : f32 to vector<8x1xf32>
    %467 = arith.select %465, %463, %466 : vector<8x1xi1>, vector<8x1xf32>
    %468 = tpu.reciprocal %467 {approx = true} : vector<8x1xf32> -> vector<8x1xf32>
    %469 = vector.broadcast %468 : vector<8x1xf32> to vector<8x16xf32>
    %470 = arith.mulf %461, %469 : vector<8x16xf32>
    %471 = vector.extract_strided_slice %424 {offsets = [0, 8], sizes = [16, 8], strides = [1, 1]} : vector<16x32xf32> to vector<16x8xf32>
    %cst_247 = arith.constant dense<0.000000e+00> : vector<8x8xf32>
    %472 = tpu.matmul %470, %471, %cst_247 {dimension_numbers = #tpu.dot_dimension_numbers<[1], [0], [0], [1], [0, 0, 1, 1], [], []>} : vector<8x16xf32>, vector<16x8xf32>, vector<8x8xf32> -> vector<8x8xf32>
    %473 = vector.extract_strided_slice %416 {offsets = [0, 16], sizes = [8, 8], strides = [1, 1]} : vector<8x32xf32> to vector<8x8xf32>
    %474 = vector.extract_strided_slice %423 {offsets = [0, 16], sizes = [16, 8], strides = [1, 1]} : vector<16x32xf32> to vector<16x8xf32>
    %cst_248 = arith.constant dense<0.000000e+00> : vector<8x16xf32>
    %475 = tpu.matmul %473, %474, %cst_248 {dimension_numbers = #tpu.dot_dimension_numbers<[1], [1], [0], [0], [0, 0, 1, 0], [], []>} : vector<8x8xf32>, vector<16x8xf32>, vector<8x16xf32> -> vector<8x16xf32>
    %cst_249 = arith.constant -1.000000e+30 : f32
    %476 = vector.broadcast %cst_249 : f32 to vector<8x16xf32>
    %477 = arith.select %426, %475, %476 : vector<8x16xi1>, vector<8x16xf32>
    %cst_250 = arith.constant dense<0xFF800000> : vector<8xf32>
    %478 = vector.multi_reduction <maximumf>, %477, %cst_250 [1] : vector<8x16xf32> to vector<8xf32>
    %479 = vector.shape_cast %478 : vector<8xf32> to vector<8x1xf32>
    %480 = vector.broadcast %479 : vector<8x1xf32> to vector<8x16xf32>
    %481 = arith.subf %477, %480 : vector<8x16xf32>
    %482 = math.exp %481 : vector<8x16xf32>
    %cst_251 = arith.constant 0.000000e+00 : f32
    %483 = vector.broadcast %cst_251 : f32 to vector<8x16xf32>
    %484 = arith.select %426, %482, %483 : vector<8x16xi1>, vector<8x16xf32>
    %cst_252 = arith.constant dense<0.000000e+00> : vector<8xf32>
    %485 = vector.multi_reduction <add>, %484, %cst_252 [1] : vector<8x16xf32> to vector<8xf32>
    %486 = vector.shape_cast %485 : vector<8xf32> to vector<8x1xf32>
    %cst_253 = arith.constant 0.000000e+00 : f32
    %487 = vector.broadcast %cst_253 : f32 to vector<8x1xf32>
    %488 = arith.cmpf ogt, %486, %487 : vector<8x1xf32>
    %cst_254 = arith.constant 1.000000e+00 : f32
    %489 = vector.broadcast %cst_254 : f32 to vector<8x1xf32>
    %490 = arith.select %488, %486, %489 : vector<8x1xi1>, vector<8x1xf32>
    %491 = tpu.reciprocal %490 {approx = true} : vector<8x1xf32> -> vector<8x1xf32>
    %492 = vector.broadcast %491 : vector<8x1xf32> to vector<8x16xf32>
    %493 = arith.mulf %484, %492 : vector<8x16xf32>
    %494 = vector.extract_strided_slice %424 {offsets = [0, 16], sizes = [16, 8], strides = [1, 1]} : vector<16x32xf32> to vector<16x8xf32>
    %cst_255 = arith.constant dense<0.000000e+00> : vector<8x8xf32>
    %495 = tpu.matmul %493, %494, %cst_255 {dimension_numbers = #tpu.dot_dimension_numbers<[1], [0], [0], [1], [0, 0, 1, 1], [], []>} : vector<8x16xf32>, vector<16x8xf32>, vector<8x8xf32> -> vector<8x8xf32>
    %496 = vector.extract_strided_slice %416 {offsets = [0, 24], sizes = [8, 8], strides = [1, 1]} : vector<8x32xf32> to vector<8x8xf32>
    %497 = vector.extract_strided_slice %423 {offsets = [0, 24], sizes = [16, 8], strides = [1, 1]} : vector<16x32xf32> to vector<16x8xf32>
    %cst_256 = arith.constant dense<0.000000e+00> : vector<8x16xf32>
    %498 = tpu.matmul %496, %497, %cst_256 {dimension_numbers = #tpu.dot_dimension_numbers<[1], [1], [0], [0], [0, 0, 1, 0], [], []>} : vector<8x8xf32>, vector<16x8xf32>, vector<8x16xf32> -> vector<8x16xf32>
    %cst_257 = arith.constant -1.000000e+30 : f32
    %499 = vector.broadcast %cst_257 : f32 to vector<8x16xf32>
    %500 = arith.select %426, %498, %499 : vector<8x16xi1>, vector<8x16xf32>
    %cst_258 = arith.constant dense<0xFF800000> : vector<8xf32>
    %501 = vector.multi_reduction <maximumf>, %500, %cst_258 [1] : vector<8x16xf32> to vector<8xf32>
    %502 = vector.shape_cast %501 : vector<8xf32> to vector<8x1xf32>
    %503 = vector.broadcast %502 : vector<8x1xf32> to vector<8x16xf32>
    %504 = arith.subf %500, %503 : vector<8x16xf32>
    %505 = math.exp %504 : vector<8x16xf32>
    %cst_259 = arith.constant 0.000000e+00 : f32
    %506 = vector.broadcast %cst_259 : f32 to vector<8x16xf32>
    %507 = arith.select %426, %505, %506 : vector<8x16xi1>, vector<8x16xf32>
    %cst_260 = arith.constant dense<0.000000e+00> : vector<8xf32>
    %508 = vector.multi_reduction <add>, %507, %cst_260 [1] : vector<8x16xf32> to vector<8xf32>
    %509 = vector.shape_cast %508 : vector<8xf32> to vector<8x1xf32>
    %cst_261 = arith.constant 0.000000e+00 : f32
    %510 = vector.broadcast %cst_261 : f32 to vector<8x1xf32>
    %511 = arith.cmpf ogt, %509, %510 : vector<8x1xf32>
    %cst_262 = arith.constant 1.000000e+00 : f32
    %512 = vector.broadcast %cst_262 : f32 to vector<8x1xf32>
    %513 = arith.select %511, %509, %512 : vector<8x1xi1>, vector<8x1xf32>
    %514 = tpu.reciprocal %513 {approx = true} : vector<8x1xf32> -> vector<8x1xf32>
    %515 = vector.broadcast %514 : vector<8x1xf32> to vector<8x16xf32>
    %516 = arith.mulf %507, %515 : vector<8x16xf32>
    %517 = vector.extract_strided_slice %424 {offsets = [0, 24], sizes = [16, 8], strides = [1, 1]} : vector<16x32xf32> to vector<16x8xf32>
    %cst_263 = arith.constant dense<0.000000e+00> : vector<8x8xf32>
    %518 = tpu.matmul %516, %517, %cst_263 {dimension_numbers = #tpu.dot_dimension_numbers<[1], [0], [0], [1], [0, 0, 1, 1], [], []>} : vector<8x16xf32>, vector<16x8xf32>, vector<8x8xf32> -> vector<8x8xf32>
    %519 = tpu.concatenate %449, %472, %495, %518 in 1 : vector<8x8xf32>, vector<8x8xf32>, vector<8x8xf32>, vector<8x8xf32> -> vector<8x32xf32>
    %c1_264 = arith.constant 1 : index
    %c0_265 = arith.constant 0 : index
    %c0_266 = arith.constant 0 : index
    %520 = vector.load %arg20[%c1_264, %c0_265, %c0_266] : memref<2x32x32xf32, #tpu.memory_space<vmem>>, vector<1x32x32xf32>
    %521 = vector.shape_cast %520 : vector<1x32x32xf32> to vector<32x32xf32>
    %c1_267 = arith.constant 1 : index
    %c0_268 = arith.constant 0 : index
    %c0_269 = arith.constant 0 : index
    %522 = vector.load %arg21[%c1_267, %c0_268, %c0_269] : memref<2x1x32xf32, #tpu.memory_space<vmem>>, vector<1x1x32xf32>
    %523 = vector.shape_cast %522 : vector<1x1x32xf32> to vector<1x32xf32>
    %c1_270 = arith.constant 1 : index
    %c0_271 = arith.constant 0 : index
    %c0_272 = arith.constant 0 : index
    %524 = vector.load %arg24[%c1_270, %c0_271, %c0_272] : memref<2x1x1xf32, #tpu.memory_space<vmem>>, vector<1x1x1xf32>
    %525 = vector.shape_cast %524 : vector<1x1x1xf32> to vector<1x1xf32>
    %cst_273 = arith.constant 5.000000e-01 : f32
    %526 = vector.broadcast %cst_273 : f32 to vector<8x32xf32>
    %527 = arith.mulf %526, %519 : vector<8x32xf32>
    %cst_274 = arith.constant 0.707106769 : f32
    %528 = vector.broadcast %cst_274 : f32 to vector<8x32xf32>
    %529 = arith.mulf %519, %528 : vector<8x32xf32>
    %530 = math.absf %529 : vector<8x32xf32>
    %cst_275 = arith.constant 0.327591091 : f32
    %531 = vector.broadcast %cst_275 : f32 to vector<8x32xf32>
    %532 = arith.mulf %531, %530 : vector<8x32xf32>
    %cst_276 = arith.constant 1.000000e+00 : f32
    %533 = vector.broadcast %cst_276 : f32 to vector<8x32xf32>
    %534 = arith.addf %533, %532 : vector<8x32xf32>
    %cst_277 = arith.constant 1.000000e+00 : f32
    %535 = vector.broadcast %cst_277 : f32 to vector<8x32xf32>
    %536 = arith.divf %535, %534 : vector<8x32xf32>
    %cst_278 = arith.constant 1.06140542 : f32
    %537 = vector.broadcast %cst_278 : f32 to vector<8x32xf32>
    %538 = arith.mulf %537, %536 : vector<8x32xf32>
    %cst_279 = arith.constant -1.45315206 : f32
    %539 = vector.broadcast %cst_279 : f32 to vector<8x32xf32>
    %540 = arith.addf %538, %539 : vector<8x32xf32>
    %541 = arith.mulf %540, %536 : vector<8x32xf32>
    %cst_280 = arith.constant 1.42141378 : f32
    %542 = vector.broadcast %cst_280 : f32 to vector<8x32xf32>
    %543 = arith.addf %541, %542 : vector<8x32xf32>
    %544 = arith.mulf %543, %536 : vector<8x32xf32>
    %cst_281 = arith.constant -0.284496725 : f32
    %545 = vector.broadcast %cst_281 : f32 to vector<8x32xf32>
    %546 = arith.addf %544, %545 : vector<8x32xf32>
    %547 = arith.mulf %546, %536 : vector<8x32xf32>
    %cst_282 = arith.constant 0.254829586 : f32
    %548 = vector.broadcast %cst_282 : f32 to vector<8x32xf32>
    %549 = arith.addf %547, %548 : vector<8x32xf32>
    %550 = arith.mulf %549, %536 : vector<8x32xf32>
    %551 = arith.mulf %530, %530 : vector<8x32xf32>
    %cst_283 = arith.constant 0.000000e+00 : f32
    %552 = vector.broadcast %cst_283 : f32 to vector<8x32xf32>
    %553 = arith.subf %552, %551 : vector<8x32xf32>
    %554 = math.exp %553 : vector<8x32xf32>
    %555 = arith.mulf %550, %554 : vector<8x32xf32>
    %cst_284 = arith.constant 1.000000e+00 : f32
    %556 = vector.broadcast %cst_284 : f32 to vector<8x32xf32>
    %557 = arith.subf %556, %555 : vector<8x32xf32>
    %cst_285 = arith.constant 0.000000e+00 : f32
    %558 = vector.broadcast %cst_285 : f32 to vector<8x32xf32>
    %559 = arith.cmpf oge, %529, %558 : vector<8x32xf32>
    %cst_286 = arith.constant 0.000000e+00 : f32
    %560 = vector.broadcast %cst_286 : f32 to vector<8x32xf32>
    %561 = arith.subf %560, %557 : vector<8x32xf32>
    %562 = arith.select %559, %557, %561 : vector<8x32xi1>, vector<8x32xf32>
    %cst_287 = arith.constant 1.000000e+00 : f32
    %563 = vector.broadcast %cst_287 : f32 to vector<8x32xf32>
    %564 = arith.addf %563, %562 : vector<8x32xf32>
    %565 = arith.mulf %527, %564 : vector<8x32xf32>
    %cst_288 = arith.constant dense<0.000000e+00> : vector<8x32xf32>
    %566 = tpu.matmul %565, %521, %cst_288 {dimension_numbers = #tpu.dot_dimension_numbers<[1], [0], [0], [1], [0, 0, 1, 1], [], []>} : vector<8x32xf32>, vector<32x32xf32>, vector<8x32xf32> -> vector<8x32xf32>
    %567 = vector.broadcast %523 : vector<1x32xf32> to vector<8x32xf32>
    %568 = arith.addf %566, %567 : vector<8x32xf32>
    %569 = vector.broadcast %525 : vector<1x1xf32> to vector<8x32xf32>
    %570 = arith.mulf %569, %568 : vector<8x32xf32>
    %cst_289 = arith.constant 1.000000e+00 : f32
    %571 = vector.broadcast %cst_289 : f32 to vector<1x1xf32>
    %572 = arith.subf %571, %525 : vector<1x1xf32>
    %573 = vector.broadcast %572 : vector<1x1xf32> to vector<8x32xf32>
    %574 = arith.mulf %573, %383 : vector<8x32xf32>
    %575 = arith.addf %570, %574 : vector<8x32xf32>
    %c1_290 = arith.constant 1 : index
    %c0_291 = arith.constant 0 : index
    %c0_292 = arith.constant 0 : index
    %576 = vector.load %arg26[%c1_290, %c0_291, %c0_292] : memref<2x32x32xf32, #tpu.memory_space<vmem>>, vector<1x32x32xf32>
    %577 = vector.shape_cast %576 : vector<1x32x32xf32> to vector<32x32xf32>
    %c1_293 = arith.constant 1 : index
    %c0_294 = arith.constant 0 : index
    %c0_295 = arith.constant 0 : index
    %578 = vector.load %arg27[%c1_293, %c0_294, %c0_295] : memref<2x1x32xf32, #tpu.memory_space<vmem>>, vector<1x1x32xf32>
    %579 = vector.shape_cast %578 : vector<1x1x32xf32> to vector<1x32xf32>
    %c1_296 = arith.constant 1 : index
    %c0_297 = arith.constant 0 : index
    %c0_298 = arith.constant 0 : index
    %580 = vector.load %arg28[%c1_296, %c0_297, %c0_298] : memref<2x32x32xf32, #tpu.memory_space<vmem>>, vector<1x32x32xf32>
    %581 = vector.shape_cast %580 : vector<1x32x32xf32> to vector<32x32xf32>
    %c1_299 = arith.constant 1 : index
    %c0_300 = arith.constant 0 : index
    %c0_301 = arith.constant 0 : index
    %582 = vector.load %arg29[%c1_299, %c0_300, %c0_301] : memref<2x1x32xf32, #tpu.memory_space<vmem>>, vector<1x1x32xf32>
    %583 = vector.shape_cast %582 : vector<1x1x32xf32> to vector<1x32xf32>
    %cst_302 = arith.constant dense<0.000000e+00> : vector<8x32xf32>
    %584 = tpu.matmul %575, %577, %cst_302 {dimension_numbers = #tpu.dot_dimension_numbers<[1], [0], [0], [1], [0, 0, 1, 1], [], []>} : vector<8x32xf32>, vector<32x32xf32>, vector<8x32xf32> -> vector<8x32xf32>
    %585 = vector.broadcast %579 : vector<1x32xf32> to vector<8x32xf32>
    %586 = arith.addf %584, %585 : vector<8x32xf32>
    %cst_303 = arith.constant 0.000000e+00 : f32
    %587 = vector.broadcast %cst_303 : f32 to vector<8x32xf32>
    %588 = arith.maximumf %586, %587 : vector<8x32xf32>
    %cst_304 = arith.constant dense<0.000000e+00> : vector<8x32xf32>
    %589 = tpu.matmul %588, %581, %cst_304 {dimension_numbers = #tpu.dot_dimension_numbers<[1], [0], [0], [1], [0, 0, 1, 1], [], []>} : vector<8x32xf32>, vector<32x32xf32>, vector<8x32xf32> -> vector<8x32xf32>
    %590 = vector.broadcast %583 : vector<1x32xf32> to vector<8x32xf32>
    %591 = arith.addf %589, %590 : vector<8x32xf32>
    %cst_305 = arith.constant 0.000000e+00 : f32
    %592 = vector.broadcast %cst_305 : f32 to vector<8x32xf32>
    %593 = arith.maximumf %591, %592 : vector<8x32xf32>
    %c0_306 = arith.constant 0 : index
    %c0_307 = arith.constant 0 : index
    %594 = vector.load %arg34[%c0_306, %c0_307] : memref<8x32xf32, #tpu.memory_space<vmem>>, vector<8x32xf32>
    tpu.vector_store %arg34[%c0_306, %c0_307], %593 {strides = array<i32>} : memref<8x32xf32, #tpu.memory_space<vmem>>, vector<8x32xf32>,
    return
  }
}

</mosaic_0001>

<llo_original>
// kernel: tpu_custom_call.1
$region0: #{tpu_custom_call.1}
  #allocation0 [shape = 'u32[]', space=smem, size = 0x4, offset = 0x4, fixed_abs, tag = 'smem constant byte address 0x4 - core index']
  #allocation1 [shape = 'u32[144,128]{1,0:T(1,128)}', space=vmem, size = 0x12000, scoped, tag = 'internal scratch']
  %s0 = inlined_call_operand.smem [shape: u32[35], index: -1, kind: input, shape index: {}]
  %s1 = sld [smem:[%s0]]
  %s2 = scalar_lea.smem %s0, 1
  %s3 = sld [smem:[%s2]]
  %s4 = scalar_lea.smem %s0, 2
  %s5 = sld [smem:[%s4]]
  %s6 = scalar_lea.smem %s0, 3
  %s7 = sld [smem:[%s6]]
  %s8 = scalar_lea.smem %s0, 4
  %s9 = sld [smem:[%s8]]
  %s10 = scalar_lea.smem %s0, 5
  %s11 = sld [smem:[%s10]]
  %s12 = scalar_lea.smem %s0, 6
  %s13 = sld [smem:[%s12]]
  %s14 = scalar_lea.smem %s0, 7
  %s15 = sld [smem:[%s14]]
  %s16 = scalar_lea.smem %s0, 8
  %s17 = sld [smem:[%s16]]
  %s18 = scalar_lea.smem %s0, 9
  %s19 = sld [smem:[%s18]]
  %s20 = scalar_lea.smem %s0, 10
  %s21 = sld [smem:[%s20]]
  %s22 = scalar_lea.smem %s0, 11
  %s23 = sld [smem:[%s22]]
  %s24 = scalar_lea.smem %s0, 12
  %s25 = sld [smem:[%s24]]
  %s26 = scalar_lea.smem %s0, 13
  %s27 = sld [smem:[%s26]]
  %s28 = scalar_lea.smem %s0, 14
  %s29 = sld [smem:[%s28]]
  %s30 = scalar_lea.smem %s0, 15
  %s31 = sld [smem:[%s30]]
  %s32 = scalar_lea.smem %s0, 16
  %s33 = sld [smem:[%s32]]
  %s34 = scalar_lea.smem %s0, 17
  %s35 = sld [smem:[%s34]]
  %s36 = scalar_lea.smem %s0, 18
  %s37 = sld [smem:[%s36]]
  %s38 = scalar_lea.smem %s0, 19
  %s39 = sld [smem:[%s38]]
  %s40 = scalar_lea.smem %s0, 20
  %s41 = sld [smem:[%s40]]
  %s42 = scalar_lea.smem %s0, 21
  %s43 = sld [smem:[%s42]]
  %s44 = scalar_lea.smem %s0, 22
  %s45 = sld [smem:[%s44]]
  %s46 = scalar_lea.smem %s0, 23
  %s47 = sld [smem:[%s46]]
  %s48 = scalar_lea.smem %s0, 24
  %s49 = sld [smem:[%s48]]
  %s50 = scalar_lea.smem %s0, 25
  %s51 = sld [smem:[%s50]]
  %s52 = scalar_lea.smem %s0, 26
  %s53 = sld [smem:[%s52]]
  %s54 = scalar_lea.smem %s0, 27
  %s55 = sld [smem:[%s54]]
  %s56 = scalar_lea.smem %s0, 28
  %s57 = sld [smem:[%s56]]
  %s58 = scalar_lea.smem %s0, 29
  %s59 = sld [smem:[%s58]]
  %s60 = scalar_lea.smem %s0, 30
  %s61 = sld [smem:[%s60]]
  %s62 = scalar_lea.smem %s0, 31
  %s63 = sld [smem:[%s62]]
  %s64 = scalar_lea.smem %s0, 32
  %s65 = sld [smem:[%s64]]
  %s66 = scalar_lea.smem %s0, 33
  %s67 = sld [smem:[%s66]]
  %s68 = scalar_lea.smem %s0, 34
  %s69 = sld [smem:[%s68]]
  %s70 = sld [smem:[#allocation0]]
  $region242: #{tpu_custom_call.1} parent=0
    _
  %s72 = ssub.s32 1, %s70
  %s73 = scalar_select 0, %s72, %s70
  $region1: #{tpu_custom_call.1} parent=0
    #allocation2 [shape = 'u8[4096]{0}', space=vmem, size = 0x1000, scoped, tag = 'input window, operand 0, single buffered']
    #allocation3 [shape = 's32[1]{0}', space=sflag, size = 0x4, scoped, tag = 'scoped memory for tpu_custom_call.1']
    #allocation4 [shape = 's32[1]{0}', space=sflag, size = 0x4, scoped, tag = 'scoped memory for tpu_custom_call.1']
    #allocation5 [shape = 'u8[8192]{0}', space=vmem, size = 0x2000, scoped, tag = 'input window, operand 1, single buffered']
    #allocation6 [shape = 's32[1]{0}', space=sflag, size = 0x4, scoped, tag = 'scoped memory for tpu_custom_call.1']
    #allocation7 [shape = 'u8[4096]{0}', space=vmem, size = 0x1000, scoped, tag = 'input window, operand 3, single buffered']
    #allocation8 [shape = 'u8[8192]{0}', space=vmem, size = 0x2000, scoped, tag = 'input window, operand 4, single buffered']
    #allocation9 [shape = 's32[1]{0}', space=sflag, size = 0x4, scoped, tag = 'scoped memory for tpu_custom_call.1']
    #allocation10 [shape = 'u8[16384]{0}', space=vmem, size = 0x4000, scoped, tag = 'input window, operand 6, single buffered']
    #allocation11 [shape = 'u8[512]{0}', space=vmem, size = 0x400, scoped, tag = 'input window, operand 7, single buffered']
    #allocation12 [shape = 's32[1]{0}', space=sflag, size = 0x4, scoped, tag = 'scoped memory for tpu_custom_call.1']
    #allocation13 [shape = 'u8[12288]{0}', space=vmem, size = 0x3000, scoped, tag = 'input window, operand 8, single buffered']
    #allocation14 [shape = 'u8[512]{0}', space=vmem, size = 0x400, scoped, tag = 'input window, operand 9, single buffered']
    #allocation15 [shape = 's32[1]{0}', space=sflag, size = 0x4, scoped, tag = 'scoped memory for tpu_custom_call.1']
    #allocation16 [shape = 'u8[16384]{0}', space=vmem, size = 0x4000, scoped, tag = 'input window, operand 10, single buffered']
    #allocation17 [shape = 'u8[512]{0}', space=vmem, size = 0x400, scoped, tag = 'input window, operand 11, single buffered']
    #allocation18 [shape = 's32[1]{0}', space=sflag, size = 0x4, scoped, tag = 'scoped memory for tpu_custom_call.1']
    #allocation19 [shape = 'u8[1024]{0}', space=vmem, size = 0x400, scoped, tag = 'input window, operand 13, single buffered']
    #allocation20 [shape = 'u8[32768]{0}', space=vmem, size = 0x8000, scoped, tag = 'input window, operand 14, single buffered']
    #allocation21 [shape = 's32[1]{0}', space=sflag, size = 0x4, scoped, tag = 'scoped memory for tpu_custom_call.1']
    #allocation22 [shape = 'u8[1024]{0}', space=vmem, size = 0x400, scoped, tag = 'input window, operand 15, single buffered']
    #allocation23 [shape = 'u8[32768]{0}', space=vmem, size = 0x8000, scoped, tag = 'input window, operand 16, single buffered']
    #allocation24 [shape = 's32[1]{0}', space=sflag, size = 0x4, scoped, tag = 'scoped memory for tpu_custom_call.1']
    #allocation25 [shape = 'u8[32768]{0}', space=vmem, size = 0x8000, scoped, tag = 'input window, operand 17, single buffered']
    #allocation26 [shape = 'u8[32768]{0}', space=vmem, size = 0x8000, scoped, tag = 'input window, operand 18, single buffered']
    #allocation27 [shape = 's32[1]{0}', space=sflag, size = 0x4, scoped, tag = 'scoped memory for tpu_custom_call.1']
    #allocation28 [shape = 'u8[32768]{0}', space=vmem, size = 0x8000, scoped, tag = 'input window, operand 19, single buffered']
    #allocation29 [shape = 'u8[32768]{0}', space=vmem, size = 0x8000, scoped, tag = 'input window, operand 20, single buffered']
    #allocation30 [shape = 's32[1]{0}', space=sflag, size = 0x4, scoped, tag = 'scoped memory for tpu_custom_call.1']
    #allocation31 [shape = 'u8[1024]{0}', space=vmem, size = 0x400, scoped, tag = 'input window, operand 21, single buffered']
    #allocation32 [shape = 'u8[32768]{0}', space=vmem, size = 0x8000, scoped, tag = 'input window, operand 22, single buffered']
    #allocation33 [shape = 's32[1]{0}', space=sflag, size = 0x4, scoped, tag = 'scoped memory for tpu_custom_call.1']
    #allocation34 [shape = 'u8[1024]{0}', space=vmem, size = 0x400, scoped, tag = 'input window, operand 23, single buffered']
    #allocation35 [shape = 'u8[32768]{0}', space=vmem, size = 0x8000, scoped, tag = 'input window, operand 28, single buffered']
    #allocation36 [shape = 's32[1]{0}', space=sflag, size = 0x4, scoped, tag = 'scoped memory for tpu_custom_call.1']
    #allocation37 [shape = 'u8[32768]{0}', space=vmem, size = 0x8000, scoped, tag = 'input window, operand 30, single buffered']
    #allocation38 [shape = 'u8[32768]{0}', space=vmem, size = 0x8000, scoped, tag = 'input window, operand 32, single buffered']
    #allocation39 [shape = 's32[1]{0}', space=sflag, size = 0x4, scoped, tag = 'scoped memory for tpu_custom_call.1']
    #allocation40 [shape = 'u8[4096]{0}', space=vmem, size = 0x1000, scoped, tag = 'output window, operand 0, single buffered']
    %74 = vsyncpa [#allocation3], 0
    %75 = vsyncpa [#allocation6], 0
    %76 = vsyncpa [#allocation9], 0
    %77 = vsyncpa [#allocation12], 0
    %78 = vsyncpa [#allocation15], 0
    %79 = vsyncpa [#allocation18], 0
    %80 = vsyncpa [#allocation21], 0
    %81 = vsyncpa [#allocation24], 0
    %82 = vsyncpa [#allocation27], 0
    %83 = vsyncpa [#allocation30], 0
    %84 = vsyncpa [#allocation33], 0
    %85 = vsyncpa [#allocation36], 0
    %86 = vsyncpa [#allocation39], 0
    %87 = vsyncpa [#allocation4], 0
    // Predicated region
    $region2: #{tpu_custom_call.1} parent=1 // pred_check
      _
    $region3: #{tpu_custom_call.1} parent=1 // pred_check_branch
      %89 = sbr.rel (0) target = $region5
    $region4: #{tpu_custom_call.1} parent=1 // pred_region
      %s91 = ssub.s32 128, 128
      %92 = vsyncadd [#allocation3], %s91
      %s94 = sshll.u32 [#allocation2], 4
      %s95 = int_to_ptr.vmem [resolvable:$true] %s94
      %97 = dma.hbm_to_vmem [thread:$0]  %s1, 128, %s95, [#allocation3]
    $region5: #{tpu_custom_call.1} parent=1 // pred_fallthru
      _
    // Predicated region
    $region6: #{tpu_custom_call.1} parent=1 // pred_check
      _
    $region7: #{tpu_custom_call.1} parent=1 // pred_check_branch
      %99 = sbr.rel (0) target = $region9
    $region8: #{tpu_custom_call.1} parent=1 // pred_region
      %s101 = ssub.s32 256, 256
      %102 = vsyncadd [#allocation6], %s101
      %s103 = sshll.u32 [#allocation5], 4
      %s104 = int_to_ptr.vmem [resolvable:$true] %s103
      %109 = dma.hbm_to_vmem [thread:$0]  %s3, 256, %s104, [#allocation6], 128, 128, 8
    $region9: #{tpu_custom_call.1} parent=1 // pred_fallthru
      _
    // Predicated region
    $region10: #{tpu_custom_call.1} parent=1 // pred_check
      _
    $region11: #{tpu_custom_call.1} parent=1 // pred_check_branch
      %111 = sbr.rel (0) target = $region13
    $region12: #{tpu_custom_call.1} parent=1 // pred_region
      _
    $region13: #{tpu_custom_call.1} parent=1 // pred_fallthru
      _
    // Predicated region
    $region14: #{tpu_custom_call.1} parent=1 // pred_check
      _
    $region15: #{tpu_custom_call.1} parent=1 // pred_check_branch
      %113 = sbr.rel (0) target = $region17
    $region16: #{tpu_custom_call.1} parent=1 // pred_region
      %s115 = ssub.s32 128, 128
      %116 = vsyncadd [#allocation6], %s115
      %s118 = sshll.u32 [#allocation7], 4
      %s119 = int_to_ptr.vmem [resolvable:$true] %s118
      %121 = dma.hbm_to_vmem [thread:$0]  %s7, 128, %s119, [#allocation6]
    $region17: #{tpu_custom_call.1} parent=1 // pred_fallthru
      _
    // Predicated region
    $region18: #{tpu_custom_call.1} parent=1 // pred_check
      _
    $region19: #{tpu_custom_call.1} parent=1 // pred_check_branch
      %123 = sbr.rel (0) target = $region21
    $region20: #{tpu_custom_call.1} parent=1 // pred_region
      %s125 = ssub.s32 256, 256
      %126 = vsyncadd [#allocation9], %s125
      %s127 = sshll.u32 [#allocation8], 4
      %s128 = int_to_ptr.vmem [resolvable:$true] %s127
      %133 = dma.hbm_to_vmem [thread:$0]  %s9, 256, %s128, [#allocation9], 128, 128, 8
    $region21: #{tpu_custom_call.1} parent=1 // pred_fallthru
      _
    // Predicated region
    $region22: #{tpu_custom_call.1} parent=1 // pred_check
      _
    $region23: #{tpu_custom_call.1} parent=1 // pred_check_branch
      %135 = sbr.rel (0) target = $region25
    $region24: #{tpu_custom_call.1} parent=1 // pred_region
      _
    $region25: #{tpu_custom_call.1} parent=1 // pred_fallthru
      _
    // Predicated region
    $region26: #{tpu_custom_call.1} parent=1 // pred_check
      _
    $region27: #{tpu_custom_call.1} parent=1 // pred_check_branch
      %137 = sbr.rel (0) target = $region29
    $region28: #{tpu_custom_call.1} parent=1 // pred_region
      %s139 = ssub.s32 512, 512
      %140 = vsyncadd [#allocation9], %s139
      %s141 = sshll.u32 [#allocation10], 4
      %s142 = int_to_ptr.vmem [resolvable:$true] %s141
      %147 = dma.hbm_to_vmem [thread:$0]  %s13, 512, %s142, [#allocation9], 128, 128, 8
    $region29: #{tpu_custom_call.1} parent=1 // pred_fallthru
      _
    // Predicated region
    $region30: #{tpu_custom_call.1} parent=1 // pred_check
      _
    $region31: #{tpu_custom_call.1} parent=1 // pred_check_branch
      %149 = sbr.rel (0) target = $region33
    $region32: #{tpu_custom_call.1} parent=1 // pred_region
      %s151 = ssub.s32 16, 16
      %152 = vsyncadd [#allocation12], %s151
      %s154 = sshll.u32 [#allocation11], 4
      %s155 = int_to_ptr.vmem [resolvable:$true] %s154
      %157 = dma.hbm_to_vmem [thread:$0]  %s15, 16, %s155, [#allocation12]
    $region33: #{tpu_custom_call.1} parent=1 // pred_fallthru
      _
    // Predicated region
    $region34: #{tpu_custom_call.1} parent=1 // pred_check
      _
    $region35: #{tpu_custom_call.1} parent=1 // pred_check_branch
      %159 = sbr.rel (0) target = $region37
    $region36: #{tpu_custom_call.1} parent=1 // pred_region
      %s161 = ssub.s32 384, 384
      %162 = vsyncadd [#allocation12], %s161
      %s163 = sshll.u32 [#allocation13], 4
      %s164 = int_to_ptr.vmem [resolvable:$true] %s163
      %169 = dma.hbm_to_vmem [thread:$0]  %s17, 384, %s164, [#allocation12], 128, 128, 8
    $region37: #{tpu_custom_call.1} parent=1 // pred_fallthru
      _
    // Predicated region
    $region38: #{tpu_custom_call.1} parent=1 // pred_check
      _
    $region39: #{tpu_custom_call.1} parent=1 // pred_check_branch
      %171 = sbr.rel (0) target = $region41
    $region40: #{tpu_custom_call.1} parent=1 // pred_region
      %s173 = ssub.s32 16, 16
      %174 = vsyncadd [#allocation15], %s173
      %s176 = sshll.u32 [#allocation14], 4
      %s177 = int_to_ptr.vmem [resolvable:$true] %s176
      %179 = dma.hbm_to_vmem [thread:$0]  %s19, 16, %s177, [#allocation15]
    $region41: #{tpu_custom_call.1} parent=1 // pred_fallthru
      _
    // Predicated region
    $region42: #{tpu_custom_call.1} parent=1 // pred_check
      _
    $region43: #{tpu_custom_call.1} parent=1 // pred_check_branch
      %181 = sbr.rel (0) target = $region45
    $region44: #{tpu_custom_call.1} parent=1 // pred_region
      %s183 = ssub.s32 512, 512
      %184 = vsyncadd [#allocation15], %s183
      %s185 = sshll.u32 [#allocation16], 4
      %s186 = int_to_ptr.vmem [resolvable:$true] %s185
      %191 = dma.hbm_to_vmem [thread:$0]  %s21, 512, %s186, [#allocation15], 128, 128, 8
    $region45: #{tpu_custom_call.1} parent=1 // pred_fallthru
      _
    // Predicated region
    $region46: #{tpu_custom_call.1} parent=1 // pred_check
      _
    $region47: #{tpu_custom_call.1} parent=1 // pred_check_branch
      %193 = sbr.rel (0) target = $region49
    $region48: #{tpu_custom_call.1} parent=1 // pred_region
      %s195 = ssub.s32 16, 16
      %196 = vsyncadd [#allocation18], %s195
      %s198 = sshll.u32 [#allocation17], 4
      %s199 = int_to_ptr.vmem [resolvable:$true] %s198
      %201 = dma.hbm_to_vmem [thread:$0]  %s23, 16, %s199, [#allocation18]
    $region49: #{tpu_custom_call.1} parent=1 // pred_fallthru
      _
    // Predicated region
    $region50: #{tpu_custom_call.1} parent=1 // pred_check
      _
    $region51: #{tpu_custom_call.1} parent=1 // pred_check_branch
      %203 = sbr.rel (0) target = $region53
    $region52: #{tpu_custom_call.1} parent=1 // pred_region
      _
    $region53: #{tpu_custom_call.1} parent=1 // pred_fallthru
      _
    // Predicated region
    $region54: #{tpu_custom_call.1} parent=1 // pred_check
      _
    $region55: #{tpu_custom_call.1} parent=1 // pred_check_branch
      %205 = sbr.rel (0) target = $region57
    $region56: #{tpu_custom_call.1} parent=1 // pred_region
      %s207 = ssub.s32 32, 32
      %208 = vsyncadd [#allocation18], %s207
      %s209 = sshll.u32 [#allocation19], 4
      %s210 = int_to_ptr.vmem [resolvable:$true] %s209
      %215 = dma.hbm_to_vmem [thread:$0]  %s27, 32, %s210, [#allocation18], 16, 16, 1
    $region57: #{tpu_custom_call.1} parent=1 // pred_fallthru
      _
    // Predicated region
    $region58: #{tpu_custom_call.1} parent=1 // pred_check
      _
    $region59: #{tpu_custom_call.1} parent=1 // pred_check_branch
      %217 = sbr.rel (0) target = $region61
    $region60: #{tpu_custom_call.1} parent=1 // pred_region
      %s219 = ssub.s32 1024, 1024
      %220 = vsyncadd [#allocation21], %s219
      %s221 = sshll.u32 [#allocation20], 4
      %s222 = int_to_ptr.vmem [resolvable:$true] %s221
      %227 = dma.hbm_to_vmem [thread:$0]  %s29, 1024, %s222, [#allocation21], 128, 128, 8
    $region61: #{tpu_custom_call.1} parent=1 // pred_fallthru
      _
    // Predicated region
    $region62: #{tpu_custom_call.1} parent=1 // pred_check
      _
    $region63: #{tpu_custom_call.1} parent=1 // pred_check_branch
      %229 = sbr.rel (0) target = $region65
    $region64: #{tpu_custom_call.1} parent=1 // pred_region
      %s231 = ssub.s32 32, 32
      %232 = vsyncadd [#allocation21], %s231
      %s233 = sshll.u32 [#allocation22], 4
      %s234 = int_to_ptr.vmem [resolvable:$true] %s233
      %239 = dma.hbm_to_vmem [thread:$0]  %s31, 32, %s234, [#allocation21], 16, 16, 1
    $region65: #{tpu_custom_call.1} parent=1 // pred_fallthru
      _
    // Predicated region
    $region66: #{tpu_custom_call.1} parent=1 // pred_check
      _
    $region67: #{tpu_custom_call.1} parent=1 // pred_check_branch
      %241 = sbr.rel (0) target = $region69
    $region68: #{tpu_custom_call.1} parent=1 // pred_region
      %s243 = ssub.s32 1024, 1024
      %244 = vsyncadd [#allocation24], %s243
      %s245 = sshll.u32 [#allocation23], 4
      %s246 = int_to_ptr.vmem [resolvable:$true] %s245
      %251 = dma.hbm_to_vmem [thread:$0]  %s33, 1024, %s246, [#allocation24], 128, 128, 8
    $region69: #{tpu_custom_call.1} parent=1 // pred_fallthru
      _
    // Predicated region
    $region70: #{tpu_custom_call.1} parent=1 // pred_check
      _
    $region71: #{tpu_custom_call.1} parent=1 // pred_check_branch
      %253 = sbr.rel (0) target = $region73
    $region72: #{tpu_custom_call.1} parent=1 // pred_region
      %s255 = ssub.s32 1024, 1024
      %256 = vsyncadd [#allocation24], %s255
      %s257 = sshll.u32 [#allocation25], 4
      %s258 = int_to_ptr.vmem [resolvable:$true] %s257
      %263 = dma.hbm_to_vmem [thread:$0]  %s35, 1024, %s258, [#allocation24], 128, 128, 8
    $region73: #{tpu_custom_call.1} parent=1 // pred_fallthru
      _
    // Predicated region
    $region74: #{tpu_custom_call.1} parent=1 // pred_check
      _
    $region75: #{tpu_custom_call.1} parent=1 // pred_check_branch
      %265 = sbr.rel (0) target = $region77
    $region76: #{tpu_custom_call.1} parent=1 // pred_region
      %s267 = ssub.s32 1024, 1024
      %268 = vsyncadd [#allocation27], %s267
      %s269 = sshll.u32 [#allocation26], 4
      %s270 = int_to_ptr.vmem [resolvable:$true] %s269
      %275 = dma.hbm_to_vmem [thread:$0]  %s37, 1024, %s270, [#allocation27], 128, 128, 8
    $region77: #{tpu_custom_call.1} parent=1 // pred_fallthru
      _
    // Predicated region
    $region78: #{tpu_custom_call.1} parent=1 // pred_check
      _
    $region79: #{tpu_custom_call.1} parent=1 // pred_check_branch
      %277 = sbr.rel (0) target = $region81
    $region80: #{tpu_custom_call.1} parent=1 // pred_region
      %s279 = ssub.s32 1024, 1024
      %280 = vsyncadd [#allocation27], %s279
      %s281 = sshll.u32 [#allocation28], 4
      %s282 = int_to_ptr.vmem [resolvable:$true] %s281
      %287 = dma.hbm_to_vmem [thread:$0]  %s39, 1024, %s282, [#allocation27], 128, 128, 8
    $region81: #{tpu_custom_call.1} parent=1 // pred_fallthru
      _
    // Predicated region
    $region82: #{tpu_custom_call.1} parent=1 // pred_check
      _
    $region83: #{tpu_custom_call.1} parent=1 // pred_check_branch
      %289 = sbr.rel (0) target = $region85
    $region84: #{tpu_custom_call.1} parent=1 // pred_region
      %s291 = ssub.s32 1024, 1024
      %292 = vsyncadd [#allocation30], %s291
      %s293 = sshll.u32 [#allocation29], 4
      %s294 = int_to_ptr.vmem [resolvable:$true] %s293
      %299 = dma.hbm_to_vmem [thread:$0]  %s41, 1024, %s294, [#allocation30], 128, 128, 8
    $region85: #{tpu_custom_call.1} parent=1 // pred_fallthru
      _
    // Predicated region
    $region86: #{tpu_custom_call.1} parent=1 // pred_check
      _
    $region87: #{tpu_custom_call.1} parent=1 // pred_check_branch
      %301 = sbr.rel (0) target = $region89
    $region88: #{tpu_custom_call.1} parent=1 // pred_region
      %s303 = ssub.s32 32, 32
      %304 = vsyncadd [#allocation30], %s303
      %s305 = sshll.u32 [#allocation31], 4
      %s306 = int_to_ptr.vmem [resolvable:$true] %s305
      %311 = dma.hbm_to_vmem [thread:$0]  %s43, 32, %s306, [#allocation30], 16, 16, 1
    $region89: #{tpu_custom_call.1} parent=1 // pred_fallthru
      _
    // Predicated region
    $region90: #{tpu_custom_call.1} parent=1 // pred_check
      _
    $region91: #{tpu_custom_call.1} parent=1 // pred_check_branch
      %313 = sbr.rel (0) target = $region93
    $region92: #{tpu_custom_call.1} parent=1 // pred_region
      %s315 = ssub.s32 1024, 1024
      %316 = vsyncadd [#allocation33], %s315
      %s317 = sshll.u32 [#allocation32], 4
      %s318 = int_to_ptr.vmem [resolvable:$true] %s317
      %323 = dma.hbm_to_vmem [thread:$0]  %s45, 1024, %s318, [#allocation33], 128, 128, 8
    $region93: #{tpu_custom_call.1} parent=1 // pred_fallthru
      _
    // Predicated region
    $region94: #{tpu_custom_call.1} parent=1 // pred_check
      _
    $region95: #{tpu_custom_call.1} parent=1 // pred_check_branch
      %325 = sbr.rel (0) target = $region97
    $region96: #{tpu_custom_call.1} parent=1 // pred_region
      %s327 = ssub.s32 32, 32
      %328 = vsyncadd [#allocation33], %s327
      %s329 = sshll.u32 [#allocation34], 4
      %s330 = int_to_ptr.vmem [resolvable:$true] %s329
      %335 = dma.hbm_to_vmem [thread:$0]  %s47, 32, %s330, [#allocation33], 16, 16, 1
    $region97: #{tpu_custom_call.1} parent=1 // pred_fallthru
      _
    // Predicated region
    $region98: #{tpu_custom_call.1} parent=1 // pred_check
      _
    $region99: #{tpu_custom_call.1} parent=1 // pred_check_branch
      %337 = sbr.rel (0) target = $region101
    $region100: #{tpu_custom_call.1} parent=1 // pred_region
      _
    $region101: #{tpu_custom_call.1} parent=1 // pred_fallthru
      _
    // Predicated region
    $region102: #{tpu_custom_call.1} parent=1 // pred_check
      _
    $region103: #{tpu_custom_call.1} parent=1 // pred_check_branch
      %339 = sbr.rel (0) target = $region105
    $region104: #{tpu_custom_call.1} parent=1 // pred_region
      _
    $region105: #{tpu_custom_call.1} parent=1 // pred_fallthru
      _
    // Predicated region
    $region106: #{tpu_custom_call.1} parent=1 // pred_check
      _
    $region107: #{tpu_custom_call.1} parent=1 // pred_check_branch
      %341 = sbr.rel (0) target = $region109
    $region108: #{tpu_custom_call.1} parent=1 // pred_region
      _
    $region109: #{tpu_custom_call.1} parent=1 // pred_fallthru
      _
    // Predicated region
    $region110: #{tpu_custom_call.1} parent=1 // pred_check
      _
    $region111: #{tpu_custom_call.1} parent=1 // pred_check_branch
      %343 = sbr.rel (0) target = $region113
    $region112: #{tpu_custom_call.1} parent=1 // pred_region
      _
    $region113: #{tpu_custom_call.1} parent=1 // pred_fallthru
      _
    // Predicated region
    $region114: #{tpu_custom_call.1} parent=1 // pred_check
      _
    $region115: #{tpu_custom_call.1} parent=1 // pred_check_branch
      %345 = sbr.rel (0) target = $region117
    $region116: #{tpu_custom_call.1} parent=1 // pred_region
      %s347 = ssub.s32 1024, 1024
      %348 = vsyncadd [#allocation36], %s347
      %s349 = sshll.u32 [#allocation35], 4
      %s350 = int_to_ptr.vmem [resolvable:$true] %s349
      %355 = dma.hbm_to_vmem [thread:$0]  %s57, 1024, %s350, [#allocation36], 128, 128, 8
    $region117: #{tpu_custom_call.1} parent=1 // pred_fallthru
      _
    // Predicated region
    $region118: #{tpu_custom_call.1} parent=1 // pred_check
      _
    $region119: #{tpu_custom_call.1} parent=1 // pred_check_branch
      %357 = sbr.rel (0) target = $region121
    $region120: #{tpu_custom_call.1} parent=1 // pred_region
      _
    $region121: #{tpu_custom_call.1} parent=1 // pred_fallthru
      _
    // Predicated region
    $region122: #{tpu_custom_call.1} parent=1 // pred_check
      _
    $region123: #{tpu_custom_call.1} parent=1 // pred_check_branch
      %359 = sbr.rel (0) target = $region125
    $region124: #{tpu_custom_call.1} parent=1 // pred_region
      %s361 = ssub.s32 1024, 1024
      %362 = vsyncadd [#allocation36], %s361
      %s363 = sshll.u32 [#allocation37], 4
      %s364 = int_to_ptr.vmem [resolvable:$true] %s363
      %369 = dma.hbm_to_vmem [thread:$0]  %s61, 1024, %s364, [#allocation36], 128, 128, 8
    $region125: #{tpu_custom_call.1} parent=1 // pred_fallthru
      _
    // Predicated region
    $region126: #{tpu_custom_call.1} parent=1 // pred_check
      _
    $region127: #{tpu_custom_call.1} parent=1 // pred_check_branch
      %371 = sbr.rel (0) target = $region129
    $region128: #{tpu_custom_call.1} parent=1 // pred_region
      _
    $region129: #{tpu_custom_call.1} parent=1 // pred_fallthru
      _
    // Predicated region
    $region130: #{tpu_custom_call.1} parent=1 // pred_check
      _
    $region131: #{tpu_custom_call.1} parent=1 // pred_check_branch
      %373 = sbr.rel (0) target = $region133
    $region132: #{tpu_custom_call.1} parent=1 // pred_region
      %s375 = ssub.s32 1024, 1024
      %376 = vsyncadd [#allocation39], %s375
      %s377 = sshll.u32 [#allocation38], 4
      %s378 = int_to_ptr.vmem [resolvable:$true] %s377
      %383 = dma.hbm_to_vmem [thread:$0]  %s65, 1024, %s378, [#allocation39], 128, 128, 8
    $region133: #{tpu_custom_call.1} parent=1 // pred_fallthru
      _
    // Predicated region
    $region134: #{tpu_custom_call.1} parent=1 // pred_check
      _
    $region135: #{tpu_custom_call.1} parent=1 // pred_check_branch
      %385 = sbr.rel (0) target = $region137
    $region136: #{tpu_custom_call.1} parent=1 // pred_region
      _
    $region137: #{tpu_custom_call.1} parent=1 // pred_fallthru
      _
    // Predicated region
    $region138: #{tpu_custom_call.1} parent=1 // pred_check
      _
    $region139: #{tpu_custom_call.1} parent=1 // pred_check_branch
      %387 = sbr.rel (0) target = $region141
    $region140: #{tpu_custom_call.1} parent=1 // pred_region
      %388 = dma.done [#allocation3], 128
    $region141: #{tpu_custom_call.1} parent=1 // pred_fallthru
      _
    // Predicated region
    $region142: #{tpu_custom_call.1} parent=1 // pred_check
      _
    $region143: #{tpu_custom_call.1} parent=1 // pred_check_branch
      %390 = sbr.rel (0) target = $region145
    $region144: #{tpu_custom_call.1} parent=1 // pred_region
      %391 = dma.done [#allocation6], 256
    $region145: #{tpu_custom_call.1} parent=1 // pred_fallthru
      _
    // Predicated region
    $region146: #{tpu_custom_call.1} parent=1 // pred_check
      _
    $region147: #{tpu_custom_call.1} parent=1 // pred_check_branch
      %393 = sbr.rel (0) target = $region149
    $region148: #{tpu_custom_call.1} parent=1 // pred_region
      %394 = dma.done [#allocation6], 128
    $region149: #{tpu_custom_call.1} parent=1 // pred_fallthru
      _
    // Predicated region
    $region150: #{tpu_custom_call.1} parent=1 // pred_check
      _
    $region151: #{tpu_custom_call.1} parent=1 // pred_check_branch
      %396 = sbr.rel (0) target = $region153
    $region152: #{tpu_custom_call.1} parent=1 // pred_region
      %397 = dma.done [#allocation9], 256
    $region153: #{tpu_custom_call.1} parent=1 // pred_fallthru
      _
    // Predicated region
    $region154: #{tpu_custom_call.1} parent=1 // pred_check
      _
    $region155: #{tpu_custom_call.1} parent=1 // pred_check_branch
      %399 = sbr.rel (0) target = $region157
    $region156: #{tpu_custom_call.1} parent=1 // pred_region
      %400 = dma.done [#allocation9], 512
    $region157: #{tpu_custom_call.1} parent=1 // pred_fallthru
      _
    // Predicated region
    $region158: #{tpu_custom_call.1} parent=1 // pred_check
      _
    $region159: #{tpu_custom_call.1} parent=1 // pred_check_branch
      %402 = sbr.rel (0) target = $region161
    $region160: #{tpu_custom_call.1} parent=1 // pred_region
      %403 = dma.done [#allocation12], 16
    $region161: #{tpu_custom_call.1} parent=1 // pred_fallthru
      _
    // Predicated region
    $region162: #{tpu_custom_call.1} parent=1 // pred_check
      _
    $region163: #{tpu_custom_call.1} parent=1 // pred_check_branch
      %405 = sbr.rel (0) target = $region165
    $region164: #{tpu_custom_call.1} parent=1 // pred_region
      %406 = dma.done [#allocation12], 384
    $region165: #{tpu_custom_call.1} parent=1 // pred_fallthru
      _
    // Predicated region
    $region166: #{tpu_custom_call.1} parent=1 // pred_check
      _
    $region167: #{tpu_custom_call.1} parent=1 // pred_check_branch
      %408 = sbr.rel (0) target = $region169
    $region168: #{tpu_custom_call.1} parent=1 // pred_region
      %409 = dma.done [#allocation15], 16
    $region169: #{tpu_custom_call.1} parent=1 // pred_fallthru
      _
    // Predicated region
    $region170: #{tpu_custom_call.1} parent=1 // pred_check
      _
    $region171: #{tpu_custom_call.1} parent=1 // pred_check_branch
      %411 = sbr.rel (0) target = $region173
    $region172: #{tpu_custom_call.1} parent=1 // pred_region
      %412 = dma.done [#allocation15], 512
    $region173: #{tpu_custom_call.1} parent=1 // pred_fallthru
      _
    // Predicated region
    $region174: #{tpu_custom_call.1} parent=1 // pred_check
      _
    $region175: #{tpu_custom_call.1} parent=1 // pred_check_branch
      %414 = sbr.rel (0) target = $region177
    $region176: #{tpu_custom_call.1} parent=1 // pred_region
      %415 = dma.done [#allocation18], 16
    $region177: #{tpu_custom_call.1} parent=1 // pred_fallthru
      _
    // Predicated region
    $region178: #{tpu_custom_call.1} parent=1 // pred_check
      _
    $region179: #{tpu_custom_call.1} parent=1 // pred_check_branch
      %417 = sbr.rel (0) target = $region181
    $region180: #{tpu_custom_call.1} parent=1 // pred_region
      %418 = dma.done [#allocation18], 32
    $region181: #{tpu_custom_call.1} parent=1 // pred_fallthru
      _
    // Predicated region
    $region182: #{tpu_custom_call.1} parent=1 // pred_check
      _
    $region183: #{tpu_custom_call.1} parent=1 // pred_check_branch
      %420 = sbr.rel (0) target = $region185
    $region184: #{tpu_custom_call.1} parent=1 // pred_region
      %421 = dma.done [#allocation21], 1024
    $region185: #{tpu_custom_call.1} parent=1 // pred_fallthru
      _
    // Predicated region
    $region186: #{tpu_custom_call.1} parent=1 // pred_check
      _
    $region187: #{tpu_custom_call.1} parent=1 // pred_check_branch
      %423 = sbr.rel (0) target = $region189
    $region188: #{tpu_custom_call.1} parent=1 // pred_region
      %424 = dma.done [#allocation21], 32
    $region189: #{tpu_custom_call.1} parent=1 // pred_fallthru
      _
    // Predicated region
    $region190: #{tpu_custom_call.1} parent=1 // pred_check
      _
    $region191: #{tpu_custom_call.1} parent=1 // pred_check_branch
      %426 = sbr.rel (0) target = $region193
    $region192: #{tpu_custom_call.1} parent=1 // pred_region
      %427 = dma.done [#allocation24], 1024
    $region193: #{tpu_custom_call.1} parent=1 // pred_fallthru
      _
    // Predicated region
    $region194: #{tpu_custom_call.1} parent=1 // pred_check
      _
    $region195: #{tpu_custom_call.1} parent=1 // pred_check_branch
      %429 = sbr.rel (0) target = $region197
    $region196: #{tpu_custom_call.1} parent=1 // pred_region
      %430 = dma.done [#allocation24], 1024
    $region197: #{tpu_custom_call.1} parent=1 // pred_fallthru
      _
    // Predicated region
    $region198: #{tpu_custom_call.1} parent=1 // pred_check
      _
    $region199: #{tpu_custom_call.1} parent=1 // pred_check_branch
      %432 = sbr.rel (0) target = $region201
    $region200: #{tpu_custom_call.1} parent=1 // pred_region
      %433 = dma.done [#allocation27], 1024
    $region201: #{tpu_custom_call.1} parent=1 // pred_fallthru
      _
    // Predicated region
    $region202: #{tpu_custom_call.1} parent=1 // pred_check
      _
    $region203: #{tpu_custom_call.1} parent=1 // pred_check_branch
      %435 = sbr.rel (0) target = $region205
    $region204: #{tpu_custom_call.1} parent=1 // pred_region
      %436 = dma.done [#allocation27], 1024
    $region205: #{tpu_custom_call.1} parent=1 // pred_fallthru
      _
    // Predicated region
    $region206: #{tpu_custom_call.1} parent=1 // pred_check
      _
    $region207: #{tpu_custom_call.1} parent=1 // pred_check_branch
      %438 = sbr.rel (0) target = $region209
    $region208: #{tpu_custom_call.1} parent=1 // pred_region
      %439 = dma.done [#allocation30], 1024
    $region209: #{tpu_custom_call.1} parent=1 // pred_fallthru
      _
    // Predicated region
    $region210: #{tpu_custom_call.1} parent=1 // pred_check
      _
    $region211: #{tpu_custom_call.1} parent=1 // pred_check_branch
      %441 = sbr.rel (0) target = $region213
    $region212: #{tpu_custom_call.1} parent=1 // pred_region
      %442 = dma.done [#allocation30], 32
    $region213: #{tpu_custom_call.1} parent=1 // pred_fallthru
      _
    // Predicated region
    $region214: #{tpu_custom_call.1} parent=1 // pred_check
      _
    $region215: #{tpu_custom_call.1} parent=1 // pred_check_branch
      %444 = sbr.rel (0) target = $region217
    $region216: #{tpu_custom_call.1} parent=1 // pred_region
      %445 = dma.done [#allocation33], 1024
    $region217: #{tpu_custom_call.1} parent=1 // pred_fallthru
      _
    // Predicated region
    $region218: #{tpu_custom_call.1} parent=1 // pred_check
      _
    $region219: #{tpu_custom_call.1} parent=1 // pred_check_branch
      %447 = sbr.rel (0) target = $region221
    $region220: #{tpu_custom_call.1} parent=1 // pred_region
      %448 = dma.done [#allocation33], 32
    $region221: #{tpu_custom_call.1} parent=1 // pred_fallthru
      _
    // Predicated region
    $region222: #{tpu_custom_call.1} parent=1 // pred_check
      _
    $region223: #{tpu_custom_call.1} parent=1 // pred_check_branch
      %450 = sbr.rel (0) target = $region225
    $region224: #{tpu_custom_call.1} parent=1 // pred_region
      %451 = dma.done [#allocation36], 1024
    $region225: #{tpu_custom_call.1} parent=1 // pred_fallthru
      _
    // Predicated region
    $region226: #{tpu_custom_call.1} parent=1 // pred_check
      _
    $region227: #{tpu_custom_call.1} parent=1 // pred_check_branch
      %453 = sbr.rel (0) target = $region229
    $region228: #{tpu_custom_call.1} parent=1 // pred_region
      %454 = dma.done [#allocation36], 1024
    $region229: #{tpu_custom_call.1} parent=1 // pred_fallthru
      _
    // Predicated region
    $region230: #{tpu_custom_call.1} parent=1 // pred_check
      _
    $region231: #{tpu_custom_call.1} parent=1 // pred_check_branch
      %456 = sbr.rel (0) target = $region233
    $region232: #{tpu_custom_call.1} parent=1 // pred_region
      %457 = dma.done [#allocation39], 1024
    $region233: #{tpu_custom_call.1} parent=1 // pred_fallthru
      _
    %v458 = vld [vmem:[#allocation2] sm:$0xff]
    %v459 = vld [vmem:[#allocation8] sm:$0xff]
    %v460 = vld [vmem:[#allocation8 + $0x8] sm:$0xff]
    %v461 = vld [vmem:[%s11] sm:$0x1]
    %v462 = vld [vmem:[#allocation10] sm:$0xff]
    %v463 = vld [vmem:[#allocation10 + $0x8] sm:$0xff]
    %v464 = vld [vmem:[#allocation10 + $0x10] sm:$0xff]
    %v465 = vld [vmem:[#allocation10 + $0x18] sm:$0xff]
    %v466 = vld [vmem:[#allocation11] sm:$0x1]
    %v468 = vlaneseq
    %v469 = vshrl.u32 %v468, 7
    %v470 = vsub.s32 0, %v469
    %v471 = vrot.slane %v461, %v470
    %vm473 = vcmask 130048
    %v475 = vsel %vm473, %v458, 0
    %477 = vmatprep.subr.mxu0 0.0
    %478 = vmatpush1.msra.mxu0 %v459
    %479 = vmatprep.subr.mxu0 0.0
    %480 = vmatpush1.msra.mxu0 %v460
    %481 = vmatprep.subr.mxu0 0.0
    %482 = vmatpush1.msra.mxu0 0.0
    %483 = vmatprep.subr.mxu0 0.0
    %484 = vmatpush1.msra.mxu0 0.0
    %485 = vmatprep.subr.mxu0 0.0
    %486 = vmatpush1.msra.mxu0 0.0
    %487 = vmatprep.subr.mxu0 0.0
    %488 = vmatpush1.msra.mxu0 0.0
    %489 = vmatprep.subr.mxu0 0.0
    %490 = vmatpush1.msra.mxu0 0.0
    %491 = vmatprep.subr.mxu0 0.0
    %492 = vmatpush1.msra.mxu0 0.0
    %493 = vmatprep.subr.mxu0 0.0
    %494 = vmatpush1.msra.mxu0 0.0
    %495 = vmatprep.subr.mxu0 0.0
    %496 = vmatpush1.msra.mxu0 0.0
    %497 = vmatprep.subr.mxu0 0.0
    %498 = vmatpush1.msra.mxu0 0.0
    %499 = vmatprep.subr.mxu0 0.0
    %500 = vmatpush1.msra.mxu0 0.0
    %501 = vmatprep.subr.mxu0 0.0
    %502 = vmatpush1.msra.mxu0 0.0
    %503 = vmatprep.subr.mxu0 0.0
    %504 = vmatpush1.msra.mxu0 0.0
    %505 = vmatprep.subr.mxu0 0.0
    %506 = vmatpush1.msra.mxu0 0.0
    %507 = vmatprep.subr.mxu0 0.0
    %508 = vmatpush1.msra.mxu0 0.0
    %509 = vmatprep.subr.mxu0 0.0
    %510 = vmatpush1.msra.mxu0 0.0
    %511 = vmatprep.subr.mxu0 0.0
    %512 = vmatpush1.msra.mxu0 0.0
    %513 = vmatprep.subr.mxu0 0.0
    %514 = vmatpush1.msra.mxu0 0.0
    %515 = vmatprep.subr.mxu0 0.0
    %516 = vmatpush1.msra.mxu0 0.0
    %517 = vmatprep.subr.mxu0 0.0
    %518 = vmatpush1.msra.mxu0 0.0
    %519 = vmatprep.subr.mxu0 0.0
    %520 = vmatpush1.msra.mxu0 0.0
    %521 = vmatprep.subr.mxu0 0.0
    %522 = vmatpush1.msra.mxu0 0.0
    %523 = vmatprep.subr.mxu0 0.0
    %524 = vmatpush1.msra.mxu0 0.0
    %525 = vmatprep.subr.mxu0 0.0
    %526 = vmatpush1.msra.mxu0 0.0
    %527 = vmatprep.subr.mxu0 0.0
    %528 = vmatpush1.msra.mxu0 0.0
    %529 = vmatprep.subr.mxu0 0.0
    %530 = vmatpush1.msra.mxu0 0.0
    %531 = vmatprep.subr.mxu0 0.0
    %532 = vmatpush1.msra.mxu0 0.0
    %533 = vmatprep.subr.mxu0 0.0
    %534 = vmatpush1.msra.mxu0 0.0
    %535 = vmatprep.subr.mxu0 0.0
    %536 = vmatpush1.msra.mxu0 0.0
    %537 = vmatprep.subr.mxu0 0.0
    %538 = vmatpush1.msra.mxu0 0.0
    %539 = vmatprep.subr.mxu0 0.0
    %540 = vmatpush1.msra.mxu0 0.0
    %541 = vmatprep.mubr.f32.mxu0 0.0
    %542 = vmatmul.mubr.f32.gmra.mrb[0].mxu0 %v475
    %v543 = vpop.f32.mrb[0].mxu0
    %v544 = vadd.f32 %v471, %v543
    %v545 = vpop.f32.mrb[0].mxu0
    %546 = vdwg.mxu0
    %v547 = vmax.f32 %v544, 0.0
    %v549 = vlaneseq
    %v550 = vshrl.u32 %v549, 7
    %v551 = vsub.s32 0, %v550
    %v552 = vrot.slane %v466, %v551
    %vm554 = vcmask 261120
    %v556 = vsel %vm554, %v547, 0
    %558 = vmatprep.subr.mxu0 0.0
    %559 = vmatpush1.msra.mxu0 %v462
    %560 = vmatprep.subr.mxu0 0.0
    %561 = vmatpush1.msra.mxu0 %v463
    %562 = vmatprep.subr.mxu0 0.0
    %563 = vmatpush1.msra.mxu0 %v464
    %564 = vmatprep.subr.mxu0 0.0
    %565 = vmatpush1.msra.mxu0 %v465
    %566 = vmatprep.subr.mxu0 0.0
    %567 = vmatpush1.msra.mxu0 0.0
    %568 = vmatprep.subr.mxu0 0.0
    %569 = vmatpush1.msra.mxu0 0.0
    %570 = vmatprep.subr.mxu0 0.0
    %571 = vmatpush1.msra.mxu0 0.0
    %572 = vmatprep.subr.mxu0 0.0
    %573 = vmatpush1.msra.mxu0 0.0
    %574 = vmatprep.subr.mxu0 0.0
    %575 = vmatpush1.msra.mxu0 0.0
    %576 = vmatprep.subr.mxu0 0.0
    %577 = vmatpush1.msra.mxu0 0.0
    %578 = vmatprep.subr.mxu0 0.0
    %579 = vmatpush1.msra.mxu0 0.0
    %580 = vmatprep.subr.mxu0 0.0
    %581 = vmatpush1.msra.mxu0 0.0
    %582 = vmatprep.subr.mxu0 0.0
    %583 = vmatpush1.msra.mxu0 0.0
    %584 = vmatprep.subr.mxu0 0.0
    %585 = vmatpush1.msra.mxu0 0.0
    %586 = vmatprep.subr.mxu0 0.0
    %587 = vmatpush1.msra.mxu0 0.0
    %588 = vmatprep.subr.mxu0 0.0
    %589 = vmatpush1.msra.mxu0 0.0
    %590 = vmatprep.subr.mxu0 0.0
    %591 = vmatpush1.msra.mxu0 0.0
    %592 = vmatprep.subr.mxu0 0.0
    %593 = vmatpush1.msra.mxu0 0.0
    %594 = vmatprep.subr.mxu0 0.0
    %595 = vmatpush1.msra.mxu0 0.0
    %596 = vmatprep.subr.mxu0 0.0
    %597 = vmatpush1.msra.mxu0 0.0
    %598 = vmatprep.subr.mxu0 0.0
    %599 = vmatpush1.msra.mxu0 0.0
    %600 = vmatprep.subr.mxu0 0.0
    %601 = vmatpush1.msra.mxu0 0.0
    %602 = vmatprep.subr.mxu0 0.0
    %603 = vmatpush1.msra.mxu0 0.0
    %604 = vmatprep.subr.mxu0 0.0
    %605 = vmatpush1.msra.mxu0 0.0
    %606 = vmatprep.subr.mxu0 0.0
    %607 = vmatpush1.msra.mxu0 0.0
    %608 = vmatprep.subr.mxu0 0.0
    %609 = vmatpush1.msra.mxu0 0.0
    %610 = vmatprep.subr.mxu0 0.0
    %611 = vmatpush1.msra.mxu0 0.0
    %612 = vmatprep.subr.mxu0 0.0
    %613 = vmatpush1.msra.mxu0 0.0
    %614 = vmatprep.subr.mxu0 0.0
    %615 = vmatpush1.msra.mxu0 0.0
    %616 = vmatprep.subr.mxu0 0.0
    %617 = vmatpush1.msra.mxu0 0.0
    %618 = vmatprep.subr.mxu0 0.0
    %619 = vmatpush1.msra.mxu0 0.0
    %620 = vmatprep.subr.mxu0 0.0
    %621 = vmatpush1.msra.mxu0 0.0
    %622 = vmatprep.mubr.f32.mxu0 0.0
    %623 = vmatmul.mubr.f32.gmra.mrb[0].mxu0 %v556
    %v624 = vpop.f32.mrb[0].mxu0
    %v625 = vadd.f32 %v552, %v624
    %v626 = vpop.f32.mrb[0].mxu0
    %627 = vdwg.mxu0
    %v628 = vmax.f32 %v625, 0.0
    %v629 = vld [vmem:[#allocation5] sm:$0xff]
    %v630 = vld [vmem:[#allocation5 + $0x8] sm:$0xff]
    %v631 = vld [vmem:[#allocation13] sm:$0xff]
    %v632 = vld [vmem:[#allocation13 + $0x8] sm:$0xff]
    %v633 = vld [vmem:[#allocation13 + $0x10] sm:$0xff]
    %v634 = vld [vmem:[#allocation14] sm:$0x1]
    %v635 = vld [vmem:[#allocation16] sm:$0xff]
    %v636 = vld [vmem:[#allocation16 + $0x8] sm:$0xff]
    %v637 = vld [vmem:[#allocation16 + $0x10] sm:$0xff]
    %v638 = vld [vmem:[#allocation16 + $0x18] sm:$0xff]
    %v639 = vld [vmem:[#allocation17] sm:$0x1]
    %v641 = vlaneseq
    %v642 = vshrl.u32 %v641, 7
    %v643 = vsub.s32 0, %v642
    %v644 = vrot.slane %v634, %v643
    %vm646 = vcmask 195584
    %v648 = vsel %vm646, %v629, 0
    %v651 = vsel %vm646, %v630, 0
    %653 = vmatprep.subr.mxu0 0.0
    %654 = vmatpush1.msra.mxu0 %v631
    %655 = vmatprep.subr.mxu0 0.0
    %656 = vmatpush1.msra.mxu0 %v632
    %657 = vmatprep.subr.mxu0 0.0
    %658 = vmatpush1.msra.mxu0 %v633
    %659 = vmatprep.subr.mxu0 0.0
    %660 = vmatpush1.msra.mxu0 0.0
    %661 = vmatprep.subr.mxu0 0.0
    %662 = vmatpush1.msra.mxu0 0.0
    %663 = vmatprep.subr.mxu0 0.0
    %664 = vmatpush1.msra.mxu0 0.0
    %665 = vmatprep.subr.mxu0 0.0
    %666 = vmatpush1.msra.mxu0 0.0
    %667 = vmatprep.subr.mxu0 0.0
    %668 = vmatpush1.msra.mxu0 0.0
    %669 = vmatprep.subr.mxu0 0.0
    %670 = vmatpush1.msra.mxu0 0.0
    %671 = vmatprep.subr.mxu0 0.0
    %672 = vmatpush1.msra.mxu0 0.0
    %673 = vmatprep.subr.mxu0 0.0
    %674 = vmatpush1.msra.mxu0 0.0
    %675 = vmatprep.subr.mxu0 0.0
    %676 = vmatpush1.msra.mxu0 0.0
    %677 = vmatprep.subr.mxu0 0.0
    %678 = vmatpush1.msra.mxu0 0.0
    %679 = vmatprep.subr.mxu0 0.0
    %680 = vmatpush1.msra.mxu0 0.0
    %681 = vmatprep.subr.mxu0 0.0
    %682 = vmatpush1.msra.mxu0 0.0
    %683 = vmatprep.subr.mxu0 0.0
    %684 = vmatpush1.msra.mxu0 0.0
    %685 = vmatprep.subr.mxu0 0.0
    %686 = vmatpush1.msra.mxu0 0.0
    %687 = vmatprep.subr.mxu0 0.0
    %688 = vmatpush1.msra.mxu0 0.0
    %689 = vmatprep.subr.mxu0 0.0
    %690 = vmatpush1.msra.mxu0 0.0
    %691 = vmatprep.subr.mxu0 0.0
    %692 = vmatpush1.msra.mxu0 0.0
    %693 = vmatprep.subr.mxu0 0.0
    %694 = vmatpush1.msra.mxu0 0.0
    %695 = vmatprep.subr.mxu0 0.0
    %696 = vmatpush1.msra.mxu0 0.0
    %697 = vmatprep.subr.mxu0 0.0
    %698 = vmatpush1.msra.mxu0 0.0
    %699 = vmatprep.subr.mxu0 0.0
    %700 = vmatpush1.msra.mxu0 0.0
    %701 = vmatprep.subr.mxu0 0.0
    %702 = vmatpush1.msra.mxu0 0.0
    %703 = vmatprep.subr.mxu0 0.0
    %704 = vmatpush1.msra.mxu0 0.0
    %705 = vmatprep.subr.mxu0 0.0
    %706 = vmatpush1.msra.mxu0 0.0
    %707 = vmatprep.subr.mxu0 0.0
    %708 = vmatpush1.msra.mxu0 0.0
    %709 = vmatprep.subr.mxu0 0.0
    %710 = vmatpush1.msra.mxu0 0.0
    %711 = vmatprep.subr.mxu0 0.0
    %712 = vmatpush1.msra.mxu0 0.0
    %713 = vmatprep.subr.mxu0 0.0
    %714 = vmatpush1.msra.mxu0 0.0
    %715 = vmatprep.subr.mxu0 0.0
    %716 = vmatpush1.msra.mxu0 0.0
    %717 = vmatprep.mubr.f32.mxu0 0.0
    %718 = vmatmul.mubr.f32.gmra.mrb[0].mxu0 %v648
    %v719 = vpop.f32.mrb[0].mxu0
    %v720 = vadd.f32 %v644, %v719
    %v721 = vpop.f32.mrb[0].mxu0
    %722 = vmatprep.mubr.f32.mxu0 0.0
    %723 = vmatmul.mubr.f32.gmra.mrb[0].mxu0 %v651
    %v724 = vpop.f32.mrb[0].mxu0
    %v725 = vadd.f32 %v644, %v724
    %v726 = vpop.f32.mrb[0].mxu0
    %727 = vdwg.mxu0
    %v728 = vmax.f32 %v720, 0.0
    %v729 = vmax.f32 %v725, 0.0
    %v731 = vlaneseq
    %v732 = vshrl.u32 %v731, 7
    %v733 = vsub.s32 0, %v732
    %v734 = vrot.slane %v639, %v733
    %v737 = vsel %vm554, %v728, 0
    %v740 = vsel %vm554, %v729, 0
    %742 = vmatprep.subr.mxu0 0.0
    %743 = vmatpush1.msra.mxu0 %v635
    %744 = vmatprep.subr.mxu0 0.0
    %745 = vmatpush1.msra.mxu0 %v636
    %746 = vmatprep.subr.mxu0 0.0
    %747 = vmatpush1.msra.mxu0 %v637
    %748 = vmatprep.subr.mxu0 0.0
    %749 = vmatpush1.msra.mxu0 %v638
    %750 = vmatprep.subr.mxu0 0.0
    %751 = vmatpush1.msra.mxu0 0.0
    %752 = vmatprep.subr.mxu0 0.0
    %753 = vmatpush1.msra.mxu0 0.0
    %754 = vmatprep.subr.mxu0 0.0
    %755 = vmatpush1.msra.mxu0 0.0
    %756 = vmatprep.subr.mxu0 0.0
    %757 = vmatpush1.msra.mxu0 0.0
    %758 = vmatprep.subr.mxu0 0.0
    %759 = vmatpush1.msra.mxu0 0.0
    %760 = vmatprep.subr.mxu0 0.0
    %761 = vmatpush1.msra.mxu0 0.0
    %762 = vmatprep.subr.mxu0 0.0
    %763 = vmatpush1.msra.mxu0 0.0
    %764 = vmatprep.subr.mxu0 0.0
    %765 = vmatpush1.msra.mxu0 0.0
    %766 = vmatprep.subr.mxu0 0.0
    %767 = vmatpush1.msra.mxu0 0.0
    %768 = vmatprep.subr.mxu0 0.0
    %769 = vmatpush1.msra.mxu0 0.0
    %770 = vmatprep.subr.mxu0 0.0
    %771 = vmatpush1.msra.mxu0 0.0
    %772 = vmatprep.subr.mxu0 0.0
    %773 = vmatpush1.msra.mxu0 0.0
    %774 = vmatprep.subr.mxu0 0.0
    %775 = vmatpush1.msra.mxu0 0.0
    %776 = vmatprep.subr.mxu0 0.0
    %777 = vmatpush1.msra.mxu0 0.0
    %778 = vmatprep.subr.mxu0 0.0
    %779 = vmatpush1.msra.mxu0 0.0
    %780 = vmatprep.subr.mxu0 0.0
    %781 = vmatpush1.msra.mxu0 0.0
    %782 = vmatprep.subr.mxu0 0.0
    %783 = vmatpush1.msra.mxu0 0.0
    %784 = vmatprep.subr.mxu0 0.0
    %785 = vmatpush1.msra.mxu0 0.0
    %786 = vmatprep.subr.mxu0 0.0
    %787 = vmatpush1.msra.mxu0 0.0
    %788 = vmatprep.subr.mxu0 0.0
    %789 = vmatpush1.msra.mxu0 0.0
    %790 = vmatprep.subr.mxu0 0.0
    %791 = vmatpush1.msra.mxu0 0.0
    %792 = vmatprep.subr.mxu0 0.0
    %793 = vmatpush1.msra.mxu0 0.0
    %794 = vmatprep.subr.mxu0 0.0
    %795 = vmatpush1.msra.mxu0 0.0
    %796 = vmatprep.subr.mxu0 0.0
    %797 = vmatpush1.msra.mxu0 0.0
    %798 = vmatprep.subr.mxu0 0.0
    %799 = vmatpush1.msra.mxu0 0.0
    %800 = vmatprep.subr.mxu0 0.0
    %801 = vmatpush1.msra.mxu0 0.0
    %802 = vmatprep.subr.mxu0 0.0
    %803 = vmatpush1.msra.mxu0 0.0
    %804 = vmatprep.subr.mxu0 0.0
    %805 = vmatpush1.msra.mxu0 0.0
    %806 = vmatprep.mubr.f32.mxu0 0.0
    %807 = vmatmul.mubr.f32.gmra.mrb[0].mxu0 %v737
    %v808 = vpop.f32.mrb[0].mxu0
    %v809 = vadd.f32 %v734, %v808
    %v810 = vpop.f32.mrb[0].mxu0
    %811 = vmatprep.mubr.f32.mxu0 0.0
    %812 = vmatmul.mubr.f32.gmra.mrb[0].mxu0 %v740
    %v813 = vpop.f32.mrb[0].mxu0
    %v814 = vadd.f32 %v734, %v813
    %v815 = vpop.f32.mrb[0].mxu0
    %816 = vdwg.mxu0
    %v817 = vmax.f32 %v809, 0.0
    %v818 = vmax.f32 %v814, 0.0
    %v819 = vld [vmem:[%s5] sm:$0xff]
    %v820 = vld [vmem:[%s5 + $0x8] sm:$0xff]
    %v821 = vld [vmem:[#allocation7] sm:$0xff]
    %v822 = vld [vmem:[%s25] sm:$0xff]
    %v823 = vld [vmem:[%s25 + $0x8] sm:$0xff]
    %v824 = vld [vmem:[%s25 + $0x10] sm:$0xff]
    %v825 = vld [vmem:[%s25 + $0x18] sm:$0xff]
    %v826 = vld [vmem:[#allocation19] sm:$0x1]
    %v828 = vlaneseq
    %v829 = vshrl.u32 %v828, 7
    %v830 = vsub.s32 0, %v829
    %v831 = vrot.slane %v826, %v830
    %v834 = vsel %vm554, %v628, 0
    %836 = vmatprep.subr.mxu0 0.0
    %837 = vmatpush1.msra.mxu0 %v822
    %838 = vmatprep.subr.mxu0 0.0
    %839 = vmatpush1.msra.mxu0 %v823
    %840 = vmatprep.subr.mxu0 0.0
    %841 = vmatpush1.msra.mxu0 %v824
    %842 = vmatprep.subr.mxu0 0.0
    %843 = vmatpush1.msra.mxu0 %v825
    %844 = vmatprep.subr.mxu0 0.0
    %845 = vmatpush1.msra.mxu0 0.0
    %846 = vmatprep.subr.mxu0 0.0
    %847 = vmatpush1.msra.mxu0 0.0
    %848 = vmatprep.subr.mxu0 0.0
    %849 = vmatpush1.msra.mxu0 0.0
    %850 = vmatprep.subr.mxu0 0.0
    %851 = vmatpush1.msra.mxu0 0.0
    %852 = vmatprep.subr.mxu0 0.0
    %853 = vmatpush1.msra.mxu0 0.0
    %854 = vmatprep.subr.mxu0 0.0
    %855 = vmatpush1.msra.mxu0 0.0
    %856 = vmatprep.subr.mxu0 0.0
    %857 = vmatpush1.msra.mxu0 0.0
    %858 = vmatprep.subr.mxu0 0.0
    %859 = vmatpush1.msra.mxu0 0.0
    %860 = vmatprep.subr.mxu0 0.0
    %861 = vmatpush1.msra.mxu0 0.0
    %862 = vmatprep.subr.mxu0 0.0
    %863 = vmatpush1.msra.mxu0 0.0
    %864 = vmatprep.subr.mxu0 0.0
    %865 = vmatpush1.msra.mxu0 0.0
    %866 = vmatprep.subr.mxu0 0.0
    %867 = vmatpush1.msra.mxu0 0.0
    %868 = vmatprep.subr.mxu0 0.0
    %869 = vmatpush1.msra.mxu0 0.0
    %870 = vmatprep.subr.mxu0 0.0
    %871 = vmatpush1.msra.mxu0 0.0
    %872 = vmatprep.subr.mxu0 0.0
    %873 = vmatpush1.msra.mxu0 0.0
    %874 = vmatprep.subr.mxu0 0.0
    %875 = vmatpush1.msra.mxu0 0.0
    %876 = vmatprep.subr.mxu0 0.0
    %877 = vmatpush1.msra.mxu0 0.0
    %878 = vmatprep.subr.mxu0 0.0
    %879 = vmatpush1.msra.mxu0 0.0
    %880 = vmatprep.subr.mxu0 0.0
    %881 = vmatpush1.msra.mxu0 0.0
    %882 = vmatprep.subr.mxu0 0.0
    %883 = vmatpush1.msra.mxu0 0.0
    %884 = vmatprep.subr.mxu0 0.0
    %885 = vmatpush1.msra.mxu0 0.0
    %886 = vmatprep.subr.mxu0 0.0
    %887 = vmatpush1.msra.mxu0 0.0
    %888 = vmatprep.subr.mxu0 0.0
    %889 = vmatpush1.msra.mxu0 0.0
    %890 = vmatprep.subr.mxu0 0.0
    %891 = vmatpush1.msra.mxu0 0.0
    %892 = vmatprep.subr.mxu0 0.0
    %893 = vmatpush1.msra.mxu0 0.0
    %894 = vmatprep.subr.mxu0 0.0
    %895 = vmatpush1.msra.mxu0 0.0
    %896 = vmatprep.subr.mxu0 0.0
    %897 = vmatpush1.msra.mxu0 0.0
    %898 = vmatprep.subr.mxu0 0.0
    %899 = vmatpush1.msra.mxu0 0.0
    %900 = vmatprep.mubr.f32.mxu0 0.0
    %901 = vmatmul.mubr.f32.gmra.mrb[0].mxu0 %v834
    %v902 = vpop.f32.mrb[0].mxu0
    %v903 = vadd.f32 %v831, %v902
    %v904 = vpop.f32.mrb[0].mxu0
    %905 = vdwg.mxu0
    %v906 = vld [vmem:[#allocation20] sm:$0xff]
    %v907 = vld [vmem:[#allocation20 + $0x8] sm:$0xff]
    %v908 = vld [vmem:[#allocation20 + $0x10] sm:$0xff]
    %v909 = vld [vmem:[#allocation20 + $0x18] sm:$0xff]
    %v910 = vld [vmem:[#allocation22] sm:$0x1]
    %v912 = vlaneseq
    %v913 = vshrl.u32 %v912, 7
    %v914 = vsub.s32 0, %v913
    %v915 = vrot.slane %v910, %v914
    %v918 = vsel %vm554, %v817, 0
    %v921 = vsel %vm554, %v818, 0
    %923 = vmatprep.subr.mxu0 0.0
    %924 = vmatpush1.msra.mxu0 %v906
    %925 = vmatprep.subr.mxu0 0.0
    %926 = vmatpush1.msra.mxu0 %v907
    %927 = vmatprep.subr.mxu0 0.0
    %928 = vmatpush1.msra.mxu0 %v908
    %929 = vmatprep.subr.mxu0 0.0
    %930 = vmatpush1.msra.mxu0 %v909
    %931 = vmatprep.subr.mxu0 0.0
    %932 = vmatpush1.msra.mxu0 0.0
    %933 = vmatprep.subr.mxu0 0.0
    %934 = vmatpush1.msra.mxu0 0.0
    %935 = vmatprep.subr.mxu0 0.0
    %936 = vmatpush1.msra.mxu0 0.0
    %937 = vmatprep.subr.mxu0 0.0
    %938 = vmatpush1.msra.mxu0 0.0
    %939 = vmatprep.subr.mxu0 0.0
    %940 = vmatpush1.msra.mxu0 0.0
    %941 = vmatprep.subr.mxu0 0.0
    %942 = vmatpush1.msra.mxu0 0.0
    %943 = vmatprep.subr.mxu0 0.0
    %944 = vmatpush1.msra.mxu0 0.0
    %945 = vmatprep.subr.mxu0 0.0
    %946 = vmatpush1.msra.mxu0 0.0
    %947 = vmatprep.subr.mxu0 0.0
    %948 = vmatpush1.msra.mxu0 0.0
    %949 = vmatprep.subr.mxu0 0.0
    %950 = vmatpush1.msra.mxu0 0.0
    %951 = vmatprep.subr.mxu0 0.0
    %952 = vmatpush1.msra.mxu0 0.0
    %953 = vmatprep.subr.mxu0 0.0
    %954 = vmatpush1.msra.mxu0 0.0
    %955 = vmatprep.subr.mxu0 0.0
    %956 = vmatpush1.msra.mxu0 0.0
    %957 = vmatprep.subr.mxu0 0.0
    %958 = vmatpush1.msra.mxu0 0.0
    %959 = vmatprep.subr.mxu0 0.0
    %960 = vmatpush1.msra.mxu0 0.0
    %961 = vmatprep.subr.mxu0 0.0
    %962 = vmatpush1.msra.mxu0 0.0
    %963 = vmatprep.subr.mxu0 0.0
    %964 = vmatpush1.msra.mxu0 0.0
    %965 = vmatprep.subr.mxu0 0.0
    %966 = vmatpush1.msra.mxu0 0.0
    %967 = vmatprep.subr.mxu0 0.0
    %968 = vmatpush1.msra.mxu0 0.0
    %969 = vmatprep.subr.mxu0 0.0
    %970 = vmatpush1.msra.mxu0 0.0
    %971 = vmatprep.subr.mxu0 0.0
    %972 = vmatpush1.msra.mxu0 0.0
    %973 = vmatprep.subr.mxu0 0.0
    %974 = vmatpush1.msra.mxu0 0.0
    %975 = vmatprep.subr.mxu0 0.0
    %976 = vmatpush1.msra.mxu0 0.0
    %977 = vmatprep.subr.mxu0 0.0
    %978 = vmatpush1.msra.mxu0 0.0
    %979 = vmatprep.subr.mxu0 0.0
    %980 = vmatpush1.msra.mxu0 0.0
    %981 = vmatprep.subr.mxu0 0.0
    %982 = vmatpush1.msra.mxu0 0.0
    %983 = vmatprep.subr.mxu0 0.0
    %984 = vmatpush1.msra.mxu0 0.0
    %985 = vmatprep.subr.mxu0 0.0
    %986 = vmatpush1.msra.mxu0 0.0
    %987 = vmatprep.mubr.f32.mxu0 0.0
    %988 = vmatmul.mubr.f32.gmra.mrb[0].mxu0 %v918
    %v989 = vpop.f32.mrb[0].mxu0
    %v990 = vadd.f32 %v915, %v989
    %v991 = vpop.f32.mrb[0].mxu0
    %992 = vmatprep.mubr.f32.mxu0 0.0
    %993 = vmatmul.mubr.f32.gmra.mrb[0].mxu0 %v921
    %v994 = vpop.f32.mrb[0].mxu0
    %v995 = vadd.f32 %v915, %v994
    %v996 = vpop.f32.mrb[0].mxu0
    %997 = vdwg.mxu0
    %v998 = vld [vmem:[#allocation23] sm:$0xff]
    %v999 = vld [vmem:[#allocation23 + $0x8] sm:$0xff]
    %v1000 = vld [vmem:[#allocation23 + $0x10] sm:$0xff]
    %v1001 = vld [vmem:[#allocation23 + $0x18] sm:$0xff]
    %v1002 = vld [vmem:[#allocation25] sm:$0xff]
    %v1003 = vld [vmem:[#allocation25 + $0x8] sm:$0xff]
    %v1004 = vld [vmem:[#allocation25 + $0x10] sm:$0xff]
    %v1005 = vld [vmem:[#allocation25 + $0x18] sm:$0xff]
    %v1007 = vsel %vm554, %v903, 0
    %1009 = vmatprep.subr.mxu0 0.0
    %1010 = vmatpush1.msra.mxu0 %v998
    %1011 = vmatprep.subr.mxu0 0.0
    %1012 = vmatpush1.msra.mxu0 %v999
    %1013 = vmatprep.subr.mxu0 0.0
    %1014 = vmatpush1.msra.mxu0 %v1000
    %1015 = vmatprep.subr.mxu0 0.0
    %1016 = vmatpush1.msra.mxu0 %v1001
    %1017 = vmatprep.subr.mxu0 0.0
    %1018 = vmatpush1.msra.mxu0 0.0
    %1019 = vmatprep.subr.mxu0 0.0
    %1020 = vmatpush1.msra.mxu0 0.0
    %1021 = vmatprep.subr.mxu0 0.0
    %1022 = vmatpush1.msra.mxu0 0.0
    %1023 = vmatprep.subr.mxu0 0.0
    %1024 = vmatpush1.msra.mxu0 0.0
    %1025 = vmatprep.subr.mxu0 0.0
    %1026 = vmatpush1.msra.mxu0 0.0
    %1027 = vmatprep.subr.mxu0 0.0
    %1028 = vmatpush1.msra.mxu0 0.0
    %1029 = vmatprep.subr.mxu0 0.0
    %1030 = vmatpush1.msra.mxu0 0.0
    %1031 = vmatprep.subr.mxu0 0.0
    %1032 = vmatpush1.msra.mxu0 0.0
    %1033 = vmatprep.subr.mxu0 0.0
    %1034 = vmatpush1.msra.mxu0 0.0
    %1035 = vmatprep.subr.mxu0 0.0
    %1036 = vmatpush1.msra.mxu0 0.0
    %1037 = vmatprep.subr.mxu0 0.0
    %1038 = vmatpush1.msra.mxu0 0.0
    %1039 = vmatprep.subr.mxu0 0.0
    %1040 = vmatpush1.msra.mxu0 0.0
    %1041 = vmatprep.subr.mxu0 0.0
    %1042 = vmatpush1.msra.mxu0 0.0
    %1043 = vmatprep.subr.mxu0 0.0
    %1044 = vmatpush1.msra.mxu0 0.0
    %1045 = vmatprep.subr.mxu0 0.0
    %1046 = vmatpush1.msra.mxu0 0.0
    %1047 = vmatprep.subr.mxu0 0.0
    %1048 = vmatpush1.msra.mxu0 0.0
    %1049 = vmatprep.subr.mxu0 0.0
    %1050 = vmatpush1.msra.mxu0 0.0
    %1051 = vmatprep.subr.mxu0 0.0
    %1052 = vmatpush1.msra.mxu0 0.0
    %1053 = vmatprep.subr.mxu0 0.0
    %1054 = vmatpush1.msra.mxu0 0.0
    %1055 = vmatprep.subr.mxu0 0.0
    %1056 = vmatpush1.msra.mxu0 0.0
    %1057 = vmatprep.subr.mxu0 0.0
    %1058 = vmatpush1.msra.mxu0 0.0
    %1059 = vmatprep.subr.mxu0 0.0
    %1060 = vmatpush1.msra.mxu0 0.0
    %1061 = vmatprep.subr.mxu0 0.0
    %1062 = vmatpush1.msra.mxu0 0.0
    %1063 = vmatprep.subr.mxu0 0.0
    %1064 = vmatpush1.msra.mxu0 0.0
    %1065 = vmatprep.subr.mxu0 0.0
    %1066 = vmatpush1.msra.mxu0 0.0
    %1067 = vmatprep.subr.mxu0 0.0
    %1068 = vmatpush1.msra.mxu0 0.0
    %1069 = vmatprep.subr.mxu0 0.0
    %1070 = vmatpush1.msra.mxu0 0.0
    %1071 = vmatprep.subr.mxu0 0.0
    %1072 = vmatpush1.msra.mxu0 0.0
    %1073 = vmatprep.mubr.f32.mxu0 0.0
    %1074 = vmatmul.mubr.f32.gmra.mrb[0].mxu0 %v1007
    %v1075 = vpop.f32.mrb[0].mxu0
    %v1076 = vadd.f32 0.0, %v1075
    %v1077 = vpop.f32.mrb[0].mxu0
    %1078 = vdwg.mxu0
    %1079 = vrot.lane.b32.xlu0 %v903, 64
    %v1080 = vpop.permute.xlu0 %1079
    %v1081 = vsel %vm554, %v1080, 0
    %1083 = vmatprep.subr.mxu0 0.0
    %1084 = vmatpush1.msra.mxu0 %v1002
    %1085 = vmatprep.subr.mxu0 0.0
    %1086 = vmatpush1.msra.mxu0 %v1003
    %1087 = vmatprep.subr.mxu0 0.0
    %1088 = vmatpush1.msra.mxu0 %v1004
    %1089 = vmatprep.subr.mxu0 0.0
    %1090 = vmatpush1.msra.mxu0 %v1005
    %1091 = vmatprep.subr.mxu0 0.0
    %1092 = vmatpush1.msra.mxu0 0.0
    %1093 = vmatprep.subr.mxu0 0.0
    %1094 = vmatpush1.msra.mxu0 0.0
    %1095 = vmatprep.subr.mxu0 0.0
    %1096 = vmatpush1.msra.mxu0 0.0
    %1097 = vmatprep.subr.mxu0 0.0
    %1098 = vmatpush1.msra.mxu0 0.0
    %1099 = vmatprep.subr.mxu0 0.0
    %1100 = vmatpush1.msra.mxu0 0.0
    %1101 = vmatprep.subr.mxu0 0.0
    %1102 = vmatpush1.msra.mxu0 0.0
    %1103 = vmatprep.subr.mxu0 0.0
    %1104 = vmatpush1.msra.mxu0 0.0
    %1105 = vmatprep.subr.mxu0 0.0
    %1106 = vmatpush1.msra.mxu0 0.0
    %1107 = vmatprep.subr.mxu0 0.0
    %1108 = vmatpush1.msra.mxu0 0.0
    %1109 = vmatprep.subr.mxu0 0.0
    %1110 = vmatpush1.msra.mxu0 0.0
    %1111 = vmatprep.subr.mxu0 0.0
    %1112 = vmatpush1.msra.mxu0 0.0
    %1113 = vmatprep.subr.mxu0 0.0
    %1114 = vmatpush1.msra.mxu0 0.0
    %1115 = vmatprep.subr.mxu0 0.0
    %1116 = vmatpush1.msra.mxu0 0.0
    %1117 = vmatprep.subr.mxu0 0.0
    %1118 = vmatpush1.msra.mxu0 0.0
    %1119 = vmatprep.subr.mxu0 0.0
    %1120 = vmatpush1.msra.mxu0 0.0
    %1121 = vmatprep.subr.mxu0 0.0
    %1122 = vmatpush1.msra.mxu0 0.0
    %1123 = vmatprep.subr.mxu0 0.0
    %1124 = vmatpush1.msra.mxu0 0.0
    %1125 = vmatprep.subr.mxu0 0.0
    %1126 = vmatpush1.msra.mxu0 0.0
    %1127 = vmatprep.subr.mxu0 0.0
    %1128 = vmatpush1.msra.mxu0 0.0
    %1129 = vmatprep.subr.mxu0 0.0
    %1130 = vmatpush1.msra.mxu0 0.0
    %1131 = vmatprep.subr.mxu0 0.0
    %1132 = vmatpush1.msra.mxu0 0.0
    %1133 = vmatprep.subr.mxu0 0.0
    %1134 = vmatpush1.msra.mxu0 0.0
    %1135 = vmatprep.subr.mxu0 0.0
    %1136 = vmatpush1.msra.mxu0 0.0
    %1137 = vmatprep.subr.mxu0 0.0
    %1138 = vmatpush1.msra.mxu0 0.0
    %1139 = vmatprep.subr.mxu0 0.0
    %1140 = vmatpush1.msra.mxu0 0.0
    %1141 = vmatprep.subr.mxu0 0.0
    %1142 = vmatpush1.msra.mxu0 0.0
    %1143 = vmatprep.subr.mxu0 0.0
    %1144 = vmatpush1.msra.mxu0 0.0
    %1145 = vmatprep.subr.mxu0 0.0
    %1146 = vmatpush1.msra.mxu0 0.0
    %1147 = vmatprep.mubr.f32.mxu0 0.0
    %1148 = vmatmul.mubr.f32.gmra.mrb[0].mxu0 %v1081
    %v1149 = vpop.f32.mrb[0].mxu0
    %v1150 = vadd.f32 0.0, %v1149
    %v1151 = vpop.f32.mrb[0].mxu0
    %1152 = vdwg.mxu0
    %vm1153 = vcmp.gt.f32.partialorder %v819, 0.0
    %vm1154 = vcmp.gt.f32.partialorder %v820, 0.0
    %1157 = vrot.lane.b32.xlu0 %v990, 96
    %v1158 = vpop.permute.xlu0 %1157
    %1159 = vrot.lane.b32.xlu0 %v995, 96
    %v1160 = vpop.permute.xlu0 %1159
    %vm1161 = vcmask 64512
    %v1162 = vsel %vm1161, %v1158, 0
    %v1164 = vsel %vm1161, %v1160, 0
    %v1167 = vsel %vm1161, %v1076, 0
    %1169 = vmatprep.subr.mxu0 0.0
    %1170 = vmatpush1.xpose.msra.mxu0 %v1167
    %1171 = vmatprep.subr.mxu0 0.0
    %1172 = vmatpush1.xpose.msra.mxu0 0.0
    %1173 = vmatprep.subr.mxu0 0.0
    %1174 = vmatpush1.xpose.msra.mxu0 0.0
    %1175 = vmatprep.subr.mxu0 0.0
    %1176 = vmatpush1.xpose.msra.mxu0 0.0
    %1177 = vmatprep.subr.mxu0 0.0
    %1178 = vmatpush1.xpose.msra.mxu0 0.0
    %1179 = vmatprep.subr.mxu0 0.0
    %1180 = vmatpush1.xpose.msra.mxu0 0.0
    %1181 = vmatprep.subr.mxu0 0.0
    %1182 = vmatpush1.xpose.msra.mxu0 0.0
    %1183 = vmatprep.subr.mxu0 0.0
    %1184 = vmatpush1.xpose.msra.mxu0 0.0
    %1185 = vmatprep.subr.mxu0 0.0
    %1186 = vmatpush1.xpose.msra.mxu0 0.0
    %1187 = vmatprep.subr.mxu0 0.0
    %1188 = vmatpush1.xpose.msra.mxu0 0.0
    %1189 = vmatprep.subr.mxu0 0.0
    %1190 = vmatpush1.xpose.msra.mxu0 0.0
    %1191 = vmatprep.subr.mxu0 0.0
    %1192 = vmatpush1.xpose.msra.mxu0 0.0
    %1193 = vmatprep.subr.mxu0 0.0
    %1194 = vmatpush1.xpose.msra.mxu0 0.0
    %1195 = vmatprep.subr.mxu0 0.0
    %1196 = vmatpush1.xpose.msra.mxu0 0.0
    %1197 = vmatprep.subr.mxu0 0.0
    %1198 = vmatpush1.xpose.msra.mxu0 0.0
    %1199 = vmatprep.subr.mxu0 0.0
    %1200 = vmatpush1.xpose.msra.mxu0 0.0
    %1201 = vmatprep.subr.mxu0 0.0
    %1202 = vmatpush1.xpose.msra.mxu0 0.0
    %1203 = vmatprep.subr.mxu0 0.0
    %1204 = vmatpush1.xpose.msra.mxu0 0.0
    %1205 = vmatprep.subr.mxu0 0.0
    %1206 = vmatpush1.xpose.msra.mxu0 0.0
    %1207 = vmatprep.subr.mxu0 0.0
    %1208 = vmatpush1.xpose.msra.mxu0 0.0
    %1209 = vmatprep.subr.mxu0 0.0
    %1210 = vmatpush1.xpose.msra.mxu0 0.0
    %1211 = vmatprep.subr.mxu0 0.0
    %1212 = vmatpush1.xpose.msra.mxu0 0.0
    %1213 = vmatprep.subr.mxu0 0.0
    %1214 = vmatpush1.xpose.msra.mxu0 0.0
    %1215 = vmatprep.subr.mxu0 0.0
    %1216 = vmatpush1.xpose.msra.mxu0 0.0
    %1217 = vmatprep.subr.mxu0 0.0
    %1218 = vmatpush1.xpose.msra.mxu0 0.0
    %1219 = vmatprep.subr.mxu0 0.0
    %1220 = vmatpush1.xpose.msra.mxu0 0.0
    %1221 = vmatprep.subr.mxu0 0.0
    %1222 = vmatpush1.xpose.msra.mxu0 0.0
    %1223 = vmatprep.subr.mxu0 0.0
    %1224 = vmatpush1.xpose.msra.mxu0 0.0
    %1225 = vmatprep.subr.mxu0 0.0
    %1226 = vmatpush1.xpose.msra.mxu0 0.0
    %1227 = vmatprep.subr.mxu0 0.0
    %1228 = vmatpush1.xpose.msra.mxu0 0.0
    %1229 = vmatprep.subr.mxu0 0.0
    %1230 = vmatpush1.xpose.msra.mxu0 0.0
    %1231 = vmatprep.subr.mxu0 0.0
    %1232 = vmatpush1.xpose.msra.mxu0 0.0
    %1233 = vmatprep.mubr.f32.mxu0 0.0
    %1234 = vmatmul.mubr.f32.gmra.mrb[0].mxu0 %v1162
    %v1235 = vpop.f32.mrb[0].mxu0
    %v1236 = vadd.f32 0.0, %v1235
    %v1237 = vpop.f32.mrb[0].mxu0
    %1238 = vmatprep.mubr.f32.mxu0 0.0
    %1239 = vmatmul.mubr.f32.gmra.mrb[0].mxu0 %v1164
    %v1240 = vpop.f32.mrb[0].mxu0
    %v1241 = vadd.f32 0.0, %v1240
    %v1242 = vpop.f32.mrb[0].mxu0
    %1243 = vdwg.mxu0
    %v1244 = vsel %vm1153, %v1236, -1e+30
    %v1245 = vsel %vm1154, %v1241, -1e+30
    %v1246 = vsel %vm1161, %v1244, -inf
    %1247 = vmax.xlane.f32.xlu0 %v1246
    %v1248 = vpop.xlane.xlu0 %1247
    %v1249 = vsel %vm1161, %v1245, -inf
    %1250 = vmax.xlane.f32.xlu0 %v1249
    %v1251 = vpop.xlane.xlu0 %1250
    %v1252 = vsub.f32 %v1244, %v1248
    %v1253 = vsub.f32 %v1245, %v1251
    %v1254 = vmul.f32 %v1252, 1.442695
    %v1255 = vpow.pop %v1254
    %v1256 = vmul.f32 %v1253, 1.442695
    %v1257 = vpow.pop %v1256
    %v1258 = vsel %vm1153, %v1255, 0.0
    %v1259 = vsel %vm1154, %v1257, 0.0
    %v1260 = vsel %vm1161, %v1258, 0.0
    %1261 = vadd.xlane.f32.xlu0 %v1260
    %v1262 = vpop.xlane.xlu0 %1261
    %v1263 = vsel %vm1161, %v1259, 0.0
    %1264 = vadd.xlane.f32.xlu0 %v1263
    %v1265 = vpop.xlane.xlu0 %1264
    %vm1266 = vcmp.gt.f32.partialorder %v1262, 0.0
    %vm1267 = vcmp.gt.f32.partialorder %v1265, 0.0
    %v1268 = vsel %vm1266, %v1262, 1.0
    %v1269 = vsel %vm1267, %v1265, 1.0
    %v1270 = vrcp.pop %v1268
    %v1271 = vrcp.pop %v1269
    %v1272 = vmul.f32 %v1258, %v1270
    %v1273 = vmul.f32 %v1259, %v1271
    %v1275 = vsel %vm1161, %v1272, 0
    %v1278 = vsel %vm1161, %v1273, 0
    %1280 = vmatprep.subr.mxu0 0.0
    %1281 = vmatpush1.msra.mxu0 %v1150
    %1282 = vmatprep.subr.mxu0 0.0
    %1283 = vmatpush1.msra.mxu0 0.0
    %1284 = vmatprep.subr.mxu0 0.0
    %1285 = vmatpush1.msra.mxu0 0.0
    %1286 = vmatprep.subr.mxu0 0.0
    %1287 = vmatpush1.msra.mxu0 0.0
    %1288 = vmatprep.subr.mxu0 0.0
    %1289 = vmatpush1.msra.mxu0 0.0
    %1290 = vmatprep.subr.mxu0 0.0
    %1291 = vmatpush1.msra.mxu0 0.0
    %1292 = vmatprep.subr.mxu0 0.0
    %1293 = vmatpush1.msra.mxu0 0.0
    %1294 = vmatprep.subr.mxu0 0.0
    %1295 = vmatpush1.msra.mxu0 0.0
    %1296 = vmatprep.subr.mxu0 0.0
    %1297 = vmatpush1.msra.mxu0 0.0
    %1298 = vmatprep.subr.mxu0 0.0
    %1299 = vmatpush1.msra.mxu0 0.0
    %1300 = vmatprep.subr.mxu0 0.0
    %1301 = vmatpush1.msra.mxu0 0.0
    %1302 = vmatprep.subr.mxu0 0.0
    %1303 = vmatpush1.msra.mxu0 0.0
    %1304 = vmatprep.subr.mxu0 0.0
    %1305 = vmatpush1.msra.mxu0 0.0
    %1306 = vmatprep.subr.mxu0 0.0
    %1307 = vmatpush1.msra.mxu0 0.0
    %1308 = vmatprep.subr.mxu0 0.0
    %1309 = vmatpush1.msra.mxu0 0.0
    %1310 = vmatprep.subr.mxu0 0.0
    %1311 = vmatpush1.msra.mxu0 0.0
    %1312 = vmatprep.subr.mxu0 0.0
    %1313 = vmatpush1.msra.mxu0 0.0
    %1314 = vmatprep.subr.mxu0 0.0
    %1315 = vmatpush1.msra.mxu0 0.0
    %1316 = vmatprep.subr.mxu0 0.0
    %1317 = vmatpush1.msra.mxu0 0.0
    %1318 = vmatprep.subr.mxu0 0.0
    %1319 = vmatpush1.msra.mxu0 0.0
    %1320 = vmatprep.subr.mxu0 0.0
    %1321 = vmatpush1.msra.mxu0 0.0
    %1322 = vmatprep.subr.mxu0 0.0
    %1323 = vmatpush1.msra.mxu0 0.0
    %1324 = vmatprep.subr.mxu0 0.0
    %1325 = vmatpush1.msra.mxu0 0.0
    %1326 = vmatprep.subr.mxu0 0.0
    %1327 = vmatpush1.msra.mxu0 0.0
    %1328 = vmatprep.subr.mxu0 0.0
    %1329 = vmatpush1.msra.mxu0 0.0
    %1330 = vmatprep.subr.mxu0 0.0
    %1331 = vmatpush1.msra.mxu0 0.0
    %1332 = vmatprep.subr.mxu0 0.0
    %1333 = vmatpush1.msra.mxu0 0.0
    %1334 = vmatprep.subr.mxu0 0.0
    %1335 = vmatpush1.msra.mxu0 0.0
    %1336 = vmatprep.subr.mxu0 0.0
    %1337 = vmatpush1.msra.mxu0 0.0
    %1338 = vmatprep.subr.mxu0 0.0
    %1339 = vmatpush1.msra.mxu0 0.0
    %1340 = vmatprep.subr.mxu0 0.0
    %1341 = vmatpush1.msra.mxu0 0.0
    %1342 = vmatprep.subr.mxu0 0.0
    %1343 = vmatpush1.msra.mxu0 0.0
    %1344 = vmatprep.mubr.f32.mxu0 0.0
    %1345 = vmatmul.mubr.f32.gmra.mrb[0].mxu0 %v1275
    %v1346 = vpop.f32.mrb[0].mxu0
    %v1347 = vadd.f32 0.0, %v1346
    %v1348 = vpop.f32.mrb[0].mxu0
    %1349 = vmatprep.mubr.f32.mxu0 0.0
    %1350 = vmatmul.mubr.f32.gmra.mrb[0].mxu0 %v1278
    %v1351 = vpop.f32.mrb[0].mxu0
    %v1352 = vadd.f32 0.0, %v1351
    %v1353 = vpop.f32.mrb[0].mxu0
    %1354 = vdwg.mxu0
    %1355 = vrot.lane.b32.xlu0 %v990, 88
    %v1356 = vpop.permute.xlu0 %1355
    %1357 = vrot.lane.b32.xlu0 %v995, 88
    %v1358 = vpop.permute.xlu0 %1357
    %1359 = vrot.lane.b32.xlu0 %v1076, 120
    %v1360 = vpop.permute.xlu0 %1359
    %v1361 = vsel %vm1161, %v1356, 0
    %v1363 = vsel %vm1161, %v1358, 0
    %v1365 = vsel %vm1161, %v1360, 0
    %1367 = vmatprep.subr.mxu0 0.0
    %1368 = vmatpush1.xpose.msra.mxu0 %v1365
    %1369 = vmatprep.subr.mxu0 0.0
    %1370 = vmatpush1.xpose.msra.mxu0 0.0
    %1371 = vmatprep.subr.mxu0 0.0
    %1372 = vmatpush1.xpose.msra.mxu0 0.0
    %1373 = vmatprep.subr.mxu0 0.0
    %1374 = vmatpush1.xpose.msra.mxu0 0.0
    %1375 = vmatprep.subr.mxu0 0.0
    %1376 = vmatpush1.xpose.msra.mxu0 0.0
    %1377 = vmatprep.subr.mxu0 0.0
    %1378 = vmatpush1.xpose.msra.mxu0 0.0
    %1379 = vmatprep.subr.mxu0 0.0
    %1380 = vmatpush1.xpose.msra.mxu0 0.0
    %1381 = vmatprep.subr.mxu0 0.0
    %1382 = vmatpush1.xpose.msra.mxu0 0.0
    %1383 = vmatprep.subr.mxu0 0.0
    %1384 = vmatpush1.xpose.msra.mxu0 0.0
    %1385 = vmatprep.subr.mxu0 0.0
    %1386 = vmatpush1.xpose.msra.mxu0 0.0
    %1387 = vmatprep.subr.mxu0 0.0
    %1388 = vmatpush1.xpose.msra.mxu0 0.0
    %1389 = vmatprep.subr.mxu0 0.0
    %1390 = vmatpush1.xpose.msra.mxu0 0.0
    %1391 = vmatprep.subr.mxu0 0.0
    %1392 = vmatpush1.xpose.msra.mxu0 0.0
    %1393 = vmatprep.subr.mxu0 0.0
    %1394 = vmatpush1.xpose.msra.mxu0 0.0
    %1395 = vmatprep.subr.mxu0 0.0
    %1396 = vmatpush1.xpose.msra.mxu0 0.0
    %1397 = vmatprep.subr.mxu0 0.0
    %1398 = vmatpush1.xpose.msra.mxu0 0.0
    %1399 = vmatprep.subr.mxu0 0.0
    %1400 = vmatpush1.xpose.msra.mxu0 0.0
    %1401 = vmatprep.subr.mxu0 0.0
    %1402 = vmatpush1.xpose.msra.mxu0 0.0
    %1403 = vmatprep.subr.mxu0 0.0
    %1404 = vmatpush1.xpose.msra.mxu0 0.0
    %1405 = vmatprep.subr.mxu0 0.0
    %1406 = vmatpush1.xpose.msra.mxu0 0.0
    %1407 = vmatprep.subr.mxu0 0.0
    %1408 = vmatpush1.xpose.msra.mxu0 0.0
    %1409 = vmatprep.subr.mxu0 0.0
    %1410 = vmatpush1.xpose.msra.mxu0 0.0
    %1411 = vmatprep.subr.mxu0 0.0
    %1412 = vmatpush1.xpose.msra.mxu0 0.0
    %1413 = vmatprep.subr.mxu0 0.0
    %1414 = vmatpush1.xpose.msra.mxu0 0.0
    %1415 = vmatprep.subr.mxu0 0.0
    %1416 = vmatpush1.xpose.msra.mxu0 0.0
    %1417 = vmatprep.subr.mxu0 0.0
    %1418 = vmatpush1.xpose.msra.mxu0 0.0
    %1419 = vmatprep.subr.mxu0 0.0
    %1420 = vmatpush1.xpose.msra.mxu0 0.0
    %1421 = vmatprep.subr.mxu0 0.0
    %1422 = vmatpush1.xpose.msra.mxu0 0.0
    %1423 = vmatprep.subr.mxu0 0.0
    %1424 = vmatpush1.xpose.msra.mxu0 0.0
    %1425 = vmatprep.subr.mxu0 0.0
    %1426 = vmatpush1.xpose.msra.mxu0 0.0
    %1427 = vmatprep.subr.mxu0 0.0
    %1428 = vmatpush1.xpose.msra.mxu0 0.0
    %1429 = vmatprep.subr.mxu0 0.0
    %1430 = vmatpush1.xpose.msra.mxu0 0.0
    %1431 = vmatprep.mubr.f32.mxu0 0.0
    %1432 = vmatmul.mubr.f32.gmra.mrb[0].mxu0 %v1361
    %v1433 = vpop.f32.mrb[0].mxu0
    %v1434 = vadd.f32 0.0, %v1433
    %v1435 = vpop.f32.mrb[0].mxu0
    %1436 = vmatprep.mubr.f32.mxu0 0.0
    %1437 = vmatmul.mubr.f32.gmra.mrb[0].mxu0 %v1363
    %v1438 = vpop.f32.mrb[0].mxu0
    %v1439 = vadd.f32 0.0, %v1438
    %v1440 = vpop.f32.mrb[0].mxu0
    %1441 = vdwg.mxu0
    %v1442 = vsel %vm1153, %v1434, -1e+30
    %v1443 = vsel %vm1154, %v1439, -1e+30
    %v1444 = vsel %vm1161, %v1442, -inf
    %1445 = vmax.xlane.f32.xlu0 %v1444
    %v1446 = vpop.xlane.xlu0 %1445
    %v1447 = vsel %vm1161, %v1443, -inf
    %1448 = vmax.xlane.f32.xlu0 %v1447
    %v1449 = vpop.xlane.xlu0 %1448
    %v1450 = vsub.f32 %v1442, %v1446
    %v1451 = vsub.f32 %v1443, %v1449
    %v1452 = vmul.f32 %v1450, 1.442695
    %v1453 = vpow.pop %v1452
    %v1454 = vmul.f32 %v1451, 1.442695
    %v1455 = vpow.pop %v1454
    %v1456 = vsel %vm1153, %v1453, 0.0
    %v1457 = vsel %vm1154, %v1455, 0.0
    %v1458 = vsel %vm1161, %v1456, 0.0
    %1459 = vadd.xlane.f32.xlu0 %v1458
    %v1460 = vpop.xlane.xlu0 %1459
    %v1461 = vsel %vm1161, %v1457, 0.0
    %1462 = vadd.xlane.f32.xlu0 %v1461
    %v1463 = vpop.xlane.xlu0 %1462
    %vm1464 = vcmp.gt.f32.partialorder %v1460, 0.0
    %vm1465 = vcmp.gt.f32.partialorder %v1463, 0.0
    %v1466 = vsel %vm1464, %v1460, 1.0
    %v1467 = vsel %vm1465, %v1463, 1.0
    %v1468 = vrcp.pop %v1466
    %v1469 = vrcp.pop %v1467
    %v1470 = vmul.f32 %v1456, %v1468
    %v1471 = vmul.f32 %v1457, %v1469
    %1473 = vrot.lane.b32.xlu0 %v1150, 120
    %v1474 = vpop.permute.xlu0 %1473
    %v1477 = vsel %vm1161, %v1470, 0
    %v1480 = vsel %vm1161, %v1471, 0
    %1482 = vmatprep.subr.mxu0 0.0
    %1483 = vmatpush1.msra.mxu0 %v1474
    %1484 = vmatprep.subr.mxu0 0.0
    %1485 = vmatpush1.msra.mxu0 0.0
    %1486 = vmatprep.subr.mxu0 0.0
    %1487 = vmatpush1.msra.mxu0 0.0
    %1488 = vmatprep.subr.mxu0 0.0
    %1489 = vmatpush1.msra.mxu0 0.0
    %1490 = vmatprep.subr.mxu0 0.0
    %1491 = vmatpush1.msra.mxu0 0.0
    %1492 = vmatprep.subr.mxu0 0.0
    %1493 = vmatpush1.msra.mxu0 0.0
    %1494 = vmatprep.subr.mxu0 0.0
    %1495 = vmatpush1.msra.mxu0 0.0
    %1496 = vmatprep.subr.mxu0 0.0
    %1497 = vmatpush1.msra.mxu0 0.0
    %1498 = vmatprep.subr.mxu0 0.0
    %1499 = vmatpush1.msra.mxu0 0.0
    %1500 = vmatprep.subr.mxu0 0.0
    %1501 = vmatpush1.msra.mxu0 0.0
    %1502 = vmatprep.subr.mxu0 0.0
    %1503 = vmatpush1.msra.mxu0 0.0
    %1504 = vmatprep.subr.mxu0 0.0
    %1505 = vmatpush1.msra.mxu0 0.0
    %1506 = vmatprep.subr.mxu0 0.0
    %1507 = vmatpush1.msra.mxu0 0.0
    %1508 = vmatprep.subr.mxu0 0.0
    %1509 = vmatpush1.msra.mxu0 0.0
    %1510 = vmatprep.subr.mxu0 0.0
    %1511 = vmatpush1.msra.mxu0 0.0
    %1512 = vmatprep.subr.mxu0 0.0
    %1513 = vmatpush1.msra.mxu0 0.0
    %1514 = vmatprep.subr.mxu0 0.0
    %1515 = vmatpush1.msra.mxu0 0.0
    %1516 = vmatprep.subr.mxu0 0.0
    %1517 = vmatpush1.msra.mxu0 0.0
    %1518 = vmatprep.subr.mxu0 0.0
    %1519 = vmatpush1.msra.mxu0 0.0
    %1520 = vmatprep.subr.mxu0 0.0
    %1521 = vmatpush1.msra.mxu0 0.0
    %1522 = vmatprep.subr.mxu0 0.0
    %1523 = vmatpush1.msra.mxu0 0.0
    %1524 = vmatprep.subr.mxu0 0.0
    %1525 = vmatpush1.msra.mxu0 0.0
    %1526 = vmatprep.subr.mxu0 0.0
    %1527 = vmatpush1.msra.mxu0 0.0
    %1528 = vmatprep.subr.mxu0 0.0
    %1529 = vmatpush1.msra.mxu0 0.0
    %1530 = vmatprep.subr.mxu0 0.0
    %1531 = vmatpush1.msra.mxu0 0.0
    %1532 = vmatprep.subr.mxu0 0.0
    %1533 = vmatpush1.msra.mxu0 0.0
    %1534 = vmatprep.subr.mxu0 0.0
    %1535 = vmatpush1.msra.mxu0 0.0
    %1536 = vmatprep.subr.mxu0 0.0
    %1537 = vmatpush1.msra.mxu0 0.0
    %1538 = vmatprep.subr.mxu0 0.0
    %1539 = vmatpush1.msra.mxu0 0.0
    %1540 = vmatprep.subr.mxu0 0.0
    %1541 = vmatpush1.msra.mxu0 0.0
    %1542 = vmatprep.subr.mxu0 0.0
    %1543 = vmatpush1.msra.mxu0 0.0
    %1544 = vmatprep.subr.mxu0 0.0
    %1545 = vmatpush1.msra.mxu0 0.0
    %1546 = vmatprep.mubr.f32.mxu0 0.0
    %1547 = vmatmul.mubr.f32.gmra.mrb[0].mxu0 %v1477
    %v1548 = vpop.f32.mrb[0].mxu0
    %v1549 = vadd.f32 0.0, %v1548
    %v1550 = vpop.f32.mrb[0].mxu0
    %1551 = vmatprep.mubr.f32.mxu0 0.0
    %1552 = vmatmul.mubr.f32.gmra.mrb[0].mxu0 %v1480
    %v1553 = vpop.f32.mrb[0].mxu0
    %v1554 = vadd.f32 0.0, %v1553
    %v1555 = vpop.f32.mrb[0].mxu0
    %1556 = vdwg.mxu0
    %1557 = vrot.lane.b32.xlu0 %v990, 80
    %v1558 = vpop.permute.xlu0 %1557
    %1559 = vrot.lane.b32.xlu0 %v995, 80
    %v1560 = vpop.permute.xlu0 %1559
    %1561 = vrot.lane.b32.xlu0 %v1076, 112
    %v1562 = vpop.permute.xlu0 %1561
    %v1563 = vsel %vm1161, %v1558, 0
    %v1565 = vsel %vm1161, %v1560, 0
    %v1567 = vsel %vm1161, %v1562, 0
    %1569 = vmatprep.subr.mxu0 0.0
    %1570 = vmatpush1.xpose.msra.mxu0 %v1567
    %1571 = vmatprep.subr.mxu0 0.0
    %1572 = vmatpush1.xpose.msra.mxu0 0.0
    %1573 = vmatprep.subr.mxu0 0.0
    %1574 = vmatpush1.xpose.msra.mxu0 0.0
    %1575 = vmatprep.subr.mxu0 0.0
    %1576 = vmatpush1.xpose.msra.mxu0 0.0
    %1577 = vmatprep.subr.mxu0 0.0
    %1578 = vmatpush1.xpose.msra.mxu0 0.0
    %1579 = vmatprep.subr.mxu0 0.0
    %1580 = vmatpush1.xpose.msra.mxu0 0.0
    %1581 = vmatprep.subr.mxu0 0.0
    %1582 = vmatpush1.xpose.msra.mxu0 0.0
    %1583 = vmatprep.subr.mxu0 0.0
    %1584 = vmatpush1.xpose.msra.mxu0 0.0
    %1585 = vmatprep.subr.mxu0 0.0
    %1586 = vmatpush1.xpose.msra.mxu0 0.0
    %1587 = vmatprep.subr.mxu0 0.0
    %1588 = vmatpush1.xpose.msra.mxu0 0.0
    %1589 = vmatprep.subr.mxu0 0.0
    %1590 = vmatpush1.xpose.msra.mxu0 0.0
    %1591 = vmatprep.subr.mxu0 0.0
    %1592 = vmatpush1.xpose.msra.mxu0 0.0
    %1593 = vmatprep.subr.mxu0 0.0
    %1594 = vmatpush1.xpose.msra.mxu0 0.0
    %1595 = vmatprep.subr.mxu0 0.0
    %1596 = vmatpush1.xpose.msra.mxu0 0.0
    %1597 = vmatprep.subr.mxu0 0.0
    %1598 = vmatpush1.xpose.msra.mxu0 0.0
    %1599 = vmatprep.subr.mxu0 0.0
    %1600 = vmatpush1.xpose.msra.mxu0 0.0
    %1601 = vmatprep.subr.mxu0 0.0
    %1602 = vmatpush1.xpose.msra.mxu0 0.0
    %1603 = vmatprep.subr.mxu0 0.0
    %1604 = vmatpush1.xpose.msra.mxu0 0.0
    %1605 = vmatprep.subr.mxu0 0.0
    %1606 = vmatpush1.xpose.msra.mxu0 0.0
    %1607 = vmatprep.subr.mxu0 0.0
    %1608 = vmatpush1.xpose.msra.mxu0 0.0
    %1609 = vmatprep.subr.mxu0 0.0
    %1610 = vmatpush1.xpose.msra.mxu0 0.0
    %1611 = vmatprep.subr.mxu0 0.0
    %1612 = vmatpush1.xpose.msra.mxu0 0.0
    %1613 = vmatprep.subr.mxu0 0.0
    %1614 = vmatpush1.xpose.msra.mxu0 0.0
    %1615 = vmatprep.subr.mxu0 0.0
    %1616 = vmatpush1.xpose.msra.mxu0 0.0
    %1617 = vmatprep.subr.mxu0 0.0
    %1618 = vmatpush1.xpose.msra.mxu0 0.0
    %1619 = vmatprep.subr.mxu0 0.0
    %1620 = vmatpush1.xpose.msra.mxu0 0.0
    %1621 = vmatprep.subr.mxu0 0.0
    %1622 = vmatpush1.xpose.msra.mxu0 0.0
    %1623 = vmatprep.subr.mxu0 0.0
    %1624 = vmatpush1.xpose.msra.mxu0 0.0
    %1625 = vmatprep.subr.mxu0 0.0
    %1626 = vmatpush1.xpose.msra.mxu0 0.0
    %1627 = vmatprep.subr.mxu0 0.0
    %1628 = vmatpush1.xpose.msra.mxu0 0.0
    %1629 = vmatprep.subr.mxu0 0.0
    %1630 = vmatpush1.xpose.msra.mxu0 0.0
    %1631 = vmatprep.subr.mxu0 0.0
    %1632 = vmatpush1.xpose.msra.mxu0 0.0
    %1633 = vmatprep.mubr.f32.mxu0 0.0
    %1634 = vmatmul.mubr.f32.gmra.mrb[0].mxu0 %v1563
    %v1635 = vpop.f32.mrb[0].mxu0
    %v1636 = vadd.f32 0.0, %v1635
    %v1637 = vpop.f32.mrb[0].mxu0
    %1638 = vmatprep.mubr.f32.mxu0 0.0
    %1639 = vmatmul.mubr.f32.gmra.mrb[0].mxu0 %v1565
    %v1640 = vpop.f32.mrb[0].mxu0
    %v1641 = vadd.f32 0.0, %v1640
    %v1642 = vpop.f32.mrb[0].mxu0
    %1643 = vdwg.mxu0
    %v1644 = vsel %vm1153, %v1636, -1e+30
    %v1645 = vsel %vm1154, %v1641, -1e+30
    %v1646 = vsel %vm1161, %v1644, -inf
    %1647 = vmax.xlane.f32.xlu0 %v1646
    %v1648 = vpop.xlane.xlu0 %1647
    %v1649 = vsel %vm1161, %v1645, -inf
    %1650 = vmax.xlane.f32.xlu0 %v1649
    %v1651 = vpop.xlane.xlu0 %1650
    %v1652 = vsub.f32 %v1644, %v1648
    %v1653 = vsub.f32 %v1645, %v1651
    %v1654 = vmul.f32 %v1652, 1.442695
    %v1655 = vpow.pop %v1654
    %v1656 = vmul.f32 %v1653, 1.442695
    %v1657 = vpow.pop %v1656
    %v1658 = vsel %vm1153, %v1655, 0.0
    %v1659 = vsel %vm1154, %v1657, 0.0
    %v1660 = vsel %vm1161, %v1658, 0.0
    %1661 = vadd.xlane.f32.xlu0 %v1660
    %v1662 = vpop.xlane.xlu0 %1661
    %v1663 = vsel %vm1161, %v1659, 0.0
    %1664 = vadd.xlane.f32.xlu0 %v1663
    %v1665 = vpop.xlane.xlu0 %1664
    %vm1666 = vcmp.gt.f32.partialorder %v1662, 0.0
    %vm1667 = vcmp.gt.f32.partialorder %v1665, 0.0
    %v1668 = vsel %vm1666, %v1662, 1.0
    %v1669 = vsel %vm1667, %v1665, 1.0
    %v1670 = vrcp.pop %v1668
    %v1671 = vrcp.pop %v1669
    %v1672 = vmul.f32 %v1658, %v1670
    %v1673 = vmul.f32 %v1659, %v1671
    %1674 = vrot.lane.b32.xlu0 %v1150, 112
    %v1675 = vpop.permute.xlu0 %1674
    %v1678 = vsel %vm1161, %v1672, 0
    %v1681 = vsel %vm1161, %v1673, 0
    %1683 = vmatprep.subr.mxu0 0.0
    %1684 = vmatpush1.msra.mxu0 %v1675
    %1685 = vmatprep.subr.mxu0 0.0
    %1686 = vmatpush1.msra.mxu0 0.0
    %1687 = vmatprep.subr.mxu0 0.0
    %1688 = vmatpush1.msra.mxu0 0.0
    %1689 = vmatprep.subr.mxu0 0.0
    %1690 = vmatpush1.msra.mxu0 0.0
    %1691 = vmatprep.subr.mxu0 0.0
    %1692 = vmatpush1.msra.mxu0 0.0
    %1693 = vmatprep.subr.mxu0 0.0
    %1694 = vmatpush1.msra.mxu0 0.0
    %1695 = vmatprep.subr.mxu0 0.0
    %1696 = vmatpush1.msra.mxu0 0.0
    %1697 = vmatprep.subr.mxu0 0.0
    %1698 = vmatpush1.msra.mxu0 0.0
    %1699 = vmatprep.subr.mxu0 0.0
    %1700 = vmatpush1.msra.mxu0 0.0
    %1701 = vmatprep.subr.mxu0 0.0
    %1702 = vmatpush1.msra.mxu0 0.0
    %1703 = vmatprep.subr.mxu0 0.0
    %1704 = vmatpush1.msra.mxu0 0.0
    %1705 = vmatprep.subr.mxu0 0.0
    %1706 = vmatpush1.msra.mxu0 0.0
    %1707 = vmatprep.subr.mxu0 0.0
    %1708 = vmatpush1.msra.mxu0 0.0
    %1709 = vmatprep.subr.mxu0 0.0
    %1710 = vmatpush1.msra.mxu0 0.0
    %1711 = vmatprep.subr.mxu0 0.0
    %1712 = vmatpush1.msra.mxu0 0.0
    %1713 = vmatprep.subr.mxu0 0.0
    %1714 = vmatpush1.msra.mxu0 0.0
    %1715 = vmatprep.subr.mxu0 0.0
    %1716 = vmatpush1.msra.mxu0 0.0
    %1717 = vmatprep.subr.mxu0 0.0
    %1718 = vmatpush1.msra.mxu0 0.0
    %1719 = vmatprep.subr.mxu0 0.0
    %1720 = vmatpush1.msra.mxu0 0.0
    %1721 = vmatprep.subr.mxu0 0.0
    %1722 = vmatpush1.msra.mxu0 0.0
    %1723 = vmatprep.subr.mxu0 0.0
    %1724 = vmatpush1.msra.mxu0 0.0
    %1725 = vmatprep.subr.mxu0 0.0
    %1726 = vmatpush1.msra.mxu0 0.0
    %1727 = vmatprep.subr.mxu0 0.0
    %1728 = vmatpush1.msra.mxu0 0.0
    %1729 = vmatprep.subr.mxu0 0.0
    %1730 = vmatpush1.msra.mxu0 0.0
    %1731 = vmatprep.subr.mxu0 0.0
    %1732 = vmatpush1.msra.mxu0 0.0
    %1733 = vmatprep.subr.mxu0 0.0
    %1734 = vmatpush1.msra.mxu0 0.0
    %1735 = vmatprep.subr.mxu0 0.0
    %1736 = vmatpush1.msra.mxu0 0.0
    %1737 = vmatprep.subr.mxu0 0.0
    %1738 = vmatpush1.msra.mxu0 0.0
    %1739 = vmatprep.subr.mxu0 0.0
    %1740 = vmatpush1.msra.mxu0 0.0
    %1741 = vmatprep.subr.mxu0 0.0
    %1742 = vmatpush1.msra.mxu0 0.0
    %1743 = vmatprep.subr.mxu0 0.0
    %1744 = vmatpush1.msra.mxu0 0.0
    %1745 = vmatprep.subr.mxu0 0.0
    %1746 = vmatpush1.msra.mxu0 0.0
    %1747 = vmatprep.mubr.f32.mxu0 0.0
    %1748 = vmatmul.mubr.f32.gmra.mrb[0].mxu0 %v1678
    %v1749 = vpop.f32.mrb[0].mxu0
    %v1750 = vadd.f32 0.0, %v1749
    %v1751 = vpop.f32.mrb[0].mxu0
    %1752 = vmatprep.mubr.f32.mxu0 0.0
    %1753 = vmatmul.mubr.f32.gmra.mrb[0].mxu0 %v1681
    %v1754 = vpop.f32.mrb[0].mxu0
    %v1755 = vadd.f32 0.0, %v1754
    %v1756 = vpop.f32.mrb[0].mxu0
    %1757 = vdwg.mxu0
    %1758 = vrot.lane.b32.xlu0 %v990, 72
    %v1759 = vpop.permute.xlu0 %1758
    %1760 = vrot.lane.b32.xlu0 %v995, 72
    %v1761 = vpop.permute.xlu0 %1760
    %1762 = vrot.lane.b32.xlu0 %v1076, 104
    %v1763 = vpop.permute.xlu0 %1762
    %v1764 = vsel %vm1161, %v1759, 0
    %v1766 = vsel %vm1161, %v1761, 0
    %v1768 = vsel %vm1161, %v1763, 0
    %1770 = vmatprep.subr.mxu0 0.0
    %1771 = vmatpush1.xpose.msra.mxu0 %v1768
    %1772 = vmatprep.subr.mxu0 0.0
    %1773 = vmatpush1.xpose.msra.mxu0 0.0
    %1774 = vmatprep.subr.mxu0 0.0
    %1775 = vmatpush1.xpose.msra.mxu0 0.0
    %1776 = vmatprep.subr.mxu0 0.0
    %1777 = vmatpush1.xpose.msra.mxu0 0.0
    %1778 = vmatprep.subr.mxu0 0.0
    %1779 = vmatpush1.xpose.msra.mxu0 0.0
    %1780 = vmatprep.subr.mxu0 0.0
    %1781 = vmatpush1.xpose.msra.mxu0 0.0
    %1782 = vmatprep.subr.mxu0 0.0
    %1783 = vmatpush1.xpose.msra.mxu0 0.0
    %1784 = vmatprep.subr.mxu0 0.0
    %1785 = vmatpush1.xpose.msra.mxu0 0.0
    %1786 = vmatprep.subr.mxu0 0.0
    %1787 = vmatpush1.xpose.msra.mxu0 0.0
    %1788 = vmatprep.subr.mxu0 0.0
    %1789 = vmatpush1.xpose.msra.mxu0 0.0
    %1790 = vmatprep.subr.mxu0 0.0
    %1791 = vmatpush1.xpose.msra.mxu0 0.0
    %1792 = vmatprep.subr.mxu0 0.0
    %1793 = vmatpush1.xpose.msra.mxu0 0.0
    %1794 = vmatprep.subr.mxu0 0.0
    %1795 = vmatpush1.xpose.msra.mxu0 0.0
    %1796 = vmatprep.subr.mxu0 0.0
    %1797 = vmatpush1.xpose.msra.mxu0 0.0
    %1798 = vmatprep.subr.mxu0 0.0
    %1799 = vmatpush1.xpose.msra.mxu0 0.0
    %1800 = vmatprep.subr.mxu0 0.0
    %1801 = vmatpush1.xpose.msra.mxu0 0.0
    %1802 = vmatprep.subr.mxu0 0.0
    %1803 = vmatpush1.xpose.msra.mxu0 0.0
    %1804 = vmatprep.subr.mxu0 0.0
    %1805 = vmatpush1.xpose.msra.mxu0 0.0
    %1806 = vmatprep.subr.mxu0 0.0
    %1807 = vmatpush1.xpose.msra.mxu0 0.0
    %1808 = vmatprep.subr.mxu0 0.0
    %1809 = vmatpush1.xpose.msra.mxu0 0.0
    %1810 = vmatprep.subr.mxu0 0.0
    %1811 = vmatpush1.xpose.msra.mxu0 0.0
    %1812 = vmatprep.subr.mxu0 0.0
    %1813 = vmatpush1.xpose.msra.mxu0 0.0
    %1814 = vmatprep.subr.mxu0 0.0
    %1815 = vmatpush1.xpose.msra.mxu0 0.0
    %1816 = vmatprep.subr.mxu0 0.0
    %1817 = vmatpush1.xpose.msra.mxu0 0.0
    %1818 = vmatprep.subr.mxu0 0.0
    %1819 = vmatpush1.xpose.msra.mxu0 0.0
    %1820 = vmatprep.subr.mxu0 0.0
    %1821 = vmatpush1.xpose.msra.mxu0 0.0
    %1822 = vmatprep.subr.mxu0 0.0
    %1823 = vmatpush1.xpose.msra.mxu0 0.0
    %1824 = vmatprep.subr.mxu0 0.0
    %1825 = vmatpush1.xpose.msra.mxu0 0.0
    %1826 = vmatprep.subr.mxu0 0.0
    %1827 = vmatpush1.xpose.msra.mxu0 0.0
    %1828 = vmatprep.subr.mxu0 0.0
    %1829 = vmatpush1.xpose.msra.mxu0 0.0
    %1830 = vmatprep.subr.mxu0 0.0
    %1831 = vmatpush1.xpose.msra.mxu0 0.0
    %1832 = vmatprep.subr.mxu0 0.0
    %1833 = vmatpush1.xpose.msra.mxu0 0.0
    %1834 = vmatprep.mubr.f32.mxu0 0.0
    %1835 = vmatmul.mubr.f32.gmra.mrb[0].mxu0 %v1764
    %v1836 = vpop.f32.mrb[0].mxu0
    %v1837 = vadd.f32 0.0, %v1836
    %v1838 = vpop.f32.mrb[0].mxu0
    %1839 = vmatprep.mubr.f32.mxu0 0.0
    %1840 = vmatmul.mubr.f32.gmra.mrb[0].mxu0 %v1766
    %v1841 = vpop.f32.mrb[0].mxu0
    %v1842 = vadd.f32 0.0, %v1841
    %v1843 = vpop.f32.mrb[0].mxu0
    %1844 = vdwg.mxu0
    %v1845 = vsel %vm1153, %v1837, -1e+30
    %v1846 = vsel %vm1154, %v1842, -1e+30
    %v1847 = vsel %vm1161, %v1845, -inf
    %1848 = vmax.xlane.f32.xlu0 %v1847
    %v1849 = vpop.xlane.xlu0 %1848
    %v1850 = vsel %vm1161, %v1846, -inf
    %1851 = vmax.xlane.f32.xlu0 %v1850
    %v1852 = vpop.xlane.xlu0 %1851
    %v1853 = vsub.f32 %v1845, %v1849
    %v1854 = vsub.f32 %v1846, %v1852
    %v1855 = vmul.f32 %v1853, 1.442695
    %v1856 = vpow.pop %v1855
    %v1857 = vmul.f32 %v1854, 1.442695
    %v1858 = vpow.pop %v1857
    %v1859 = vsel %vm1153, %v1856, 0.0
    %v1860 = vsel %vm1154, %v1858, 0.0
    %v1861 = vsel %vm1161, %v1859, 0.0
    %1862 = vadd.xlane.f32.xlu0 %v1861
    %v1863 = vpop.xlane.xlu0 %1862
    %v1864 = vsel %vm1161, %v1860, 0.0
    %1865 = vadd.xlane.f32.xlu0 %v1864
    %v1866 = vpop.xlane.xlu0 %1865
    %vm1867 = vcmp.gt.f32.partialorder %v1863, 0.0
    %vm1868 = vcmp.gt.f32.partialorder %v1866, 0.0
    %v1869 = vsel %vm1867, %v1863, 1.0
    %v1870 = vsel %vm1868, %v1866, 1.0
    %v1871 = vrcp.pop %v1869
    %v1872 = vrcp.pop %v1870
    %v1873 = vmul.f32 %v1859, %v1871
    %v1874 = vmul.f32 %v1860, %v1872
    %1875 = vrot.lane.b32.xlu0 %v1150, 104
    %v1876 = vpop.permute.xlu0 %1875
    %v1879 = vsel %vm1161, %v1873, 0
    %v1882 = vsel %vm1161, %v1874, 0
    %1884 = vmatprep.subr.mxu0 0.0
    %1885 = vmatpush1.msra.mxu0 %v1876
    %1886 = vmatprep.subr.mxu0 0.0
    %1887 = vmatpush1.msra.mxu0 0.0
    %1888 = vmatprep.subr.mxu0 0.0
    %1889 = vmatpush1.msra.mxu0 0.0
    %1890 = vmatprep.subr.mxu0 0.0
    %1891 = vmatpush1.msra.mxu0 0.0
    %1892 = vmatprep.subr.mxu0 0.0
    %1893 = vmatpush1.msra.mxu0 0.0
    %1894 = vmatprep.subr.mxu0 0.0
    %1895 = vmatpush1.msra.mxu0 0.0
    %1896 = vmatprep.subr.mxu0 0.0
    %1897 = vmatpush1.msra.mxu0 0.0
    %1898 = vmatprep.subr.mxu0 0.0
    %1899 = vmatpush1.msra.mxu0 0.0
    %1900 = vmatprep.subr.mxu0 0.0
    %1901 = vmatpush1.msra.mxu0 0.0
    %1902 = vmatprep.subr.mxu0 0.0
    %1903 = vmatpush1.msra.mxu0 0.0
    %1904 = vmatprep.subr.mxu0 0.0
    %1905 = vmatpush1.msra.mxu0 0.0
    %1906 = vmatprep.subr.mxu0 0.0
    %1907 = vmatpush1.msra.mxu0 0.0
    %1908 = vmatprep.subr.mxu0 0.0
    %1909 = vmatpush1.msra.mxu0 0.0
    %1910 = vmatprep.subr.mxu0 0.0
    %1911 = vmatpush1.msra.mxu0 0.0
    %1912 = vmatprep.subr.mxu0 0.0
    %1913 = vmatpush1.msra.mxu0 0.0
    %1914 = vmatprep.subr.mxu0 0.0
    %1915 = vmatpush1.msra.mxu0 0.0
    %1916 = vmatprep.subr.mxu0 0.0
    %1917 = vmatpush1.msra.mxu0 0.0
    %1918 = vmatprep.subr.mxu0 0.0
    %1919 = vmatpush1.msra.mxu0 0.0
    %1920 = vmatprep.subr.mxu0 0.0
    %1921 = vmatpush1.msra.mxu0 0.0
    %1922 = vmatprep.subr.mxu0 0.0
    %1923 = vmatpush1.msra.mxu0 0.0
    %1924 = vmatprep.subr.mxu0 0.0
    %1925 = vmatpush1.msra.mxu0 0.0
    %1926 = vmatprep.subr.mxu0 0.0
    %1927 = vmatpush1.msra.mxu0 0.0
    %1928 = vmatprep.subr.mxu0 0.0
    %1929 = vmatpush1.msra.mxu0 0.0
    %1930 = vmatprep.subr.mxu0 0.0
    %1931 = vmatpush1.msra.mxu0 0.0
    %1932 = vmatprep.subr.mxu0 0.0
    %1933 = vmatpush1.msra.mxu0 0.0
    %1934 = vmatprep.subr.mxu0 0.0
    %1935 = vmatpush1.msra.mxu0 0.0
    %1936 = vmatprep.subr.mxu0 0.0
    %1937 = vmatpush1.msra.mxu0 0.0
    %1938 = vmatprep.subr.mxu0 0.0
    %1939 = vmatpush1.msra.mxu0 0.0
    %1940 = vmatprep.subr.mxu0 0.0
    %1941 = vmatpush1.msra.mxu0 0.0
    %1942 = vmatprep.subr.mxu0 0.0
    %1943 = vmatpush1.msra.mxu0 0.0
    %1944 = vmatprep.subr.mxu0 0.0
    %1945 = vmatpush1.msra.mxu0 0.0
    %1946 = vmatprep.subr.mxu0 0.0
    %1947 = vmatpush1.msra.mxu0 0.0
    %1948 = vmatprep.mubr.f32.mxu0 0.0
    %1949 = vmatmul.mubr.f32.gmra.mrb[0].mxu0 %v1879
    %v1950 = vpop.f32.mrb[0].mxu0
    %v1951 = vadd.f32 0.0, %v1950
    %v1952 = vpop.f32.mrb[0].mxu0
    %1953 = vmatprep.mubr.f32.mxu0 0.0
    %1954 = vmatmul.mubr.f32.gmra.mrb[0].mxu0 %v1882
    %v1955 = vpop.f32.mrb[0].mxu0
    %v1956 = vadd.f32 0.0, %v1955
    %v1957 = vpop.f32.mrb[0].mxu0
    %1958 = vdwg.mxu0
    %1961 = vrot.lane.b32.xlu0 %v1549, 8
    %v1962 = vpop.permute.xlu0 %1961
    %1963 = vrot.lane.b32.xlu0 %v1554, 8
    %v1964 = vpop.permute.xlu0 %1963
    %1969 = vrot.lane.b32.xlu0 %v1750, 16
    %v1970 = vpop.permute.xlu0 %1969
    %1971 = vrot.lane.b32.xlu0 %v1755, 16
    %v1972 = vpop.permute.xlu0 %1971
    %1977 = vrot.lane.b32.xlu0 %v1951, 24
    %v1978 = vpop.permute.xlu0 %1977
    %1979 = vrot.lane.b32.xlu0 %v1956, 24
    %v1980 = vpop.permute.xlu0 %1979
    %v1983 = vsel %vm1161, %v1347, %v1962
    %v1984 = vsel %vm1161, %v1352, %v1964
    %v1985 = vsel %vm473, %v1983, %v1970
    %v1986 = vsel %vm473, %v1984, %v1972
    %v1987 = vsel %vm646, %v1985, %v1978
    %v1988 = vsel %vm646, %v1986, %v1980
    %v1989 = vld [vmem:[#allocation26] sm:$0xff]
    %v1990 = vld [vmem:[#allocation26 + $0x8] sm:$0xff]
    %v1991 = vld [vmem:[#allocation26 + $0x10] sm:$0xff]
    %v1992 = vld [vmem:[#allocation26 + $0x18] sm:$0xff]
    %v1993 = vld [vmem:[#allocation28] sm:$0xff]
    %v1994 = vld [vmem:[#allocation28 + $0x8] sm:$0xff]
    %v1995 = vld [vmem:[#allocation28 + $0x10] sm:$0xff]
    %v1996 = vld [vmem:[#allocation28 + $0x18] sm:$0xff]
    %v1997 = vsel %vm554, %v990, 0
    %v1999 = vsel %vm554, %v995, 0
    %2001 = vmatprep.subr.mxu0 0.0
    %2002 = vmatpush1.msra.mxu0 %v1989
    %2003 = vmatprep.subr.mxu0 0.0
    %2004 = vmatpush1.msra.mxu0 %v1990
    %2005 = vmatprep.subr.mxu0 0.0
    %2006 = vmatpush1.msra.mxu0 %v1991
    %2007 = vmatprep.subr.mxu0 0.0
    %2008 = vmatpush1.msra.mxu0 %v1992
    %2009 = vmatprep.subr.mxu0 0.0
    %2010 = vmatpush1.msra.mxu0 0.0
    %2011 = vmatprep.subr.mxu0 0.0
    %2012 = vmatpush1.msra.mxu0 0.0
    %2013 = vmatprep.subr.mxu0 0.0
    %2014 = vmatpush1.msra.mxu0 0.0
    %2015 = vmatprep.subr.mxu0 0.0
    %2016 = vmatpush1.msra.mxu0 0.0
    %2017 = vmatprep.subr.mxu0 0.0
    %2018 = vmatpush1.msra.mxu0 0.0
    %2019 = vmatprep.subr.mxu0 0.0
    %2020 = vmatpush1.msra.mxu0 0.0
    %2021 = vmatprep.subr.mxu0 0.0
    %2022 = vmatpush1.msra.mxu0 0.0
    %2023 = vmatprep.subr.mxu0 0.0
    %2024 = vmatpush1.msra.mxu0 0.0
    %2025 = vmatprep.subr.mxu0 0.0
    %2026 = vmatpush1.msra.mxu0 0.0
    %2027 = vmatprep.subr.mxu0 0.0
    %2028 = vmatpush1.msra.mxu0 0.0
    %2029 = vmatprep.subr.mxu0 0.0
    %2030 = vmatpush1.msra.mxu0 0.0
    %2031 = vmatprep.subr.mxu0 0.0
    %2032 = vmatpush1.msra.mxu0 0.0
    %2033 = vmatprep.subr.mxu0 0.0
    %2034 = vmatpush1.msra.mxu0 0.0
    %2035 = vmatprep.subr.mxu0 0.0
    %2036 = vmatpush1.msra.mxu0 0.0
    %2037 = vmatprep.subr.mxu0 0.0
    %2038 = vmatpush1.msra.mxu0 0.0
    %2039 = vmatprep.subr.mxu0 0.0
    %2040 = vmatpush1.msra.mxu0 0.0
    %2041 = vmatprep.subr.mxu0 0.0
    %2042 = vmatpush1.msra.mxu0 0.0
    %2043 = vmatprep.subr.mxu0 0.0
    %2044 = vmatpush1.msra.mxu0 0.0
    %2045 = vmatprep.subr.mxu0 0.0
    %2046 = vmatpush1.msra.mxu0 0.0
    %2047 = vmatprep.subr.mxu0 0.0
    %2048 = vmatpush1.msra.mxu0 0.0
    %2049 = vmatprep.subr.mxu0 0.0
    %2050 = vmatpush1.msra.mxu0 0.0
    %2051 = vmatprep.subr.mxu0 0.0
    %2052 = vmatpush1.msra.mxu0 0.0
    %2053 = vmatprep.subr.mxu0 0.0
    %2054 = vmatpush1.msra.mxu0 0.0
    %2055 = vmatprep.subr.mxu0 0.0
    %2056 = vmatpush1.msra.mxu0 0.0
    %2057 = vmatprep.subr.mxu0 0.0
    %2058 = vmatpush1.msra.mxu0 0.0
    %2059 = vmatprep.subr.mxu0 0.0
    %2060 = vmatpush1.msra.mxu0 0.0
    %2061 = vmatprep.subr.mxu0 0.0
    %2062 = vmatpush1.msra.mxu0 0.0
    %2063 = vmatprep.subr.mxu0 0.0
    %2064 = vmatpush1.msra.mxu0 0.0
    %2065 = vmatprep.mubr.f32.mxu0 0.0
    %2066 = vmatmul.mubr.f32.gmra.mrb[0].mxu0 %v1997
    %v2067 = vpop.f32.mrb[0].mxu0
    %v2068 = vadd.f32 0.0, %v2067
    %v2069 = vpop.f32.mrb[0].mxu0
    %2070 = vmatprep.mubr.f32.mxu0 0.0
    %2071 = vmatmul.mubr.f32.gmra.mrb[0].mxu0 %v1999
    %v2072 = vpop.f32.mrb[0].mxu0
    %v2073 = vadd.f32 0.0, %v2072
    %v2074 = vpop.f32.mrb[0].mxu0
    %2075 = vdwg.mxu0
    %2076 = vrot.lane.b32.xlu0 %v990, 64
    %v2077 = vpop.permute.xlu0 %2076
    %2078 = vrot.lane.b32.xlu0 %v995, 64
    %v2079 = vpop.permute.xlu0 %2078
    %v2080 = vsel %vm554, %v2077, 0
    %v2082 = vsel %vm554, %v2079, 0
    %2084 = vmatprep.subr.mxu0 0.0
    %2085 = vmatpush1.msra.mxu0 %v1993
    %2086 = vmatprep.subr.mxu0 0.0
    %2087 = vmatpush1.msra.mxu0 %v1994
    %2088 = vmatprep.subr.mxu0 0.0
    %2089 = vmatpush1.msra.mxu0 %v1995
    %2090 = vmatprep.subr.mxu0 0.0
    %2091 = vmatpush1.msra.mxu0 %v1996
    %2092 = vmatprep.subr.mxu0 0.0
    %2093 = vmatpush1.msra.mxu0 0.0
    %2094 = vmatprep.subr.mxu0 0.0
    %2095 = vmatpush1.msra.mxu0 0.0
    %2096 = vmatprep.subr.mxu0 0.0
    %2097 = vmatpush1.msra.mxu0 0.0
    %2098 = vmatprep.subr.mxu0 0.0
    %2099 = vmatpush1.msra.mxu0 0.0
    %2100 = vmatprep.subr.mxu0 0.0
    %2101 = vmatpush1.msra.mxu0 0.0
    %2102 = vmatprep.subr.mxu0 0.0
    %2103 = vmatpush1.msra.mxu0 0.0
    %2104 = vmatprep.subr.mxu0 0.0
    %2105 = vmatpush1.msra.mxu0 0.0
    %2106 = vmatprep.subr.mxu0 0.0
    %2107 = vmatpush1.msra.mxu0 0.0
    %2108 = vmatprep.subr.mxu0 0.0
    %2109 = vmatpush1.msra.mxu0 0.0
    %2110 = vmatprep.subr.mxu0 0.0
    %2111 = vmatpush1.msra.mxu0 0.0
    %2112 = vmatprep.subr.mxu0 0.0
    %2113 = vmatpush1.msra.mxu0 0.0
    %2114 = vmatprep.subr.mxu0 0.0
    %2115 = vmatpush1.msra.mxu0 0.0
    %2116 = vmatprep.subr.mxu0 0.0
    %2117 = vmatpush1.msra.mxu0 0.0
    %2118 = vmatprep.subr.mxu0 0.0
    %2119 = vmatpush1.msra.mxu0 0.0
    %2120 = vmatprep.subr.mxu0 0.0
    %2121 = vmatpush1.msra.mxu0 0.0
    %2122 = vmatprep.subr.mxu0 0.0
    %2123 = vmatpush1.msra.mxu0 0.0
    %2124 = vmatprep.subr.mxu0 0.0
    %2125 = vmatpush1.msra.mxu0 0.0
    %2126 = vmatprep.subr.mxu0 0.0
    %2127 = vmatpush1.msra.mxu0 0.0
    %2128 = vmatprep.subr.mxu0 0.0
    %2129 = vmatpush1.msra.mxu0 0.0
    %2130 = vmatprep.subr.mxu0 0.0
    %2131 = vmatpush1.msra.mxu0 0.0
    %2132 = vmatprep.subr.mxu0 0.0
    %2133 = vmatpush1.msra.mxu0 0.0
    %2134 = vmatprep.subr.mxu0 0.0
    %2135 = vmatpush1.msra.mxu0 0.0
    %2136 = vmatprep.subr.mxu0 0.0
    %2137 = vmatpush1.msra.mxu0 0.0
    %2138 = vmatprep.subr.mxu0 0.0
    %2139 = vmatpush1.msra.mxu0 0.0
    %2140 = vmatprep.subr.mxu0 0.0
    %2141 = vmatpush1.msra.mxu0 0.0
    %2142 = vmatprep.subr.mxu0 0.0
    %2143 = vmatpush1.msra.mxu0 0.0
    %2144 = vmatprep.subr.mxu0 0.0
    %2145 = vmatpush1.msra.mxu0 0.0
    %2146 = vmatprep.subr.mxu0 0.0
    %2147 = vmatpush1.msra.mxu0 0.0
    %2148 = vmatprep.mubr.f32.mxu0 0.0
    %2149 = vmatmul.mubr.f32.gmra.mrb[0].mxu0 %v2080
    %v2150 = vpop.f32.mrb[0].mxu0
    %v2151 = vadd.f32 0.0, %v2150
    %v2152 = vpop.f32.mrb[0].mxu0
    %2153 = vmatprep.mubr.f32.mxu0 0.0
    %2154 = vmatmul.mubr.f32.gmra.mrb[0].mxu0 %v2082
    %v2155 = vpop.f32.mrb[0].mxu0
    %v2156 = vadd.f32 0.0, %v2155
    %v2157 = vpop.f32.mrb[0].mxu0
    %2158 = vdwg.mxu0
    %vm2159 = vcmp.gt.f32.partialorder %v821, 0.0
    %2160 = vrot.lane.b32.xlu0 %v903, 96
    %v2161 = vpop.permute.xlu0 %2160
    %v2162 = vsel %vm1161, %v2161, 0
    %v2165 = vsel %vm1161, %v2068, 0
    %v2168 = vsel %vm1161, %v2073, 0
    %2170 = vmatprep.subr.mxu0 0.0
    %2171 = vmatpush1.xpose.msra.mxu0 %v2165
    %2172 = vmatprep.subr.mxu0 0.0
    %2173 = vmatpush1.xpose.msra.mxu0 %v2168
    %2174 = vmatprep.subr.mxu0 0.0
    %2175 = vmatpush1.xpose.msra.mxu0 0.0
    %2176 = vmatprep.subr.mxu0 0.0
    %2177 = vmatpush1.xpose.msra.mxu0 0.0
    %2178 = vmatprep.subr.mxu0 0.0
    %2179 = vmatpush1.xpose.msra.mxu0 0.0
    %2180 = vmatprep.subr.mxu0 0.0
    %2181 = vmatpush1.xpose.msra.mxu0 0.0
    %2182 = vmatprep.subr.mxu0 0.0
    %2183 = vmatpush1.xpose.msra.mxu0 0.0
    %2184 = vmatprep.subr.mxu0 0.0
    %2185 = vmatpush1.xpose.msra.mxu0 0.0
    %2186 = vmatprep.subr.mxu0 0.0
    %2187 = vmatpush1.xpose.msra.mxu0 0.0
    %2188 = vmatprep.subr.mxu0 0.0
    %2189 = vmatpush1.xpose.msra.mxu0 0.0
    %2190 = vmatprep.subr.mxu0 0.0
    %2191 = vmatpush1.xpose.msra.mxu0 0.0
    %2192 = vmatprep.subr.mxu0 0.0
    %2193 = vmatpush1.xpose.msra.mxu0 0.0
    %2194 = vmatprep.subr.mxu0 0.0
    %2195 = vmatpush1.xpose.msra.mxu0 0.0
    %2196 = vmatprep.subr.mxu0 0.0
    %2197 = vmatpush1.xpose.msra.mxu0 0.0
    %2198 = vmatprep.subr.mxu0 0.0
    %2199 = vmatpush1.xpose.msra.mxu0 0.0
    %2200 = vmatprep.subr.mxu0 0.0
    %2201 = vmatpush1.xpose.msra.mxu0 0.0
    %2202 = vmatprep.subr.mxu0 0.0
    %2203 = vmatpush1.xpose.msra.mxu0 0.0
    %2204 = vmatprep.subr.mxu0 0.0
    %2205 = vmatpush1.xpose.msra.mxu0 0.0
    %2206 = vmatprep.subr.mxu0 0.0
    %2207 = vmatpush1.xpose.msra.mxu0 0.0
    %2208 = vmatprep.subr.mxu0 0.0
    %2209 = vmatpush1.xpose.msra.mxu0 0.0
    %2210 = vmatprep.subr.mxu0 0.0
    %2211 = vmatpush1.xpose.msra.mxu0 0.0
    %2212 = vmatprep.subr.mxu0 0.0
    %2213 = vmatpush1.xpose.msra.mxu0 0.0
    %2214 = vmatprep.subr.mxu0 0.0
    %2215 = vmatpush1.xpose.msra.mxu0 0.0
    %2216 = vmatprep.subr.mxu0 0.0
    %2217 = vmatpush1.xpose.msra.mxu0 0.0
    %2218 = vmatprep.subr.mxu0 0.0
    %2219 = vmatpush1.xpose.msra.mxu0 0.0
    %2220 = vmatprep.subr.mxu0 0.0
    %2221 = vmatpush1.xpose.msra.mxu0 0.0
    %2222 = vmatprep.subr.mxu0 0.0
    %2223 = vmatpush1.xpose.msra.mxu0 0.0
    %2224 = vmatprep.subr.mxu0 0.0
    %2225 = vmatpush1.xpose.msra.mxu0 0.0
    %2226 = vmatprep.subr.mxu0 0.0
    %2227 = vmatpush1.xpose.msra.mxu0 0.0
    %2228 = vmatprep.subr.mxu0 0.0
    %2229 = vmatpush1.xpose.msra.mxu0 0.0
    %2230 = vmatprep.subr.mxu0 0.0
    %2231 = vmatpush1.xpose.msra.mxu0 0.0
    %2232 = vmatprep.subr.mxu0 0.0
    %2233 = vmatpush1.xpose.msra.mxu0 0.0
    %2234 = vmatprep.mubr.f32.mxu0 0.0
    %2235 = vmatmul.mubr.f32.gmra.mrb[0].mxu0 %v2162
    %v2236 = vpop.f32.mrb[0].mxu0
    %v2237 = vadd.f32 0.0, %v2236
    %v2238 = vpop.f32.mrb[0].mxu0
    %2239 = vdwg.mxu0
    %v2240 = vsel %vm2159, %v2237, -1e+30
    %v2241 = vsel %vm473, %v2240, -inf
    %2242 = vmax.xlane.f32.xlu0 %v2241
    %v2243 = vpop.xlane.xlu0 %2242
    %v2244 = vsub.f32 %v2240, %v2243
    %v2245 = vmul.f32 %v2244, 1.442695
    %v2246 = vpow.pop %v2245
    %v2247 = vsel %vm2159, %v2246, 0.0
    %v2248 = vsel %vm473, %v2247, 0.0
    %2249 = vadd.xlane.f32.xlu0 %v2248
    %v2250 = vpop.xlane.xlu0 %2249
    %vm2251 = vcmp.gt.f32.partialorder %v2250, 0.0
    %v2252 = vsel %vm2251, %v2250, 1.0
    %v2253 = vrcp.pop %v2252
    %v2254 = vmul.f32 %v2247, %v2253
    %v2256 = vsel %vm473, %v2254, 0
    %2258 = vmatprep.subr.mxu0 0.0
    %2259 = vmatpush1.msra.mxu0 %v2151
    %2260 = vmatprep.subr.mxu0 0.0
    %2261 = vmatpush1.msra.mxu0 %v2156
    %2262 = vmatprep.subr.mxu0 0.0
    %2263 = vmatpush1.msra.mxu0 0.0
    %2264 = vmatprep.subr.mxu0 0.0
    %2265 = vmatpush1.msra.mxu0 0.0
    %2266 = vmatprep.subr.mxu0 0.0
    %2267 = vmatpush1.msra.mxu0 0.0
    %2268 = vmatprep.subr.mxu0 0.0
    %2269 = vmatpush1.msra.mxu0 0.0
    %2270 = vmatprep.subr.mxu0 0.0
    %2271 = vmatpush1.msra.mxu0 0.0
    %2272 = vmatprep.subr.mxu0 0.0
    %2273 = vmatpush1.msra.mxu0 0.0
    %2274 = vmatprep.subr.mxu0 0.0
    %2275 = vmatpush1.msra.mxu0 0.0
    %2276 = vmatprep.subr.mxu0 0.0
    %2277 = vmatpush1.msra.mxu0 0.0
    %2278 = vmatprep.subr.mxu0 0.0
    %2279 = vmatpush1.msra.mxu0 0.0
    %2280 = vmatprep.subr.mxu0 0.0
    %2281 = vmatpush1.msra.mxu0 0.0
    %2282 = vmatprep.subr.mxu0 0.0
    %2283 = vmatpush1.msra.mxu0 0.0
    %2284 = vmatprep.subr.mxu0 0.0
    %2285 = vmatpush1.msra.mxu0 0.0
    %2286 = vmatprep.subr.mxu0 0.0
    %2287 = vmatpush1.msra.mxu0 0.0
    %2288 = vmatprep.subr.mxu0 0.0
    %2289 = vmatpush1.msra.mxu0 0.0
    %2290 = vmatprep.subr.mxu0 0.0
    %2291 = vmatpush1.msra.mxu0 0.0
    %2292 = vmatprep.subr.mxu0 0.0
    %2293 = vmatpush1.msra.mxu0 0.0
    %2294 = vmatprep.subr.mxu0 0.0
    %2295 = vmatpush1.msra.mxu0 0.0
    %2296 = vmatprep.subr.mxu0 0.0
    %2297 = vmatpush1.msra.mxu0 0.0
    %2298 = vmatprep.subr.mxu0 0.0
    %2299 = vmatpush1.msra.mxu0 0.0
    %2300 = vmatprep.subr.mxu0 0.0
    %2301 = vmatpush1.msra.mxu0 0.0
    %2302 = vmatprep.subr.mxu0 0.0
    %2303 = vmatpush1.msra.mxu0 0.0
    %2304 = vmatprep.subr.mxu0 0.0
    %2305 = vmatpush1.msra.mxu0 0.0
    %2306 = vmatprep.subr.mxu0 0.0
    %2307 = vmatpush1.msra.mxu0 0.0
    %2308 = vmatprep.subr.mxu0 0.0
    %2309 = vmatpush1.msra.mxu0 0.0
    %2310 = vmatprep.subr.mxu0 0.0
    %2311 = vmatpush1.msra.mxu0 0.0
    %2312 = vmatprep.subr.mxu0 0.0
    %2313 = vmatpush1.msra.mxu0 0.0
    %2314 = vmatprep.subr.mxu0 0.0
    %2315 = vmatpush1.msra.mxu0 0.0
    %2316 = vmatprep.subr.mxu0 0.0
    %2317 = vmatpush1.msra.mxu0 0.0
    %2318 = vmatprep.subr.mxu0 0.0
    %2319 = vmatpush1.msra.mxu0 0.0
    %2320 = vmatprep.subr.mxu0 0.0
    %2321 = vmatpush1.msra.mxu0 0.0
    %2322 = vmatprep.mubr.f32.mxu0 0.0
    %2323 = vmatmul.mubr.f32.gmra.mrb[0].mxu0 %v2256
    %v2324 = vpop.f32.mrb[0].mxu0
    %v2325 = vadd.f32 0.0, %v2324
    %v2326 = vpop.f32.mrb[0].mxu0
    %2327 = vdwg.mxu0
    %2328 = vrot.lane.b32.xlu0 %v903, 88
    %v2329 = vpop.permute.xlu0 %2328
    %2330 = vrot.lane.b32.xlu0 %v2068, 120
    %v2331 = vpop.permute.xlu0 %2330
    %2332 = vrot.lane.b32.xlu0 %v2073, 120
    %v2333 = vpop.permute.xlu0 %2332
    %v2334 = vsel %vm1161, %v2329, 0
    %v2336 = vsel %vm1161, %v2331, 0
    %v2338 = vsel %vm1161, %v2333, 0
    %2340 = vmatprep.subr.mxu0 0.0
    %2341 = vmatpush1.xpose.msra.mxu0 %v2336
    %2342 = vmatprep.subr.mxu0 0.0
    %2343 = vmatpush1.xpose.msra.mxu0 %v2338
    %2344 = vmatprep.subr.mxu0 0.0
    %2345 = vmatpush1.xpose.msra.mxu0 0.0
    %2346 = vmatprep.subr.mxu0 0.0
    %2347 = vmatpush1.xpose.msra.mxu0 0.0
    %2348 = vmatprep.subr.mxu0 0.0
    %2349 = vmatpush1.xpose.msra.mxu0 0.0
    %2350 = vmatprep.subr.mxu0 0.0
    %2351 = vmatpush1.xpose.msra.mxu0 0.0
    %2352 = vmatprep.subr.mxu0 0.0
    %2353 = vmatpush1.xpose.msra.mxu0 0.0
    %2354 = vmatprep.subr.mxu0 0.0
    %2355 = vmatpush1.xpose.msra.mxu0 0.0
    %2356 = vmatprep.subr.mxu0 0.0
    %2357 = vmatpush1.xpose.msra.mxu0 0.0
    %2358 = vmatprep.subr.mxu0 0.0
    %2359 = vmatpush1.xpose.msra.mxu0 0.0
    %2360 = vmatprep.subr.mxu0 0.0
    %2361 = vmatpush1.xpose.msra.mxu0 0.0
    %2362 = vmatprep.subr.mxu0 0.0
    %2363 = vmatpush1.xpose.msra.mxu0 0.0
    %2364 = vmatprep.subr.mxu0 0.0
    %2365 = vmatpush1.xpose.msra.mxu0 0.0
    %2366 = vmatprep.subr.mxu0 0.0
    %2367 = vmatpush1.xpose.msra.mxu0 0.0
    %2368 = vmatprep.subr.mxu0 0.0
    %2369 = vmatpush1.xpose.msra.mxu0 0.0
    %2370 = vmatprep.subr.mxu0 0.0
    %2371 = vmatpush1.xpose.msra.mxu0 0.0
    %2372 = vmatprep.subr.mxu0 0.0
    %2373 = vmatpush1.xpose.msra.mxu0 0.0
    %2374 = vmatprep.subr.mxu0 0.0
    %2375 = vmatpush1.xpose.msra.mxu0 0.0
    %2376 = vmatprep.subr.mxu0 0.0
    %2377 = vmatpush1.xpose.msra.mxu0 0.0
    %2378 = vmatprep.subr.mxu0 0.0
    %2379 = vmatpush1.xpose.msra.mxu0 0.0
    %2380 = vmatprep.subr.mxu0 0.0
    %2381 = vmatpush1.xpose.msra.mxu0 0.0
    %2382 = vmatprep.subr.mxu0 0.0
    %2383 = vmatpush1.xpose.msra.mxu0 0.0
    %2384 = vmatprep.subr.mxu0 0.0
    %2385 = vmatpush1.xpose.msra.mxu0 0.0
    %2386 = vmatprep.subr.mxu0 0.0
    %2387 = vmatpush1.xpose.msra.mxu0 0.0
    %2388 = vmatprep.subr.mxu0 0.0
    %2389 = vmatpush1.xpose.msra.mxu0 0.0
    %2390 = vmatprep.subr.mxu0 0.0
    %2391 = vmatpush1.xpose.msra.mxu0 0.0
    %2392 = vmatprep.subr.mxu0 0.0
    %2393 = vmatpush1.xpose.msra.mxu0 0.0
    %2394 = vmatprep.subr.mxu0 0.0
    %2395 = vmatpush1.xpose.msra.mxu0 0.0
    %2396 = vmatprep.subr.mxu0 0.0
    %2397 = vmatpush1.xpose.msra.mxu0 0.0
    %2398 = vmatprep.subr.mxu0 0.0
    %2399 = vmatpush1.xpose.msra.mxu0 0.0
    %2400 = vmatprep.subr.mxu0 0.0
    %2401 = vmatpush1.xpose.msra.mxu0 0.0
    %2402 = vmatprep.subr.mxu0 0.0
    %2403 = vmatpush1.xpose.msra.mxu0 0.0
    %2404 = vmatprep.mubr.f32.mxu0 0.0
    %2405 = vmatmul.mubr.f32.gmra.mrb[0].mxu0 %v2334
    %v2406 = vpop.f32.mrb[0].mxu0
    %v2407 = vadd.f32 0.0, %v2406
    %v2408 = vpop.f32.mrb[0].mxu0
    %2409 = vdwg.mxu0
    %v2410 = vsel %vm2159, %v2407, -1e+30
    %v2411 = vsel %vm473, %v2410, -inf
    %2412 = vmax.xlane.f32.xlu0 %v2411
    %v2413 = vpop.xlane.xlu0 %2412
    %v2414 = vsub.f32 %v2410, %v2413
    %v2415 = vmul.f32 %v2414, 1.442695
    %v2416 = vpow.pop %v2415
    %v2417 = vsel %vm2159, %v2416, 0.0
    %v2418 = vsel %vm473, %v2417, 0.0
    %2419 = vadd.xlane.f32.xlu0 %v2418
    %v2420 = vpop.xlane.xlu0 %2419
    %vm2421 = vcmp.gt.f32.partialorder %v2420, 0.0
    %v2422 = vsel %vm2421, %v2420, 1.0
    %v2423 = vrcp.pop %v2422
    %v2424 = vmul.f32 %v2417, %v2423
    %2427 = vrot.lane.b32.xlu0 %v2151, 120
    %v2428 = vpop.permute.xlu0 %2427
    %2429 = vrot.lane.b32.xlu0 %v2156, 120
    %v2430 = vpop.permute.xlu0 %2429
    %v2434 = vsel %vm473, %v2424, 0
    %2436 = vmatprep.subr.mxu0 0.0
    %2437 = vmatpush1.msra.mxu0 %v2428
    %2438 = vmatprep.subr.mxu0 0.0
    %2439 = vmatpush1.msra.mxu0 %v2430
    %2440 = vmatprep.subr.mxu0 0.0
    %2441 = vmatpush1.msra.mxu0 0.0
    %2442 = vmatprep.subr.mxu0 0.0
    %2443 = vmatpush1.msra.mxu0 0.0
    %2444 = vmatprep.subr.mxu0 0.0
    %2445 = vmatpush1.msra.mxu0 0.0
    %2446 = vmatprep.subr.mxu0 0.0
    %2447 = vmatpush1.msra.mxu0 0.0
    %2448 = vmatprep.subr.mxu0 0.0
    %2449 = vmatpush1.msra.mxu0 0.0
    %2450 = vmatprep.subr.mxu0 0.0
    %2451 = vmatpush1.msra.mxu0 0.0
    %2452 = vmatprep.subr.mxu0 0.0
    %2453 = vmatpush1.msra.mxu0 0.0
    %2454 = vmatprep.subr.mxu0 0.0
    %2455 = vmatpush1.msra.mxu0 0.0
    %2456 = vmatprep.subr.mxu0 0.0
    %2457 = vmatpush1.msra.mxu0 0.0
    %2458 = vmatprep.subr.mxu0 0.0
    %2459 = vmatpush1.msra.mxu0 0.0
    %2460 = vmatprep.subr.mxu0 0.0
    %2461 = vmatpush1.msra.mxu0 0.0
    %2462 = vmatprep.subr.mxu0 0.0
    %2463 = vmatpush1.msra.mxu0 0.0
    %2464 = vmatprep.subr.mxu0 0.0
    %2465 = vmatpush1.msra.mxu0 0.0
    %2466 = vmatprep.subr.mxu0 0.0
    %2467 = vmatpush1.msra.mxu0 0.0
    %2468 = vmatprep.subr.mxu0 0.0
    %2469 = vmatpush1.msra.mxu0 0.0
    %2470 = vmatprep.subr.mxu0 0.0
    %2471 = vmatpush1.msra.mxu0 0.0
    %2472 = vmatprep.subr.mxu0 0.0
    %2473 = vmatpush1.msra.mxu0 0.0
    %2474 = vmatprep.subr.mxu0 0.0
    %2475 = vmatpush1.msra.mxu0 0.0
    %2476 = vmatprep.subr.mxu0 0.0
    %2477 = vmatpush1.msra.mxu0 0.0
    %2478 = vmatprep.subr.mxu0 0.0
    %2479 = vmatpush1.msra.mxu0 0.0
    %2480 = vmatprep.subr.mxu0 0.0
    %2481 = vmatpush1.msra.mxu0 0.0
    %2482 = vmatprep.subr.mxu0 0.0
    %2483 = vmatpush1.msra.mxu0 0.0
    %2484 = vmatprep.subr.mxu0 0.0
    %2485 = vmatpush1.msra.mxu0 0.0
    %2486 = vmatprep.subr.mxu0 0.0
    %2487 = vmatpush1.msra.mxu0 0.0
    %2488 = vmatprep.subr.mxu0 0.0
    %2489 = vmatpush1.msra.mxu0 0.0
    %2490 = vmatprep.subr.mxu0 0.0
    %2491 = vmatpush1.msra.mxu0 0.0
    %2492 = vmatprep.subr.mxu0 0.0
    %2493 = vmatpush1.msra.mxu0 0.0
    %2494 = vmatprep.subr.mxu0 0.0
    %2495 = vmatpush1.msra.mxu0 0.0
    %2496 = vmatprep.subr.mxu0 0.0
    %2497 = vmatpush1.msra.mxu0 0.0
    %2498 = vmatprep.subr.mxu0 0.0
    %2499 = vmatpush1.msra.mxu0 0.0
    %2500 = vmatprep.mubr.f32.mxu0 0.0
    %2501 = vmatmul.mubr.f32.gmra.mrb[0].mxu0 %v2434
    %v2502 = vpop.f32.mrb[0].mxu0
    %v2503 = vadd.f32 0.0, %v2502
    %v2504 = vpop.f32.mrb[0].mxu0
    %2505 = vdwg.mxu0
    %2506 = vrot.lane.b32.xlu0 %v903, 80
    %v2507 = vpop.permute.xlu0 %2506
    %2508 = vrot.lane.b32.xlu0 %v2068, 112
    %v2509 = vpop.permute.xlu0 %2508
    %2510 = vrot.lane.b32.xlu0 %v2073, 112
    %v2511 = vpop.permute.xlu0 %2510
    %v2512 = vsel %vm1161, %v2507, 0
    %v2514 = vsel %vm1161, %v2509, 0
    %v2516 = vsel %vm1161, %v2511, 0
    %2518 = vmatprep.subr.mxu0 0.0
    %2519 = vmatpush1.xpose.msra.mxu0 %v2514
    %2520 = vmatprep.subr.mxu0 0.0
    %2521 = vmatpush1.xpose.msra.mxu0 %v2516
    %2522 = vmatprep.subr.mxu0 0.0
    %2523 = vmatpush1.xpose.msra.mxu0 0.0
    %2524 = vmatprep.subr.mxu0 0.0
    %2525 = vmatpush1.xpose.msra.mxu0 0.0
    %2526 = vmatprep.subr.mxu0 0.0
    %2527 = vmatpush1.xpose.msra.mxu0 0.0
    %2528 = vmatprep.subr.mxu0 0.0
    %2529 = vmatpush1.xpose.msra.mxu0 0.0
    %2530 = vmatprep.subr.mxu0 0.0
    %2531 = vmatpush1.xpose.msra.mxu0 0.0
    %2532 = vmatprep.subr.mxu0 0.0
    %2533 = vmatpush1.xpose.msra.mxu0 0.0
    %2534 = vmatprep.subr.mxu0 0.0
    %2535 = vmatpush1.xpose.msra.mxu0 0.0
    %2536 = vmatprep.subr.mxu0 0.0
    %2537 = vmatpush1.xpose.msra.mxu0 0.0
    %2538 = vmatprep.subr.mxu0 0.0
    %2539 = vmatpush1.xpose.msra.mxu0 0.0
    %2540 = vmatprep.subr.mxu0 0.0
    %2541 = vmatpush1.xpose.msra.mxu0 0.0
    %2542 = vmatprep.subr.mxu0 0.0
    %2543 = vmatpush1.xpose.msra.mxu0 0.0
    %2544 = vmatprep.subr.mxu0 0.0
    %2545 = vmatpush1.xpose.msra.mxu0 0.0
    %2546 = vmatprep.subr.mxu0 0.0
    %2547 = vmatpush1.xpose.msra.mxu0 0.0
    %2548 = vmatprep.subr.mxu0 0.0
    %2549 = vmatpush1.xpose.msra.mxu0 0.0
    %2550 = vmatprep.subr.mxu0 0.0
    %2551 = vmatpush1.xpose.msra.mxu0 0.0
    %2552 = vmatprep.subr.mxu0 0.0
    %2553 = vmatpush1.xpose.msra.mxu0 0.0
    %2554 = vmatprep.subr.mxu0 0.0
    %2555 = vmatpush1.xpose.msra.mxu0 0.0
    %2556 = vmatprep.subr.mxu0 0.0
    %2557 = vmatpush1.xpose.msra.mxu0 0.0
    %2558 = vmatprep.subr.mxu0 0.0
    %2559 = vmatpush1.xpose.msra.mxu0 0.0
    %2560 = vmatprep.subr.mxu0 0.0
    %2561 = vmatpush1.xpose.msra.mxu0 0.0
    %2562 = vmatprep.subr.mxu0 0.0
    %2563 = vmatpush1.xpose.msra.mxu0 0.0
    %2564 = vmatprep.subr.mxu0 0.0
    %2565 = vmatpush1.xpose.msra.mxu0 0.0
    %2566 = vmatprep.subr.mxu0 0.0
    %2567 = vmatpush1.xpose.msra.mxu0 0.0
    %2568 = vmatprep.subr.mxu0 0.0
    %2569 = vmatpush1.xpose.msra.mxu0 0.0
    %2570 = vmatprep.subr.mxu0 0.0
    %2571 = vmatpush1.xpose.msra.mxu0 0.0
    %2572 = vmatprep.subr.mxu0 0.0
    %2573 = vmatpush1.xpose.msra.mxu0 0.0
    %2574 = vmatprep.subr.mxu0 0.0
    %2575 = vmatpush1.xpose.msra.mxu0 0.0
    %2576 = vmatprep.subr.mxu0 0.0
    %2577 = vmatpush1.xpose.msra.mxu0 0.0
    %2578 = vmatprep.subr.mxu0 0.0
    %2579 = vmatpush1.xpose.msra.mxu0 0.0
    %2580 = vmatprep.subr.mxu0 0.0
    %2581 = vmatpush1.xpose.msra.mxu0 0.0
    %2582 = vmatprep.mubr.f32.mxu0 0.0
    %2583 = vmatmul.mubr.f32.gmra.mrb[0].mxu0 %v2512
    %v2584 = vpop.f32.mrb[0].mxu0
    %v2585 = vadd.f32 0.0, %v2584
    %v2586 = vpop.f32.mrb[0].mxu0
    %2587 = vdwg.mxu0
    %v2588 = vsel %vm2159, %v2585, -1e+30
    %v2589 = vsel %vm473, %v2588, -inf
    %2590 = vmax.xlane.f32.xlu0 %v2589
    %v2591 = vpop.xlane.xlu0 %2590
    %v2592 = vsub.f32 %v2588, %v2591
    %v2593 = vmul.f32 %v2592, 1.442695
    %v2594 = vpow.pop %v2593
    %v2595 = vsel %vm2159, %v2594, 0.0
    %v2596 = vsel %vm473, %v2595, 0.0
    %2597 = vadd.xlane.f32.xlu0 %v2596
    %v2598 = vpop.xlane.xlu0 %2597
    %vm2599 = vcmp.gt.f32.partialorder %v2598, 0.0
    %v2600 = vsel %vm2599, %v2598, 1.0
    %v2601 = vrcp.pop %v2600
    %v2602 = vmul.f32 %v2595, %v2601
    %2603 = vrot.lane.b32.xlu0 %v2151, 112
    %v2604 = vpop.permute.xlu0 %2603
    %2605 = vrot.lane.b32.xlu0 %v2156, 112
    %v2606 = vpop.permute.xlu0 %2605
    %v2610 = vsel %vm473, %v2602, 0
    %2612 = vmatprep.subr.mxu0 0.0
    %2613 = vmatpush1.msra.mxu0 %v2604
    %2614 = vmatprep.subr.mxu0 0.0
    %2615 = vmatpush1.msra.mxu0 %v2606
    %2616 = vmatprep.subr.mxu0 0.0
    %2617 = vmatpush1.msra.mxu0 0.0
    %2618 = vmatprep.subr.mxu0 0.0
    %2619 = vmatpush1.msra.mxu0 0.0
    %2620 = vmatprep.subr.mxu0 0.0
    %2621 = vmatpush1.msra.mxu0 0.0
    %2622 = vmatprep.subr.mxu0 0.0
    %2623 = vmatpush1.msra.mxu0 0.0
    %2624 = vmatprep.subr.mxu0 0.0
    %2625 = vmatpush1.msra.mxu0 0.0
    %2626 = vmatprep.subr.mxu0 0.0
    %2627 = vmatpush1.msra.mxu0 0.0
    %2628 = vmatprep.subr.mxu0 0.0
    %2629 = vmatpush1.msra.mxu0 0.0
    %2630 = vmatprep.subr.mxu0 0.0
    %2631 = vmatpush1.msra.mxu0 0.0
    %2632 = vmatprep.subr.mxu0 0.0
    %2633 = vmatpush1.msra.mxu0 0.0
    %2634 = vmatprep.subr.mxu0 0.0
    %2635 = vmatpush1.msra.mxu0 0.0
    %2636 = vmatprep.subr.mxu0 0.0
    %2637 = vmatpush1.msra.mxu0 0.0
    %2638 = vmatprep.subr.mxu0 0.0
    %2639 = vmatpush1.msra.mxu0 0.0
    %2640 = vmatprep.subr.mxu0 0.0
    %2641 = vmatpush1.msra.mxu0 0.0
    %2642 = vmatprep.subr.mxu0 0.0
    %2643 = vmatpush1.msra.mxu0 0.0
    %2644 = vmatprep.subr.mxu0 0.0
    %2645 = vmatpush1.msra.mxu0 0.0
    %2646 = vmatprep.subr.mxu0 0.0
    %2647 = vmatpush1.msra.mxu0 0.0
    %2648 = vmatprep.subr.mxu0 0.0
    %2649 = vmatpush1.msra.mxu0 0.0
    %2650 = vmatprep.subr.mxu0 0.0
    %2651 = vmatpush1.msra.mxu0 0.0
    %2652 = vmatprep.subr.mxu0 0.0
    %2653 = vmatpush1.msra.mxu0 0.0
    %2654 = vmatprep.subr.mxu0 0.0
    %2655 = vmatpush1.msra.mxu0 0.0
    %2656 = vmatprep.subr.mxu0 0.0
    %2657 = vmatpush1.msra.mxu0 0.0
    %2658 = vmatprep.subr.mxu0 0.0
    %2659 = vmatpush1.msra.mxu0 0.0
    %2660 = vmatprep.subr.mxu0 0.0
    %2661 = vmatpush1.msra.mxu0 0.0
    %2662 = vmatprep.subr.mxu0 0.0
    %2663 = vmatpush1.msra.mxu0 0.0
    %2664 = vmatprep.subr.mxu0 0.0
    %2665 = vmatpush1.msra.mxu0 0.0
    %2666 = vmatprep.subr.mxu0 0.0
    %2667 = vmatpush1.msra.mxu0 0.0
    %2668 = vmatprep.subr.mxu0 0.0
    %2669 = vmatpush1.msra.mxu0 0.0
    %2670 = vmatprep.subr.mxu0 0.0
    %2671 = vmatpush1.msra.mxu0 0.0
    %2672 = vmatprep.subr.mxu0 0.0
    %2673 = vmatpush1.msra.mxu0 0.0
    %2674 = vmatprep.subr.mxu0 0.0
    %2675 = vmatpush1.msra.mxu0 0.0
    %2676 = vmatprep.mubr.f32.mxu0 0.0
    %2677 = vmatmul.mubr.f32.gmra.mrb[0].mxu0 %v2610
    %v2678 = vpop.f32.mrb[0].mxu0
    %v2679 = vadd.f32 0.0, %v2678
    %v2680 = vpop.f32.mrb[0].mxu0
    %2681 = vdwg.mxu0
    %2682 = vrot.lane.b32.xlu0 %v903, 72
    %v2683 = vpop.permute.xlu0 %2682
    %2684 = vrot.lane.b32.xlu0 %v2068, 104
    %v2685 = vpop.permute.xlu0 %2684
    %2686 = vrot.lane.b32.xlu0 %v2073, 104
    %v2687 = vpop.permute.xlu0 %2686
    %v2688 = vsel %vm1161, %v2683, 0
    %v2690 = vsel %vm1161, %v2685, 0
    %v2692 = vsel %vm1161, %v2687, 0
    %2694 = vmatprep.subr.mxu0 0.0
    %2695 = vmatpush1.xpose.msra.mxu0 %v2690
    %2696 = vmatprep.subr.mxu0 0.0
    %2697 = vmatpush1.xpose.msra.mxu0 %v2692
    %2698 = vmatprep.subr.mxu0 0.0
    %2699 = vmatpush1.xpose.msra.mxu0 0.0
    %2700 = vmatprep.subr.mxu0 0.0
    %2701 = vmatpush1.xpose.msra.mxu0 0.0
    %2702 = vmatprep.subr.mxu0 0.0
    %2703 = vmatpush1.xpose.msra.mxu0 0.0
    %2704 = vmatprep.subr.mxu0 0.0
    %2705 = vmatpush1.xpose.msra.mxu0 0.0
    %2706 = vmatprep.subr.mxu0 0.0
    %2707 = vmatpush1.xpose.msra.mxu0 0.0
    %2708 = vmatprep.subr.mxu0 0.0
    %2709 = vmatpush1.xpose.msra.mxu0 0.0
    %2710 = vmatprep.subr.mxu0 0.0
    %2711 = vmatpush1.xpose.msra.mxu0 0.0
    %2712 = vmatprep.subr.mxu0 0.0
    %2713 = vmatpush1.xpose.msra.mxu0 0.0
    %2714 = vmatprep.subr.mxu0 0.0
    %2715 = vmatpush1.xpose.msra.mxu0 0.0
    %2716 = vmatprep.subr.mxu0 0.0
    %2717 = vmatpush1.xpose.msra.mxu0 0.0
    %2718 = vmatprep.subr.mxu0 0.0
    %2719 = vmatpush1.xpose.msra.mxu0 0.0
    %2720 = vmatprep.subr.mxu0 0.0
    %2721 = vmatpush1.xpose.msra.mxu0 0.0
    %2722 = vmatprep.subr.mxu0 0.0
    %2723 = vmatpush1.xpose.msra.mxu0 0.0
    %2724 = vmatprep.subr.mxu0 0.0
    %2725 = vmatpush1.xpose.msra.mxu0 0.0
    %2726 = vmatprep.subr.mxu0 0.0
    %2727 = vmatpush1.xpose.msra.mxu0 0.0
    %2728 = vmatprep.subr.mxu0 0.0
    %2729 = vmatpush1.xpose.msra.mxu0 0.0
    %2730 = vmatprep.subr.mxu0 0.0
    %2731 = vmatpush1.xpose.msra.mxu0 0.0
    %2732 = vmatprep.subr.mxu0 0.0
    %2733 = vmatpush1.xpose.msra.mxu0 0.0
    %2734 = vmatprep.subr.mxu0 0.0
    %2735 = vmatpush1.xpose.msra.mxu0 0.0
    %2736 = vmatprep.subr.mxu0 0.0
    %2737 = vmatpush1.xpose.msra.mxu0 0.0
    %2738 = vmatprep.subr.mxu0 0.0
    %2739 = vmatpush1.xpose.msra.mxu0 0.0
    %2740 = vmatprep.subr.mxu0 0.0
    %2741 = vmatpush1.xpose.msra.mxu0 0.0
    %2742 = vmatprep.subr.mxu0 0.0
    %2743 = vmatpush1.xpose.msra.mxu0 0.0
    %2744 = vmatprep.subr.mxu0 0.0
    %2745 = vmatpush1.xpose.msra.mxu0 0.0
    %2746 = vmatprep.subr.mxu0 0.0
    %2747 = vmatpush1.xpose.msra.mxu0 0.0
    %2748 = vmatprep.subr.mxu0 0.0
    %2749 = vmatpush1.xpose.msra.mxu0 0.0
    %2750 = vmatprep.subr.mxu0 0.0
    %2751 = vmatpush1.xpose.msra.mxu0 0.0
    %2752 = vmatprep.subr.mxu0 0.0
    %2753 = vmatpush1.xpose.msra.mxu0 0.0
    %2754 = vmatprep.subr.mxu0 0.0
    %2755 = vmatpush1.xpose.msra.mxu0 0.0
    %2756 = vmatprep.subr.mxu0 0.0
    %2757 = vmatpush1.xpose.msra.mxu0 0.0
    %2758 = vmatprep.mubr.f32.mxu0 0.0
    %2759 = vmatmul.mubr.f32.gmra.mrb[0].mxu0 %v2688
    %v2760 = vpop.f32.mrb[0].mxu0
    %v2761 = vadd.f32 0.0, %v2760
    %v2762 = vpop.f32.mrb[0].mxu0
    %2763 = vdwg.mxu0
    %v2764 = vsel %vm2159, %v2761, -1e+30
    %v2765 = vsel %vm473, %v2764, -inf
    %2766 = vmax.xlane.f32.xlu0 %v2765
    %v2767 = vpop.xlane.xlu0 %2766
    %v2768 = vsub.f32 %v2764, %v2767
    %v2769 = vmul.f32 %v2768, 1.442695
    %v2770 = vpow.pop %v2769
    %v2771 = vsel %vm2159, %v2770, 0.0
    %v2772 = vsel %vm473, %v2771, 0.0
    %2773 = vadd.xlane.f32.xlu0 %v2772
    %v2774 = vpop.xlane.xlu0 %2773
    %vm2775 = vcmp.gt.f32.partialorder %v2774, 0.0
    %v2776 = vsel %vm2775, %v2774, 1.0
    %v2777 = vrcp.pop %v2776
    %v2778 = vmul.f32 %v2771, %v2777
    %2779 = vrot.lane.b32.xlu0 %v2151, 104
    %v2780 = vpop.permute.xlu0 %2779
    %2781 = vrot.lane.b32.xlu0 %v2156, 104
    %v2782 = vpop.permute.xlu0 %2781
    %v2786 = vsel %vm473, %v2778, 0
    %2788 = vmatprep.subr.mxu0 0.0
    %2789 = vmatpush1.msra.mxu0 %v2780
    %2790 = vmatprep.subr.mxu0 0.0
    %2791 = vmatpush1.msra.mxu0 %v2782
    %2792 = vmatprep.subr.mxu0 0.0
    %2793 = vmatpush1.msra.mxu0 0.0
    %2794 = vmatprep.subr.mxu0 0.0
    %2795 = vmatpush1.msra.mxu0 0.0
    %2796 = vmatprep.subr.mxu0 0.0
    %2797 = vmatpush1.msra.mxu0 0.0
    %2798 = vmatprep.subr.mxu0 0.0
    %2799 = vmatpush1.msra.mxu0 0.0
    %2800 = vmatprep.subr.mxu0 0.0
    %2801 = vmatpush1.msra.mxu0 0.0
    %2802 = vmatprep.subr.mxu0 0.0
    %2803 = vmatpush1.msra.mxu0 0.0
    %2804 = vmatprep.subr.mxu0 0.0
    %2805 = vmatpush1.msra.mxu0 0.0
    %2806 = vmatprep.subr.mxu0 0.0
    %2807 = vmatpush1.msra.mxu0 0.0
    %2808 = vmatprep.subr.mxu0 0.0
    %2809 = vmatpush1.msra.mxu0 0.0
    %2810 = vmatprep.subr.mxu0 0.0
    %2811 = vmatpush1.msra.mxu0 0.0
    %2812 = vmatprep.subr.mxu0 0.0
    %2813 = vmatpush1.msra.mxu0 0.0
    %2814 = vmatprep.subr.mxu0 0.0
    %2815 = vmatpush1.msra.mxu0 0.0
    %2816 = vmatprep.subr.mxu0 0.0
    %2817 = vmatpush1.msra.mxu0 0.0
    %2818 = vmatprep.subr.mxu0 0.0
    %2819 = vmatpush1.msra.mxu0 0.0
    %2820 = vmatprep.subr.mxu0 0.0
    %2821 = vmatpush1.msra.mxu0 0.0
    %2822 = vmatprep.subr.mxu0 0.0
    %2823 = vmatpush1.msra.mxu0 0.0
    %2824 = vmatprep.subr.mxu0 0.0
    %2825 = vmatpush1.msra.mxu0 0.0
    %2826 = vmatprep.subr.mxu0 0.0
    %2827 = vmatpush1.msra.mxu0 0.0
    %2828 = vmatprep.subr.mxu0 0.0
    %2829 = vmatpush1.msra.mxu0 0.0
    %2830 = vmatprep.subr.mxu0 0.0
    %2831 = vmatpush1.msra.mxu0 0.0
    %2832 = vmatprep.subr.mxu0 0.0
    %2833 = vmatpush1.msra.mxu0 0.0
    %2834 = vmatprep.subr.mxu0 0.0
    %2835 = vmatpush1.msra.mxu0 0.0
    %2836 = vmatprep.subr.mxu0 0.0
    %2837 = vmatpush1.msra.mxu0 0.0
    %2838 = vmatprep.subr.mxu0 0.0
    %2839 = vmatpush1.msra.mxu0 0.0
    %2840 = vmatprep.subr.mxu0 0.0
    %2841 = vmatpush1.msra.mxu0 0.0
    %2842 = vmatprep.subr.mxu0 0.0
    %2843 = vmatpush1.msra.mxu0 0.0
    %2844 = vmatprep.subr.mxu0 0.0
    %2845 = vmatpush1.msra.mxu0 0.0
    %2846 = vmatprep.subr.mxu0 0.0
    %2847 = vmatpush1.msra.mxu0 0.0
    %2848 = vmatprep.subr.mxu0 0.0
    %2849 = vmatpush1.msra.mxu0 0.0
    %2850 = vmatprep.subr.mxu0 0.0
    %2851 = vmatpush1.msra.mxu0 0.0
    %2852 = vmatprep.mubr.f32.mxu0 0.0
    %2853 = vmatmul.mubr.f32.gmra.mrb[0].mxu0 %v2786
    %v2854 = vpop.f32.mrb[0].mxu0
    %v2855 = vadd.f32 0.0, %v2854
    %v2856 = vpop.f32.mrb[0].mxu0
    %2857 = vdwg.mxu0
    %2859 = vrot.lane.b32.xlu0 %v2503, 8
    %v2860 = vpop.permute.xlu0 %2859
    %2863 = vrot.lane.b32.xlu0 %v2679, 16
    %v2864 = vpop.permute.xlu0 %2863
    %2867 = vrot.lane.b32.xlu0 %v2855, 24
    %v2868 = vpop.permute.xlu0 %2867
    %v2870 = vsel %vm1161, %v2325, %v2860
    %v2871 = vsel %vm473, %v2870, %v2864
    %v2872 = vsel %vm646, %v2871, %v2868
    %v2873 = vld [vmem:[#allocation29] sm:$0xff]
    %v2874 = vld [vmem:[#allocation29 + $0x8] sm:$0xff]
    %v2875 = vld [vmem:[#allocation29 + $0x10] sm:$0xff]
    %v2876 = vld [vmem:[#allocation29 + $0x18] sm:$0xff]
    %v2877 = vld [vmem:[#allocation31] sm:$0x1]
    %v2878 = vld [vmem:[%s49] sm:$0x1]
    %v2879 = vmul.f32 %v2872, 0.5
    %v2880 = vmul.f32 %v2872, 0.70710677
    %v2881 = vand.u32 2147483647, %v2880
    %v2882 = vmul.f32 %v2881, 0.3275911
    %v2883 = vadd.f32 %v2882, 1.0
    %v2884 = vrcp.pop %v2883
    %v2885 = vmul.f32 1.0, %v2884
    %v2886 = vmul.f32 %v2885, 1.0614054
    %v2887 = vadd.f32 %v2886, -1.4531521
    %v2888 = vmul.f32 %v2887, %v2885
    %v2889 = vadd.f32 %v2888, 1.4214138
    %v2890 = vmul.f32 %v2889, %v2885
    %v2891 = vadd.f32 %v2890, -0.28449672
    %v2892 = vmul.f32 %v2891, %v2885
    %v2893 = vadd.f32 %v2892, 0.2548296
    %v2894 = vmul.f32 %v2893, %v2885
    %v2895 = vmul.f32 %v2881, %v2881
    %v2896 = vsub.f32 0.0, %v2895
    %v2897 = vmul.f32 %v2896, 1.442695
    %v2898 = vpow.pop %v2897
    %v2899 = vmul.f32 %v2894, %v2898
    %v2900 = vsub.f32 1.0, %v2899
    %vm2901 = vcmp.ge.f32.partialorder %v2880, 0.0
    %v2902 = vsub.f32 0.0, %v2900
    %v2903 = vsel %vm2901, %v2900, %v2902
    %v2904 = vadd.f32 %v2903, 1.0
    %v2905 = vmul.f32 %v2879, %v2904
    %v2907 = vlaneseq
    %v2908 = vshrl.u32 %v2907, 7
    %v2909 = vsub.s32 0, %v2908
    %v2910 = vrot.slane %v2877, %v2909
    %v2913 = vsel %vm554, %v2905, 0
    %2915 = vmatprep.subr.mxu0 0.0
    %2916 = vmatpush1.msra.mxu0 %v2873
    %2917 = vmatprep.subr.mxu0 0.0
    %2918 = vmatpush1.msra.mxu0 %v2874
    %2919 = vmatprep.subr.mxu0 0.0
    %2920 = vmatpush1.msra.mxu0 %v2875
    %2921 = vmatprep.subr.mxu0 0.0
    %2922 = vmatpush1.msra.mxu0 %v2876
    %2923 = vmatprep.subr.mxu0 0.0
    %2924 = vmatpush1.msra.mxu0 0.0
    %2925 = vmatprep.subr.mxu0 0.0
    %2926 = vmatpush1.msra.mxu0 0.0
    %2927 = vmatprep.subr.mxu0 0.0
    %2928 = vmatpush1.msra.mxu0 0.0
    %2929 = vmatprep.subr.mxu0 0.0
    %2930 = vmatpush1.msra.mxu0 0.0
    %2931 = vmatprep.subr.mxu0 0.0
    %2932 = vmatpush1.msra.mxu0 0.0
    %2933 = vmatprep.subr.mxu0 0.0
    %2934 = vmatpush1.msra.mxu0 0.0
    %2935 = vmatprep.subr.mxu0 0.0
    %2936 = vmatpush1.msra.mxu0 0.0
    %2937 = vmatprep.subr.mxu0 0.0
    %2938 = vmatpush1.msra.mxu0 0.0
    %2939 = vmatprep.subr.mxu0 0.0
    %2940 = vmatpush1.msra.mxu0 0.0
    %2941 = vmatprep.subr.mxu0 0.0
    %2942 = vmatpush1.msra.mxu0 0.0
    %2943 = vmatprep.subr.mxu0 0.0
    %2944 = vmatpush1.msra.mxu0 0.0
    %2945 = vmatprep.subr.mxu0 0.0
    %2946 = vmatpush1.msra.mxu0 0.0
    %2947 = vmatprep.subr.mxu0 0.0
    %2948 = vmatpush1.msra.mxu0 0.0
    %2949 = vmatprep.subr.mxu0 0.0
    %2950 = vmatpush1.msra.mxu0 0.0
    %2951 = vmatprep.subr.mxu0 0.0
    %2952 = vmatpush1.msra.mxu0 0.0
    %2953 = vmatprep.subr.mxu0 0.0
    %2954 = vmatpush1.msra.mxu0 0.0
    %2955 = vmatprep.subr.mxu0 0.0
    %2956 = vmatpush1.msra.mxu0 0.0
    %2957 = vmatprep.subr.mxu0 0.0
    %2958 = vmatpush1.msra.mxu0 0.0
    %2959 = vmatprep.subr.mxu0 0.0
    %2960 = vmatpush1.msra.mxu0 0.0
    %2961 = vmatprep.subr.mxu0 0.0
    %2962 = vmatpush1.msra.mxu0 0.0
    %2963 = vmatprep.subr.mxu0 0.0
    %2964 = vmatpush1.msra.mxu0 0.0
    %2965 = vmatprep.subr.mxu0 0.0
    %2966 = vmatpush1.msra.mxu0 0.0
    %2967 = vmatprep.subr.mxu0 0.0
    %2968 = vmatpush1.msra.mxu0 0.0
    %2969 = vmatprep.subr.mxu0 0.0
    %2970 = vmatpush1.msra.mxu0 0.0
    %2971 = vmatprep.subr.mxu0 0.0
    %2972 = vmatpush1.msra.mxu0 0.0
    %2973 = vmatprep.subr.mxu0 0.0
    %2974 = vmatpush1.msra.mxu0 0.0
    %2975 = vmatprep.subr.mxu0 0.0
    %2976 = vmatpush1.msra.mxu0 0.0
    %2977 = vmatprep.subr.mxu0 0.0
    %2978 = vmatpush1.msra.mxu0 0.0
    %2979 = vmatprep.mubr.f32.mxu0 0.0
    %2980 = vmatmul.mubr.f32.gmra.mrb[0].mxu0 %v2913
    %v2981 = vpop.f32.mrb[0].mxu0
    %v2982 = vadd.f32 %v2910, %v2981
    %v2983 = vpop.f32.mrb[0].mxu0
    %2984 = vdwg.mxu0
    %v2986 = vlaneseq
    %v2987 = vshrl.u32 %v2986, 7
    %v2988 = vsub.s32 0, %v2987
    %v2989 = vrot.slane %v2878, %v2988
    %2990 = vset.pattern.permute.xlu0 0
    %2991 = vperm.xlu0 %2990, %v2989
    %v2992 = vpop.permute.xlu0 %2991
    %v2994 = vmul.f32 %v2992, %v2982
    %v2995 = vsub.f32 1.0, %v2878
    %v2997 = vlaneseq
    %v2998 = vshrl.u32 %v2997, 7
    %v2999 = vsub.s32 0, %v2998
    %v3000 = vrot.slane %v2995, %v2999
    %3001 = vset.pattern.permute.xlu0 0
    %3002 = vperm.xlu0 %3001, %v3000
    %v3003 = vpop.permute.xlu0 %3002
    %v3005 = vmul.f32 %v3003, %v628
    %v3006 = vadd.f32 %v2994, %v3005
    %v3007 = vld [vmem:[#allocation32] sm:$0xff]
    %v3008 = vld [vmem:[#allocation32 + $0x8] sm:$0xff]
    %v3009 = vld [vmem:[#allocation32 + $0x10] sm:$0xff]
    %v3010 = vld [vmem:[#allocation32 + $0x18] sm:$0xff]
    %v3011 = vld [vmem:[#allocation34] sm:$0x1]
    %v3012 = vld [vmem:[%s51] sm:$0x1]
    %v3013 = vmul.f32 %v1987, 0.5
    %v3014 = vmul.f32 %v1988, 0.5
    %v3015 = vmul.f32 %v1987, 0.70710677
    %v3016 = vmul.f32 %v1988, 0.70710677
    %v3017 = vand.u32 2147483647, %v3015
    %v3018 = vand.u32 2147483647, %v3016
    %v3019 = vmul.f32 %v3017, 0.3275911
    %v3020 = vmul.f32 %v3018, 0.3275911
    %v3021 = vadd.f32 %v3019, 1.0
    %v3022 = vadd.f32 %v3020, 1.0
    %v3023 = vrcp.pop %v3021
    %v3024 = vmul.f32 1.0, %v3023
    %v3025 = vrcp.pop %v3022
    %v3026 = vmul.f32 1.0, %v3025
    %v3027 = vmul.f32 %v3024, 1.0614054
    %v3028 = vmul.f32 %v3026, 1.0614054
    %v3029 = vadd.f32 %v3027, -1.4531521
    %v3030 = vadd.f32 %v3028, -1.4531521
    %v3031 = vmul.f32 %v3029, %v3024
    %v3032 = vmul.f32 %v3030, %v3026
    %v3033 = vadd.f32 %v3031, 1.4214138
    %v3034 = vadd.f32 %v3032, 1.4214138
    %v3035 = vmul.f32 %v3033, %v3024
    %v3036 = vmul.f32 %v3034, %v3026
    %v3037 = vadd.f32 %v3035, -0.28449672
    %v3038 = vadd.f32 %v3036, -0.28449672
    %v3039 = vmul.f32 %v3037, %v3024
    %v3040 = vmul.f32 %v3038, %v3026
    %v3041 = vadd.f32 %v3039, 0.2548296
    %v3042 = vadd.f32 %v3040, 0.2548296
    %v3043 = vmul.f32 %v3041, %v3024
    %v3044 = vmul.f32 %v3042, %v3026
    %v3045 = vmul.f32 %v3017, %v3017
    %v3046 = vmul.f32 %v3018, %v3018
    %v3047 = vsub.f32 0.0, %v3045
    %v3048 = vsub.f32 0.0, %v3046
    %v3049 = vmul.f32 %v3047, 1.442695
    %v3050 = vpow.pop %v3049
    %v3051 = vmul.f32 %v3048, 1.442695
    %v3052 = vpow.pop %v3051
    %v3053 = vmul.f32 %v3043, %v3050
    %v3054 = vmul.f32 %v3044, %v3052
    %v3055 = vsub.f32 1.0, %v3053
    %v3056 = vsub.f32 1.0, %v3054
    %vm3057 = vcmp.ge.f32.partialorder %v3015, 0.0
    %vm3058 = vcmp.ge.f32.partialorder %v3016, 0.0
    %v3059 = vsub.f32 0.0, %v3055
    %v3060 = vsub.f32 0.0, %v3056
    %v3061 = vsel %vm3057, %v3055, %v3059
    %v3062 = vsel %vm3058, %v3056, %v3060
    %v3063 = vadd.f32 %v3061, 1.0
    %v3064 = vadd.f32 %v3062, 1.0
    %v3065 = vmul.f32 %v3013, %v3063
    %v3066 = vmul.f32 %v3014, %v3064
    %v3068 = vlaneseq
    %v3069 = vshrl.u32 %v3068, 7
    %v3070 = vsub.s32 0, %v3069
    %v3071 = vrot.slane %v3011, %v3070
    %v3074 = vsel %vm554, %v3065, 0
    %v3077 = vsel %vm554, %v3066, 0
    %3079 = vmatprep.subr.mxu0 0.0
    %3080 = vmatpush1.msra.mxu0 %v3007
    %3081 = vmatprep.subr.mxu0 0.0
    %3082 = vmatpush1.msra.mxu0 %v3008
    %3083 = vmatprep.subr.mxu0 0.0
    %3084 = vmatpush1.msra.mxu0 %v3009
    %3085 = vmatprep.subr.mxu0 0.0
    %3086 = vmatpush1.msra.mxu0 %v3010
    %3087 = vmatprep.subr.mxu0 0.0
    %3088 = vmatpush1.msra.mxu0 0.0
    %3089 = vmatprep.subr.mxu0 0.0
    %3090 = vmatpush1.msra.mxu0 0.0
    %3091 = vmatprep.subr.mxu0 0.0
    %3092 = vmatpush1.msra.mxu0 0.0
    %3093 = vmatprep.subr.mxu0 0.0
    %3094 = vmatpush1.msra.mxu0 0.0
    %3095 = vmatprep.subr.mxu0 0.0
    %3096 = vmatpush1.msra.mxu0 0.0
    %3097 = vmatprep.subr.mxu0 0.0
    %3098 = vmatpush1.msra.mxu0 0.0
    %3099 = vmatprep.subr.mxu0 0.0
    %3100 = vmatpush1.msra.mxu0 0.0
    %3101 = vmatprep.subr.mxu0 0.0
    %3102 = vmatpush1.msra.mxu0 0.0
    %3103 = vmatprep.subr.mxu0 0.0
    %3104 = vmatpush1.msra.mxu0 0.0
    %3105 = vmatprep.subr.mxu0 0.0
    %3106 = vmatpush1.msra.mxu0 0.0
    %3107 = vmatprep.subr.mxu0 0.0
    %3108 = vmatpush1.msra.mxu0 0.0
    %3109 = vmatprep.subr.mxu0 0.0
    %3110 = vmatpush1.msra.mxu0 0.0
    %3111 = vmatprep.subr.mxu0 0.0
    %3112 = vmatpush1.msra.mxu0 0.0
    %3113 = vmatprep.subr.mxu0 0.0
    %3114 = vmatpush1.msra.mxu0 0.0
    %3115 = vmatprep.subr.mxu0 0.0
    %3116 = vmatpush1.msra.mxu0 0.0
    %3117 = vmatprep.subr.mxu0 0.0
    %3118 = vmatpush1.msra.mxu0 0.0
    %3119 = vmatprep.subr.mxu0 0.0
    %3120 = vmatpush1.msra.mxu0 0.0
    %3121 = vmatprep.subr.mxu0 0.0
    %3122 = vmatpush1.msra.mxu0 0.0
    %3123 = vmatprep.subr.mxu0 0.0
    %3124 = vmatpush1.msra.mxu0 0.0
    %3125 = vmatprep.subr.mxu0 0.0
    %3126 = vmatpush1.msra.mxu0 0.0
    %3127 = vmatprep.subr.mxu0 0.0
    %3128 = vmatpush1.msra.mxu0 0.0
    %3129 = vmatprep.subr.mxu0 0.0
    %3130 = vmatpush1.msra.mxu0 0.0
    %3131 = vmatprep.subr.mxu0 0.0
    %3132 = vmatpush1.msra.mxu0 0.0
    %3133 = vmatprep.subr.mxu0 0.0
    %3134 = vmatpush1.msra.mxu0 0.0
    %3135 = vmatprep.subr.mxu0 0.0
    %3136 = vmatpush1.msra.mxu0 0.0
    %3137 = vmatprep.subr.mxu0 0.0
    %3138 = vmatpush1.msra.mxu0 0.0
    %3139 = vmatprep.subr.mxu0 0.0
    %3140 = vmatpush1.msra.mxu0 0.0
    %3141 = vmatprep.subr.mxu0 0.0
    %3142 = vmatpush1.msra.mxu0 0.0
    %3143 = vmatprep.mubr.f32.mxu0 0.0
    %3144 = vmatmul.mubr.f32.gmra.mrb[0].mxu0 %v3074
    %v3145 = vpop.f32.mrb[0].mxu0
    %v3146 = vadd.f32 %v3071, %v3145
    %v3147 = vpop.f32.mrb[0].mxu0
    %3148 = vmatprep.mubr.f32.mxu0 0.0
    %3149 = vmatmul.mubr.f32.gmra.mrb[0].mxu0 %v3077
    %v3150 = vpop.f32.mrb[0].mxu0
    %v3151 = vadd.f32 %v3071, %v3150
    %v3152 = vpop.f32.mrb[0].mxu0
    %3153 = vdwg.mxu0
    %v3155 = vlaneseq
    %v3156 = vshrl.u32 %v3155, 7
    %v3157 = vsub.s32 0, %v3156
    %v3158 = vrot.slane %v3012, %v3157
    %3159 = vset.pattern.permute.xlu0 0
    %3160 = vperm.xlu0 %3159, %v3158
    %v3161 = vpop.permute.xlu0 %3160
    %v3163 = vmul.f32 %v3161, %v3146
    %v3164 = vmul.f32 %v3161, %v3151
    %v3165 = vsub.f32 1.0, %v3012
    %v3167 = vlaneseq
    %v3168 = vshrl.u32 %v3167, 7
    %v3169 = vsub.s32 0, %v3168
    %v3170 = vrot.slane %v3165, %v3169
    %3171 = vset.pattern.permute.xlu0 0
    %3172 = vperm.xlu0 %3171, %v3170
    %v3173 = vpop.permute.xlu0 %3172
    %v3175 = vmul.f32 %v3173, %v817
    %v3176 = vmul.f32 %v3173, %v818
    %v3177 = vadd.f32 %v3163, %v3175
    %v3178 = vadd.f32 %v3164, %v3176
    %v3179 = vld [vmem:[%s53] sm:$0xff]
    %v3180 = vld [vmem:[%s53 + $0x8] sm:$0xff]
    %v3181 = vld [vmem:[%s53 + $0x10] sm:$0xff]
    %v3182 = vld [vmem:[%s53 + $0x18] sm:$0xff]
    %v3183 = vld [vmem:[%s55] sm:$0x1]
    %v3184 = vld [vmem:[#allocation35] sm:$0xff]
    %v3185 = vld [vmem:[#allocation35 + $0x8] sm:$0xff]
    %v3186 = vld [vmem:[#allocation35 + $0x10] sm:$0xff]
    %v3187 = vld [vmem:[#allocation35 + $0x18] sm:$0xff]
    %v3188 = vld [vmem:[%s59] sm:$0x1]
    %v3190 = vlaneseq
    %v3191 = vshrl.u32 %v3190, 7
    %v3192 = vsub.s32 0, %v3191
    %v3193 = vrot.slane %v3183, %v3192
    %v3196 = vsel %vm554, %v3006, 0
    %3198 = vmatprep.subr.mxu0 0.0
    %3199 = vmatpush1.msra.mxu0 %v3179
    %3200 = vmatprep.subr.mxu0 0.0
    %3201 = vmatpush1.msra.mxu0 %v3180
    %3202 = vmatprep.subr.mxu0 0.0
    %3203 = vmatpush1.msra.mxu0 %v3181
    %3204 = vmatprep.subr.mxu0 0.0
    %3205 = vmatpush1.msra.mxu0 %v3182
    %3206 = vmatprep.subr.mxu0 0.0
    %3207 = vmatpush1.msra.mxu0 0.0
    %3208 = vmatprep.subr.mxu0 0.0
    %3209 = vmatpush1.msra.mxu0 0.0
    %3210 = vmatprep.subr.mxu0 0.0
    %3211 = vmatpush1.msra.mxu0 0.0
    %3212 = vmatprep.subr.mxu0 0.0
    %3213 = vmatpush1.msra.mxu0 0.0
    %3214 = vmatprep.subr.mxu0 0.0
    %3215 = vmatpush1.msra.mxu0 0.0
    %3216 = vmatprep.subr.mxu0 0.0
    %3217 = vmatpush1.msra.mxu0 0.0
    %3218 = vmatprep.subr.mxu0 0.0
    %3219 = vmatpush1.msra.mxu0 0.0
    %3220 = vmatprep.subr.mxu0 0.0
    %3221 = vmatpush1.msra.mxu0 0.0
    %3222 = vmatprep.subr.mxu0 0.0
    %3223 = vmatpush1.msra.mxu0 0.0
    %3224 = vmatprep.subr.mxu0 0.0
    %3225 = vmatpush1.msra.mxu0 0.0
    %3226 = vmatprep.subr.mxu0 0.0
    %3227 = vmatpush1.msra.mxu0 0.0
    %3228 = vmatprep.subr.mxu0 0.0
    %3229 = vmatpush1.msra.mxu0 0.0
    %3230 = vmatprep.subr.mxu0 0.0
    %3231 = vmatpush1.msra.mxu0 0.0
    %3232 = vmatprep.subr.mxu0 0.0
    %3233 = vmatpush1.msra.mxu0 0.0
    %3234 = vmatprep.subr.mxu0 0.0
    %3235 = vmatpush1.msra.mxu0 0.0
    %3236 = vmatprep.subr.mxu0 0.0
    %3237 = vmatpush1.msra.mxu0 0.0
    %3238 = vmatprep.subr.mxu0 0.0
    %3239 = vmatpush1.msra.mxu0 0.0
    %3240 = vmatprep.subr.mxu0 0.0
    %3241 = vmatpush1.msra.mxu0 0.0
    %3242 = vmatprep.subr.mxu0 0.0
    %3243 = vmatpush1.msra.mxu0 0.0
    %3244 = vmatprep.subr.mxu0 0.0
    %3245 = vmatpush1.msra.mxu0 0.0
    %3246 = vmatprep.subr.mxu0 0.0
    %3247 = vmatpush1.msra.mxu0 0.0
    %3248 = vmatprep.subr.mxu0 0.0
    %3249 = vmatpush1.msra.mxu0 0.0
    %3250 = vmatprep.subr.mxu0 0.0
    %3251 = vmatpush1.msra.mxu0 0.0
    %3252 = vmatprep.subr.mxu0 0.0
    %3253 = vmatpush1.msra.mxu0 0.0
    %3254 = vmatprep.subr.mxu0 0.0
    %3255 = vmatpush1.msra.mxu0 0.0
    %3256 = vmatprep.subr.mxu0 0.0
    %3257 = vmatpush1.msra.mxu0 0.0
    %3258 = vmatprep.subr.mxu0 0.0
    %3259 = vmatpush1.msra.mxu0 0.0
    %3260 = vmatprep.subr.mxu0 0.0
    %3261 = vmatpush1.msra.mxu0 0.0
    %3262 = vmatprep.mubr.f32.mxu0 0.0
    %3263 = vmatmul.mubr.f32.gmra.mrb[0].mxu0 %v3196
    %v3264 = vpop.f32.mrb[0].mxu0
    %v3265 = vadd.f32 %v3193, %v3264
    %v3266 = vpop.f32.mrb[0].mxu0
    %3267 = vdwg.mxu0
    %v3268 = vmax.f32 %v3265, 0.0
    %v3270 = vlaneseq
    %v3271 = vshrl.u32 %v3270, 7
    %v3272 = vsub.s32 0, %v3271
    %v3273 = vrot.slane %v3188, %v3272
    %v3276 = vsel %vm554, %v3268, 0
    %3278 = vmatprep.subr.mxu0 0.0
    %3279 = vmatpush1.msra.mxu0 %v3184
    %3280 = vmatprep.subr.mxu0 0.0
    %3281 = vmatpush1.msra.mxu0 %v3185
    %3282 = vmatprep.subr.mxu0 0.0
    %3283 = vmatpush1.msra.mxu0 %v3186
    %3284 = vmatprep.subr.mxu0 0.0
    %3285 = vmatpush1.msra.mxu0 %v3187
    %3286 = vmatprep.subr.mxu0 0.0
    %3287 = vmatpush1.msra.mxu0 0.0
    %3288 = vmatprep.subr.mxu0 0.0
    %3289 = vmatpush1.msra.mxu0 0.0
    %3290 = vmatprep.subr.mxu0 0.0
    %3291 = vmatpush1.msra.mxu0 0.0
    %3292 = vmatprep.subr.mxu0 0.0
    %3293 = vmatpush1.msra.mxu0 0.0
    %3294 = vmatprep.subr.mxu0 0.0
    %3295 = vmatpush1.msra.mxu0 0.0
    %3296 = vmatprep.subr.mxu0 0.0
    %3297 = vmatpush1.msra.mxu0 0.0
    %3298 = vmatprep.subr.mxu0 0.0
    %3299 = vmatpush1.msra.mxu0 0.0
    %3300 = vmatprep.subr.mxu0 0.0
    %3301 = vmatpush1.msra.mxu0 0.0
    %3302 = vmatprep.subr.mxu0 0.0
    %3303 = vmatpush1.msra.mxu0 0.0
    %3304 = vmatprep.subr.mxu0 0.0
    %3305 = vmatpush1.msra.mxu0 0.0
    %3306 = vmatprep.subr.mxu0 0.0
    %3307 = vmatpush1.msra.mxu0 0.0
    %3308 = vmatprep.subr.mxu0 0.0
    %3309 = vmatpush1.msra.mxu0 0.0
    %3310 = vmatprep.subr.mxu0 0.0
    %3311 = vmatpush1.msra.mxu0 0.0
    %3312 = vmatprep.subr.mxu0 0.0
    %3313 = vmatpush1.msra.mxu0 0.0
    %3314 = vmatprep.subr.mxu0 0.0
    %3315 = vmatpush1.msra.mxu0 0.0
    %3316 = vmatprep.subr.mxu0 0.0
    %3317 = vmatpush1.msra.mxu0 0.0
    %3318 = vmatprep.subr.mxu0 0.0
    %3319 = vmatpush1.msra.mxu0 0.0
    %3320 = vmatprep.subr.mxu0 0.0
    %3321 = vmatpush1.msra.mxu0 0.0
    %3322 = vmatprep.subr.mxu0 0.0
    %3323 = vmatpush1.msra.mxu0 0.0
    %3324 = vmatprep.subr.mxu0 0.0
    %3325 = vmatpush1.msra.mxu0 0.0
    %3326 = vmatprep.subr.mxu0 0.0
    %3327 = vmatpush1.msra.mxu0 0.0
    %3328 = vmatprep.subr.mxu0 0.0
    %3329 = vmatpush1.msra.mxu0 0.0
    %3330 = vmatprep.subr.mxu0 0.0
    %3331 = vmatpush1.msra.mxu0 0.0
    %3332 = vmatprep.subr.mxu0 0.0
    %3333 = vmatpush1.msra.mxu0 0.0
    %3334 = vmatprep.subr.mxu0 0.0
    %3335 = vmatpush1.msra.mxu0 0.0
    %3336 = vmatprep.subr.mxu0 0.0
    %3337 = vmatpush1.msra.mxu0 0.0
    %3338 = vmatprep.subr.mxu0 0.0
    %3339 = vmatpush1.msra.mxu0 0.0
    %3340 = vmatprep.subr.mxu0 0.0
    %3341 = vmatpush1.msra.mxu0 0.0
    %3342 = vmatprep.mubr.f32.mxu0 0.0
    %3343 = vmatmul.mubr.f32.gmra.mrb[0].mxu0 %v3276
    %v3344 = vpop.f32.mrb[0].mxu0
    %v3345 = vadd.f32 %v3273, %v3344
    %v3346 = vpop.f32.mrb[0].mxu0
    %3347 = vdwg.mxu0
    %v3348 = vmax.f32 %v3345, 0.0
    %v3349 = vld [vmem:[#allocation37] sm:$0xff]
    %v3350 = vld [vmem:[#allocation37 + $0x8] sm:$0xff]
    %v3351 = vld [vmem:[#allocation37 + $0x10] sm:$0xff]
    %v3352 = vld [vmem:[#allocation37 + $0x18] sm:$0xff]
    %v3353 = vld [vmem:[%s63] sm:$0x1]
    %v3354 = vld [vmem:[#allocation38] sm:$0xff]
    %v3355 = vld [vmem:[#allocation38 + $0x8] sm:$0xff]
    %v3356 = vld [vmem:[#allocation38 + $0x10] sm:$0xff]
    %v3357 = vld [vmem:[#allocation38 + $0x18] sm:$0xff]
    %v3358 = vld [vmem:[%s67] sm:$0x1]
    %v3360 = vlaneseq
    %v3361 = vshrl.u32 %v3360, 7
    %v3362 = vsub.s32 0, %v3361
    %v3363 = vrot.slane %v3353, %v3362
    %v3366 = vsel %vm554, %v3177, 0
    %v3369 = vsel %vm554, %v3178, 0
    %3371 = vmatprep.subr.mxu0 0.0
    %3372 = vmatpush1.msra.mxu0 %v3349
    %3373 = vmatprep.subr.mxu0 0.0
    %3374 = vmatpush1.msra.mxu0 %v3350
    %3375 = vmatprep.subr.mxu0 0.0
    %3376 = vmatpush1.msra.mxu0 %v3351
    %3377 = vmatprep.subr.mxu0 0.0
    %3378 = vmatpush1.msra.mxu0 %v3352
    %3379 = vmatprep.subr.mxu0 0.0
    %3380 = vmatpush1.msra.mxu0 0.0
    %3381 = vmatprep.subr.mxu0 0.0
    %3382 = vmatpush1.msra.mxu0 0.0
    %3383 = vmatprep.subr.mxu0 0.0
    %3384 = vmatpush1.msra.mxu0 0.0
    %3385 = vmatprep.subr.mxu0 0.0
    %3386 = vmatpush1.msra.mxu0 0.0
    %3387 = vmatprep.subr.mxu0 0.0
    %3388 = vmatpush1.msra.mxu0 0.0
    %3389 = vmatprep.subr.mxu0 0.0
    %3390 = vmatpush1.msra.mxu0 0.0
    %3391 = vmatprep.subr.mxu0 0.0
    %3392 = vmatpush1.msra.mxu0 0.0
    %3393 = vmatprep.subr.mxu0 0.0
    %3394 = vmatpush1.msra.mxu0 0.0
    %3395 = vmatprep.subr.mxu0 0.0
    %3396 = vmatpush1.msra.mxu0 0.0
    %3397 = vmatprep.subr.mxu0 0.0
    %3398 = vmatpush1.msra.mxu0 0.0
    %3399 = vmatprep.subr.mxu0 0.0
    %3400 = vmatpush1.msra.mxu0 0.0
    %3401 = vmatprep.subr.mxu0 0.0
    %3402 = vmatpush1.msra.mxu0 0.0
    %3403 = vmatprep.subr.mxu0 0.0
    %3404 = vmatpush1.msra.mxu0 0.0
    %3405 = vmatprep.subr.mxu0 0.0
    %3406 = vmatpush1.msra.mxu0 0.0
    %3407 = vmatprep.subr.mxu0 0.0
    %3408 = vmatpush1.msra.mxu0 0.0
    %3409 = vmatprep.subr.mxu0 0.0
    %3410 = vmatpush1.msra.mxu0 0.0
    %3411 = vmatprep.subr.mxu0 0.0
    %3412 = vmatpush1.msra.mxu0 0.0
    %3413 = vmatprep.subr.mxu0 0.0
    %3414 = vmatpush1.msra.mxu0 0.0
    %3415 = vmatprep.subr.mxu0 0.0
    %3416 = vmatpush1.msra.mxu0 0.0
    %3417 = vmatprep.subr.mxu0 0.0
    %3418 = vmatpush1.msra.mxu0 0.0
    %3419 = vmatprep.subr.mxu0 0.0
    %3420 = vmatpush1.msra.mxu0 0.0
    %3421 = vmatprep.subr.mxu0 0.0
    %3422 = vmatpush1.msra.mxu0 0.0
    %3423 = vmatprep.subr.mxu0 0.0
    %3424 = vmatpush1.msra.mxu0 0.0
    %3425 = vmatprep.subr.mxu0 0.0
    %3426 = vmatpush1.msra.mxu0 0.0
    %3427 = vmatprep.subr.mxu0 0.0
    %3428 = vmatpush1.msra.mxu0 0.0
    %3429 = vmatprep.subr.mxu0 0.0
    %3430 = vmatpush1.msra.mxu0 0.0
    %3431 = vmatprep.subr.mxu0 0.0
    %3432 = vmatpush1.msra.mxu0 0.0
    %3433 = vmatprep.subr.mxu0 0.0
    %3434 = vmatpush1.msra.mxu0 0.0
    %3435 = vmatprep.mubr.f32.mxu0 0.0
    %3436 = vmatmul.mubr.f32.gmra.mrb[0].mxu0 %v3366
    %v3437 = vpop.f32.mrb[0].mxu0
    %v3438 = vadd.f32 %v3363, %v3437
    %v3439 = vpop.f32.mrb[0].mxu0
    %3440 = vmatprep.mubr.f32.mxu0 0.0
    %3441 = vmatmul.mubr.f32.gmra.mrb[0].mxu0 %v3369
    %v3442 = vpop.f32.mrb[0].mxu0
    %v3443 = vadd.f32 %v3363, %v3442
    %v3444 = vpop.f32.mrb[0].mxu0
    %3445 = vdwg.mxu0
    %v3446 = vmax.f32 %v3438, 0.0
    %v3447 = vmax.f32 %v3443, 0.0
    %v3449 = vlaneseq
    %v3450 = vshrl.u32 %v3449, 7
    %v3451 = vsub.s32 0, %v3450
    %v3452 = vrot.slane %v3358, %v3451
    %v3455 = vsel %vm554, %v3446, 0
    %v3458 = vsel %vm554, %v3447, 0
    %3460 = vmatprep.subr.mxu0 0.0
    %3461 = vmatpush1.msra.mxu0 %v3354
    %3462 = vmatprep.subr.mxu0 0.0
    %3463 = vmatpush1.msra.mxu0 %v3355
    %3464 = vmatprep.subr.mxu0 0.0
    %3465 = vmatpush1.msra.mxu0 %v3356
    %3466 = vmatprep.subr.mxu0 0.0
    %3467 = vmatpush1.msra.mxu0 %v3357
    %3468 = vmatprep.subr.mxu0 0.0
    %3469 = vmatpush1.msra.mxu0 0.0
    %3470 = vmatprep.subr.mxu0 0.0
    %3471 = vmatpush1.msra.mxu0 0.0
    %3472 = vmatprep.subr.mxu0 0.0
    %3473 = vmatpush1.msra.mxu0 0.0
    %3474 = vmatprep.subr.mxu0 0.0
    %3475 = vmatpush1.msra.mxu0 0.0
    %3476 = vmatprep.subr.mxu0 0.0
    %3477 = vmatpush1.msra.mxu0 0.0
    %3478 = vmatprep.subr.mxu0 0.0
    %3479 = vmatpush1.msra.mxu0 0.0
    %3480 = vmatprep.subr.mxu0 0.0
    %3481 = vmatpush1.msra.mxu0 0.0
    %3482 = vmatprep.subr.mxu0 0.0
    %3483 = vmatpush1.msra.mxu0 0.0
    %3484 = vmatprep.subr.mxu0 0.0
    %3485 = vmatpush1.msra.mxu0 0.0
    %3486 = vmatprep.subr.mxu0 0.0
    %3487 = vmatpush1.msra.mxu0 0.0
    %3488 = vmatprep.subr.mxu0 0.0
    %3489 = vmatpush1.msra.mxu0 0.0
    %3490 = vmatprep.subr.mxu0 0.0
    %3491 = vmatpush1.msra.mxu0 0.0
    %3492 = vmatprep.subr.mxu0 0.0
    %3493 = vmatpush1.msra.mxu0 0.0
    %3494 = vmatprep.subr.mxu0 0.0
    %3495 = vmatpush1.msra.mxu0 0.0
    %3496 = vmatprep.subr.mxu0 0.0
    %3497 = vmatpush1.msra.mxu0 0.0
    %3498 = vmatprep.subr.mxu0 0.0
    %3499 = vmatpush1.msra.mxu0 0.0
    %3500 = vmatprep.subr.mxu0 0.0
    %3501 = vmatpush1.msra.mxu0 0.0
    %3502 = vmatprep.subr.mxu0 0.0
    %3503 = vmatpush1.msra.mxu0 0.0
    %3504 = vmatprep.subr.mxu0 0.0
    %3505 = vmatpush1.msra.mxu0 0.0
    %3506 = vmatprep.subr.mxu0 0.0
    %3507 = vmatpush1.msra.mxu0 0.0
    %3508 = vmatprep.subr.mxu0 0.0
    %3509 = vmatpush1.msra.mxu0 0.0
    %3510 = vmatprep.subr.mxu0 0.0
    %3511 = vmatpush1.msra.mxu0 0.0
    %3512 = vmatprep.subr.mxu0 0.0
    %3513 = vmatpush1.msra.mxu0 0.0
    %3514 = vmatprep.subr.mxu0 0.0
    %3515 = vmatpush1.msra.mxu0 0.0
    %3516 = vmatprep.subr.mxu0 0.0
    %3517 = vmatpush1.msra.mxu0 0.0
    %3518 = vmatprep.subr.mxu0 0.0
    %3519 = vmatpush1.msra.mxu0 0.0
    %3520 = vmatprep.subr.mxu0 0.0
    %3521 = vmatpush1.msra.mxu0 0.0
    %3522 = vmatprep.subr.mxu0 0.0
    %3523 = vmatpush1.msra.mxu0 0.0
    %3524 = vmatprep.mubr.f32.mxu0 0.0
    %3525 = vmatmul.mubr.f32.gmra.mrb[0].mxu0 %v3455
    %v3526 = vpop.f32.mrb[0].mxu0
    %v3527 = vadd.f32 %v3452, %v3526
    %v3528 = vpop.f32.mrb[0].mxu0
    %3529 = vmatprep.mubr.f32.mxu0 0.0
    %3530 = vmatmul.mubr.f32.gmra.mrb[0].mxu0 %v3458
    %v3531 = vpop.f32.mrb[0].mxu0
    %v3532 = vadd.f32 %v3452, %v3531
    %v3533 = vpop.f32.mrb[0].mxu0
    %3534 = vdwg.mxu0
    %v3535 = vmax.f32 %v3527, 0.0
    %v3536 = vmax.f32 %v3532, 0.0
    %s3537 = scalar_lea.vmem %s25, 32
    %v3538 = vld [vmem:[%s3537] sm:$0xff]
    %v3539 = vld [vmem:[%s3537 + $0x8] sm:$0xff]
    %v3540 = vld [vmem:[%s3537 + $0x10] sm:$0xff]
    %v3541 = vld [vmem:[%s3537 + $0x18] sm:$0xff]
    %s3542 = scalar_lea.vmem [#allocation19], 1
    %v3543 = vld [vmem:[%s3542] sm:$0x1]
    %v3545 = vlaneseq
    %v3546 = vshrl.u32 %v3545, 7
    %v3547 = vsub.s32 0, %v3546
    %v3548 = vrot.slane %v3543, %v3547
    %v3551 = vsel %vm554, %v3348, 0
    %3553 = vmatprep.subr.mxu0 0.0
    %3554 = vmatpush1.msra.mxu0 %v3538
    %3555 = vmatprep.subr.mxu0 0.0
    %3556 = vmatpush1.msra.mxu0 %v3539
    %3557 = vmatprep.subr.mxu0 0.0
    %3558 = vmatpush1.msra.mxu0 %v3540
    %3559 = vmatprep.subr.mxu0 0.0
    %3560 = vmatpush1.msra.mxu0 %v3541
    %3561 = vmatprep.subr.mxu0 0.0
    %3562 = vmatpush1.msra.mxu0 0.0
    %3563 = vmatprep.subr.mxu0 0.0
    %3564 = vmatpush1.msra.mxu0 0.0
    %3565 = vmatprep.subr.mxu0 0.0
    %3566 = vmatpush1.msra.mxu0 0.0
    %3567 = vmatprep.subr.mxu0 0.0
    %3568 = vmatpush1.msra.mxu0 0.0
    %3569 = vmatprep.subr.mxu0 0.0
    %3570 = vmatpush1.msra.mxu0 0.0
    %3571 = vmatprep.subr.mxu0 0.0
    %3572 = vmatpush1.msra.mxu0 0.0
    %3573 = vmatprep.subr.mxu0 0.0
    %3574 = vmatpush1.msra.mxu0 0.0
    %3575 = vmatprep.subr.mxu0 0.0
    %3576 = vmatpush1.msra.mxu0 0.0
    %3577 = vmatprep.subr.mxu0 0.0
    %3578 = vmatpush1.msra.mxu0 0.0
    %3579 = vmatprep.subr.mxu0 0.0
    %3580 = vmatpush1.msra.mxu0 0.0
    %3581 = vmatprep.subr.mxu0 0.0
    %3582 = vmatpush1.msra.mxu0 0.0
    %3583 = vmatprep.subr.mxu0 0.0
    %3584 = vmatpush1.msra.mxu0 0.0
    %3585 = vmatprep.subr.mxu0 0.0
    %3586 = vmatpush1.msra.mxu0 0.0
    %3587 = vmatprep.subr.mxu0 0.0
    %3588 = vmatpush1.msra.mxu0 0.0
    %3589 = vmatprep.subr.mxu0 0.0
    %3590 = vmatpush1.msra.mxu0 0.0
    %3591 = vmatprep.subr.mxu0 0.0
    %3592 = vmatpush1.msra.mxu0 0.0
    %3593 = vmatprep.subr.mxu0 0.0
    %3594 = vmatpush1.msra.mxu0 0.0
    %3595 = vmatprep.subr.mxu0 0.0
    %3596 = vmatpush1.msra.mxu0 0.0
    %3597 = vmatprep.subr.mxu0 0.0
    %3598 = vmatpush1.msra.mxu0 0.0
    %3599 = vmatprep.subr.mxu0 0.0
    %3600 = vmatpush1.msra.mxu0 0.0
    %3601 = vmatprep.subr.mxu0 0.0
    %3602 = vmatpush1.msra.mxu0 0.0
    %3603 = vmatprep.subr.mxu0 0.0
    %3604 = vmatpush1.msra.mxu0 0.0
    %3605 = vmatprep.subr.mxu0 0.0
    %3606 = vmatpush1.msra.mxu0 0.0
    %3607 = vmatprep.subr.mxu0 0.0
    %3608 = vmatpush1.msra.mxu0 0.0
    %3609 = vmatprep.subr.mxu0 0.0
    %3610 = vmatpush1.msra.mxu0 0.0
    %3611 = vmatprep.subr.mxu0 0.0
    %3612 = vmatpush1.msra.mxu0 0.0
    %3613 = vmatprep.subr.mxu0 0.0
    %3614 = vmatpush1.msra.mxu0 0.0
    %3615 = vmatprep.subr.mxu0 0.0
    %3616 = vmatpush1.msra.mxu0 0.0
    %3617 = vmatprep.mubr.f32.mxu0 0.0
    %3618 = vmatmul.mubr.f32.gmra.mrb[0].mxu0 %v3551
    %v3619 = vpop.f32.mrb[0].mxu0
    %v3620 = vadd.f32 %v3548, %v3619
    %v3621 = vpop.f32.mrb[0].mxu0
    %3622 = vdwg.mxu0
    %s3623 = scalar_lea.vmem [#allocation20], 32
    %v3624 = vld [vmem:[%s3623] sm:$0xff]
    %v3625 = vld [vmem:[%s3623 + $0x8] sm:$0xff]
    %v3626 = vld [vmem:[%s3623 + $0x10] sm:$0xff]
    %v3627 = vld [vmem:[%s3623 + $0x18] sm:$0xff]
    %s3628 = scalar_lea.vmem [#allocation22], 1
    %v3629 = vld [vmem:[%s3628] sm:$0x1]
    %v3631 = vlaneseq
    %v3632 = vshrl.u32 %v3631, 7
    %v3633 = vsub.s32 0, %v3632
    %v3634 = vrot.slane %v3629, %v3633
    %v3637 = vsel %vm554, %v3535, 0
    %v3640 = vsel %vm554, %v3536, 0
    %3642 = vmatprep.subr.mxu0 0.0
    %3643 = vmatpush1.msra.mxu0 %v3624
    %3644 = vmatprep.subr.mxu0 0.0
    %3645 = vmatpush1.msra.mxu0 %v3625
    %3646 = vmatprep.subr.mxu0 0.0
    %3647 = vmatpush1.msra.mxu0 %v3626
    %3648 = vmatprep.subr.mxu0 0.0
    %3649 = vmatpush1.msra.mxu0 %v3627
    %3650 = vmatprep.subr.mxu0 0.0
    %3651 = vmatpush1.msra.mxu0 0.0
    %3652 = vmatprep.subr.mxu0 0.0
    %3653 = vmatpush1.msra.mxu0 0.0
    %3654 = vmatprep.subr.mxu0 0.0
    %3655 = vmatpush1.msra.mxu0 0.0
    %3656 = vmatprep.subr.mxu0 0.0
    %3657 = vmatpush1.msra.mxu0 0.0
    %3658 = vmatprep.subr.mxu0 0.0
    %3659 = vmatpush1.msra.mxu0 0.0
    %3660 = vmatprep.subr.mxu0 0.0
    %3661 = vmatpush1.msra.mxu0 0.0
    %3662 = vmatprep.subr.mxu0 0.0
    %3663 = vmatpush1.msra.mxu0 0.0
    %3664 = vmatprep.subr.mxu0 0.0
    %3665 = vmatpush1.msra.mxu0 0.0
    %3666 = vmatprep.subr.mxu0 0.0
    %3667 = vmatpush1.msra.mxu0 0.0
    %3668 = vmatprep.subr.mxu0 0.0
    %3669 = vmatpush1.msra.mxu0 0.0
    %3670 = vmatprep.subr.mxu0 0.0
    %3671 = vmatpush1.msra.mxu0 0.0
    %3672 = vmatprep.subr.mxu0 0.0
    %3673 = vmatpush1.msra.mxu0 0.0
    %3674 = vmatprep.subr.mxu0 0.0
    %3675 = vmatpush1.msra.mxu0 0.0
    %3676 = vmatprep.subr.mxu0 0.0
    %3677 = vmatpush1.msra.mxu0 0.0
    %3678 = vmatprep.subr.mxu0 0.0
    %3679 = vmatpush1.msra.mxu0 0.0
    %3680 = vmatprep.subr.mxu0 0.0
    %3681 = vmatpush1.msra.mxu0 0.0
    %3682 = vmatprep.subr.mxu0 0.0
    %3683 = vmatpush1.msra.mxu0 0.0
    %3684 = vmatprep.subr.mxu0 0.0
    %3685 = vmatpush1.msra.mxu0 0.0
    %3686 = vmatprep.subr.mxu0 0.0
    %3687 = vmatpush1.msra.mxu0 0.0
    %3688 = vmatprep.subr.mxu0 0.0
    %3689 = vmatpush1.msra.mxu0 0.0
    %3690 = vmatprep.subr.mxu0 0.0
    %3691 = vmatpush1.msra.mxu0 0.0
    %3692 = vmatprep.subr.mxu0 0.0
    %3693 = vmatpush1.msra.mxu0 0.0
    %3694 = vmatprep.subr.mxu0 0.0
    %3695 = vmatpush1.msra.mxu0 0.0
    %3696 = vmatprep.subr.mxu0 0.0
    %3697 = vmatpush1.msra.mxu0 0.0
    %3698 = vmatprep.subr.mxu0 0.0
    %3699 = vmatpush1.msra.mxu0 0.0
    %3700 = vmatprep.subr.mxu0 0.0
    %3701 = vmatpush1.msra.mxu0 0.0
    %3702 = vmatprep.subr.mxu0 0.0
    %3703 = vmatpush1.msra.mxu0 0.0
    %3704 = vmatprep.subr.mxu0 0.0
    %3705 = vmatpush1.msra.mxu0 0.0
    %3706 = vmatprep.mubr.f32.mxu0 0.0
    %3707 = vmatmul.mubr.f32.gmra.mrb[0].mxu0 %v3637
    %v3708 = vpop.f32.mrb[0].mxu0
    %v3709 = vadd.f32 %v3634, %v3708
    %v3710 = vpop.f32.mrb[0].mxu0
    %3711 = vmatprep.mubr.f32.mxu0 0.0
    %3712 = vmatmul.mubr.f32.gmra.mrb[0].mxu0 %v3640
    %v3713 = vpop.f32.mrb[0].mxu0
    %v3714 = vadd.f32 %v3634, %v3713
    %v3715 = vpop.f32.mrb[0].mxu0
    %3716 = vdwg.mxu0
    %s3717 = scalar_lea.vmem [#allocation26], 32
    %v3718 = vld [vmem:[%s3717] sm:$0xff]
    %v3719 = vld [vmem:[%s3717 + $0x8] sm:$0xff]
    %v3720 = vld [vmem:[%s3717 + $0x10] sm:$0xff]
    %v3721 = vld [vmem:[%s3717 + $0x18] sm:$0xff]
    %s3722 = scalar_lea.vmem [#allocation28], 32
    %v3723 = vld [vmem:[%s3722] sm:$0xff]
    %v3724 = vld [vmem:[%s3722 + $0x8] sm:$0xff]
    %v3725 = vld [vmem:[%s3722 + $0x10] sm:$0xff]
    %v3726 = vld [vmem:[%s3722 + $0x18] sm:$0xff]
    %v3728 = vsel %vm554, %v3709, 0
    %v3731 = vsel %vm554, %v3714, 0
    %3733 = vmatprep.subr.mxu0 0.0
    %3734 = vmatpush1.msra.mxu0 %v3718
    %3735 = vmatprep.subr.mxu0 0.0
    %3736 = vmatpush1.msra.mxu0 %v3719
    %3737 = vmatprep.subr.mxu0 0.0
    %3738 = vmatpush1.msra.mxu0 %v3720
    %3739 = vmatprep.subr.mxu0 0.0
    %3740 = vmatpush1.msra.mxu0 %v3721
    %3741 = vmatprep.subr.mxu0 0.0
    %3742 = vmatpush1.msra.mxu0 0.0
    %3743 = vmatprep.subr.mxu0 0.0
    %3744 = vmatpush1.msra.mxu0 0.0
    %3745 = vmatprep.subr.mxu0 0.0
    %3746 = vmatpush1.msra.mxu0 0.0
    %3747 = vmatprep.subr.mxu0 0.0
    %3748 = vmatpush1.msra.mxu0 0.0
    %3749 = vmatprep.subr.mxu0 0.0
    %3750 = vmatpush1.msra.mxu0 0.0
    %3751 = vmatprep.subr.mxu0 0.0
    %3752 = vmatpush1.msra.mxu0 0.0
    %3753 = vmatprep.subr.mxu0 0.0
    %3754 = vmatpush1.msra.mxu0 0.0
    %3755 = vmatprep.subr.mxu0 0.0
    %3756 = vmatpush1.msra.mxu0 0.0
    %3757 = vmatprep.subr.mxu0 0.0
    %3758 = vmatpush1.msra.mxu0 0.0
    %3759 = vmatprep.subr.mxu0 0.0
    %3760 = vmatpush1.msra.mxu0 0.0
    %3761 = vmatprep.subr.mxu0 0.0
    %3762 = vmatpush1.msra.mxu0 0.0
    %3763 = vmatprep.subr.mxu0 0.0
    %3764 = vmatpush1.msra.mxu0 0.0
    %3765 = vmatprep.subr.mxu0 0.0
    %3766 = vmatpush1.msra.mxu0 0.0
    %3767 = vmatprep.subr.mxu0 0.0
    %3768 = vmatpush1.msra.mxu0 0.0
    %3769 = vmatprep.subr.mxu0 0.0
    %3770 = vmatpush1.msra.mxu0 0.0
    %3771 = vmatprep.subr.mxu0 0.0
    %3772 = vmatpush1.msra.mxu0 0.0
    %3773 = vmatprep.subr.mxu0 0.0
    %3774 = vmatpush1.msra.mxu0 0.0
    %3775 = vmatprep.subr.mxu0 0.0
    %3776 = vmatpush1.msra.mxu0 0.0
    %3777 = vmatprep.subr.mxu0 0.0
    %3778 = vmatpush1.msra.mxu0 0.0
    %3779 = vmatprep.subr.mxu0 0.0
    %3780 = vmatpush1.msra.mxu0 0.0
    %3781 = vmatprep.subr.mxu0 0.0
    %3782 = vmatpush1.msra.mxu0 0.0
    %3783 = vmatprep.subr.mxu0 0.0
    %3784 = vmatpush1.msra.mxu0 0.0
    %3785 = vmatprep.subr.mxu0 0.0
    %3786 = vmatpush1.msra.mxu0 0.0
    %3787 = vmatprep.subr.mxu0 0.0
    %3788 = vmatpush1.msra.mxu0 0.0
    %3789 = vmatprep.subr.mxu0 0.0
    %3790 = vmatpush1.msra.mxu0 0.0
    %3791 = vmatprep.subr.mxu0 0.0
    %3792 = vmatpush1.msra.mxu0 0.0
    %3793 = vmatprep.subr.mxu0 0.0
    %3794 = vmatpush1.msra.mxu0 0.0
    %3795 = vmatprep.subr.mxu0 0.0
    %3796 = vmatpush1.msra.mxu0 0.0
    %3797 = vmatprep.mubr.f32.mxu0 0.0
    %3798 = vmatmul.mubr.f32.gmra.mrb[0].mxu0 %v3728
    %v3799 = vpop.f32.mrb[0].mxu0
    %v3800 = vadd.f32 0.0, %v3799
    %v3801 = vpop.f32.mrb[0].mxu0
    %3802 = vmatprep.mubr.f32.mxu0 0.0
    %3803 = vmatmul.mubr.f32.gmra.mrb[0].mxu0 %v3731
    %v3804 = vpop.f32.mrb[0].mxu0
    %v3805 = vadd.f32 0.0, %v3804
    %v3806 = vpop.f32.mrb[0].mxu0
    %3807 = vdwg.mxu0
    %3808 = vrot.lane.b32.xlu0 %v3709, 64
    %v3809 = vpop.permute.xlu0 %3808
    %3810 = vrot.lane.b32.xlu0 %v3714, 64
    %v3811 = vpop.permute.xlu0 %3810
    %v3812 = vsel %vm554, %v3809, 0
    %v3814 = vsel %vm554, %v3811, 0
    %3816 = vmatprep.subr.mxu0 0.0
    %3817 = vmatpush1.msra.mxu0 %v3723
    %3818 = vmatprep.subr.mxu0 0.0
    %3819 = vmatpush1.msra.mxu0 %v3724
    %3820 = vmatprep.subr.mxu0 0.0
    %3821 = vmatpush1.msra.mxu0 %v3725
    %3822 = vmatprep.subr.mxu0 0.0
    %3823 = vmatpush1.msra.mxu0 %v3726
    %3824 = vmatprep.subr.mxu0 0.0
    %3825 = vmatpush1.msra.mxu0 0.0
    %3826 = vmatprep.subr.mxu0 0.0
    %3827 = vmatpush1.msra.mxu0 0.0
    %3828 = vmatprep.subr.mxu0 0.0
    %3829 = vmatpush1.msra.mxu0 0.0
    %3830 = vmatprep.subr.mxu0 0.0
    %3831 = vmatpush1.msra.mxu0 0.0
    %3832 = vmatprep.subr.mxu0 0.0
    %3833 = vmatpush1.msra.mxu0 0.0
    %3834 = vmatprep.subr.mxu0 0.0
    %3835 = vmatpush1.msra.mxu0 0.0
    %3836 = vmatprep.subr.mxu0 0.0
    %3837 = vmatpush1.msra.mxu0 0.0
    %3838 = vmatprep.subr.mxu0 0.0
    %3839 = vmatpush1.msra.mxu0 0.0
    %3840 = vmatprep.subr.mxu0 0.0
    %3841 = vmatpush1.msra.mxu0 0.0
    %3842 = vmatprep.subr.mxu0 0.0
    %3843 = vmatpush1.msra.mxu0 0.0
    %3844 = vmatprep.subr.mxu0 0.0
    %3845 = vmatpush1.msra.mxu0 0.0
    %3846 = vmatprep.subr.mxu0 0.0
    %3847 = vmatpush1.msra.mxu0 0.0
    %3848 = vmatprep.subr.mxu0 0.0
    %3849 = vmatpush1.msra.mxu0 0.0
    %3850 = vmatprep.subr.mxu0 0.0
    %3851 = vmatpush1.msra.mxu0 0.0
    %3852 = vmatprep.subr.mxu0 0.0
    %3853 = vmatpush1.msra.mxu0 0.0
    %3854 = vmatprep.subr.mxu0 0.0
    %3855 = vmatpush1.msra.mxu0 0.0
    %3856 = vmatprep.subr.mxu0 0.0
    %3857 = vmatpush1.msra.mxu0 0.0
    %3858 = vmatprep.subr.mxu0 0.0
    %3859 = vmatpush1.msra.mxu0 0.0
    %3860 = vmatprep.subr.mxu0 0.0
    %3861 = vmatpush1.msra.mxu0 0.0
    %3862 = vmatprep.subr.mxu0 0.0
    %3863 = vmatpush1.msra.mxu0 0.0
    %3864 = vmatprep.subr.mxu0 0.0
    %3865 = vmatpush1.msra.mxu0 0.0
    %3866 = vmatprep.subr.mxu0 0.0
    %3867 = vmatpush1.msra.mxu0 0.0
    %3868 = vmatprep.subr.mxu0 0.0
    %3869 = vmatpush1.msra.mxu0 0.0
    %3870 = vmatprep.subr.mxu0 0.0
    %3871 = vmatpush1.msra.mxu0 0.0
    %3872 = vmatprep.subr.mxu0 0.0
    %3873 = vmatpush1.msra.mxu0 0.0
    %3874 = vmatprep.subr.mxu0 0.0
    %3875 = vmatpush1.msra.mxu0 0.0
    %3876 = vmatprep.subr.mxu0 0.0
    %3877 = vmatpush1.msra.mxu0 0.0
    %3878 = vmatprep.subr.mxu0 0.0
    %3879 = vmatpush1.msra.mxu0 0.0
    %3880 = vmatprep.mubr.f32.mxu0 0.0
    %3881 = vmatmul.mubr.f32.gmra.mrb[0].mxu0 %v3812
    %v3882 = vpop.f32.mrb[0].mxu0
    %v3883 = vadd.f32 0.0, %v3882
    %v3884 = vpop.f32.mrb[0].mxu0
    %3885 = vmatprep.mubr.f32.mxu0 0.0
    %3886 = vmatmul.mubr.f32.gmra.mrb[0].mxu0 %v3814
    %v3887 = vpop.f32.mrb[0].mxu0
    %v3888 = vadd.f32 0.0, %v3887
    %v3889 = vpop.f32.mrb[0].mxu0
    %3890 = vdwg.mxu0
    %3892 = vrot.lane.b32.xlu0 %v3620, 96
    %v3893 = vpop.permute.xlu0 %3892
    %v3894 = vsel %vm1161, %v3893, 0
    %v3897 = vsel %vm1161, %v3800, 0
    %v3900 = vsel %vm1161, %v3805, 0
    %3902 = vmatprep.subr.mxu0 0.0
    %3903 = vmatpush1.xpose.msra.mxu0 %v3897
    %3904 = vmatprep.subr.mxu0 0.0
    %3905 = vmatpush1.xpose.msra.mxu0 %v3900
    %3906 = vmatprep.subr.mxu0 0.0
    %3907 = vmatpush1.xpose.msra.mxu0 0.0
    %3908 = vmatprep.subr.mxu0 0.0
    %3909 = vmatpush1.xpose.msra.mxu0 0.0
    %3910 = vmatprep.subr.mxu0 0.0
    %3911 = vmatpush1.xpose.msra.mxu0 0.0
    %3912 = vmatprep.subr.mxu0 0.0
    %3913 = vmatpush1.xpose.msra.mxu0 0.0
    %3914 = vmatprep.subr.mxu0 0.0
    %3915 = vmatpush1.xpose.msra.mxu0 0.0
    %3916 = vmatprep.subr.mxu0 0.0
    %3917 = vmatpush1.xpose.msra.mxu0 0.0
    %3918 = vmatprep.subr.mxu0 0.0
    %3919 = vmatpush1.xpose.msra.mxu0 0.0
    %3920 = vmatprep.subr.mxu0 0.0
    %3921 = vmatpush1.xpose.msra.mxu0 0.0
    %3922 = vmatprep.subr.mxu0 0.0
    %3923 = vmatpush1.xpose.msra.mxu0 0.0
    %3924 = vmatprep.subr.mxu0 0.0
    %3925 = vmatpush1.xpose.msra.mxu0 0.0
    %3926 = vmatprep.subr.mxu0 0.0
    %3927 = vmatpush1.xpose.msra.mxu0 0.0
    %3928 = vmatprep.subr.mxu0 0.0
    %3929 = vmatpush1.xpose.msra.mxu0 0.0
    %3930 = vmatprep.subr.mxu0 0.0
    %3931 = vmatpush1.xpose.msra.mxu0 0.0
    %3932 = vmatprep.subr.mxu0 0.0
    %3933 = vmatpush1.xpose.msra.mxu0 0.0
    %3934 = vmatprep.subr.mxu0 0.0
    %3935 = vmatpush1.xpose.msra.mxu0 0.0
    %3936 = vmatprep.subr.mxu0 0.0
    %3937 = vmatpush1.xpose.msra.mxu0 0.0
    %3938 = vmatprep.subr.mxu0 0.0
    %3939 = vmatpush1.xpose.msra.mxu0 0.0
    %3940 = vmatprep.subr.mxu0 0.0
    %3941 = vmatpush1.xpose.msra.mxu0 0.0
    %3942 = vmatprep.subr.mxu0 0.0
    %3943 = vmatpush1.xpose.msra.mxu0 0.0
    %3944 = vmatprep.subr.mxu0 0.0
    %3945 = vmatpush1.xpose.msra.mxu0 0.0
    %3946 = vmatprep.subr.mxu0 0.0
    %3947 = vmatpush1.xpose.msra.mxu0 0.0
    %3948 = vmatprep.subr.mxu0 0.0
    %3949 = vmatpush1.xpose.msra.mxu0 0.0
    %3950 = vmatprep.subr.mxu0 0.0
    %3951 = vmatpush1.xpose.msra.mxu0 0.0
    %3952 = vmatprep.subr.mxu0 0.0
    %3953 = vmatpush1.xpose.msra.mxu0 0.0
    %3954 = vmatprep.subr.mxu0 0.0
    %3955 = vmatpush1.xpose.msra.mxu0 0.0
    %3956 = vmatprep.subr.mxu0 0.0
    %3957 = vmatpush1.xpose.msra.mxu0 0.0
    %3958 = vmatprep.subr.mxu0 0.0
    %3959 = vmatpush1.xpose.msra.mxu0 0.0
    %3960 = vmatprep.subr.mxu0 0.0
    %3961 = vmatpush1.xpose.msra.mxu0 0.0
    %3962 = vmatprep.subr.mxu0 0.0
    %3963 = vmatpush1.xpose.msra.mxu0 0.0
    %3964 = vmatprep.subr.mxu0 0.0
    %3965 = vmatpush1.xpose.msra.mxu0 0.0
    %3966 = vmatprep.mubr.f32.mxu0 0.0
    %3967 = vmatmul.mubr.f32.gmra.mrb[0].mxu0 %v3894
    %v3968 = vpop.f32.mrb[0].mxu0
    %v3969 = vadd.f32 0.0, %v3968
    %v3970 = vpop.f32.mrb[0].mxu0
    %3971 = vdwg.mxu0
    %v3972 = vsel %vm2159, %v3969, -1e+30
    %v3973 = vsel %vm473, %v3972, -inf
    %3974 = vmax.xlane.f32.xlu0 %v3973
    %v3975 = vpop.xlane.xlu0 %3974
    %v3976 = vsub.f32 %v3972, %v3975
    %v3977 = vmul.f32 %v3976, 1.442695
    %v3978 = vpow.pop %v3977
    %v3979 = vsel %vm2159, %v3978, 0.0
    %v3980 = vsel %vm473, %v3979, 0.0
    %3981 = vadd.xlane.f32.xlu0 %v3980
    %v3982 = vpop.xlane.xlu0 %3981
    %vm3983 = vcmp.gt.f32.partialorder %v3982, 0.0
    %v3984 = vsel %vm3983, %v3982, 1.0
    %v3985 = vrcp.pop %v3984
    %v3986 = vmul.f32 %v3979, %v3985
    %v3988 = vsel %vm473, %v3986, 0
    %3990 = vmatprep.subr.mxu0 0.0
    %3991 = vmatpush1.msra.mxu0 %v3883
    %3992 = vmatprep.subr.mxu0 0.0
    %3993 = vmatpush1.msra.mxu0 %v3888
    %3994 = vmatprep.subr.mxu0 0.0
    %3995 = vmatpush1.msra.mxu0 0.0
    %3996 = vmatprep.subr.mxu0 0.0
    %3997 = vmatpush1.msra.mxu0 0.0
    %3998 = vmatprep.subr.mxu0 0.0
    %3999 = vmatpush1.msra.mxu0 0.0
    %4000 = vmatprep.subr.mxu0 0.0
    %4001 = vmatpush1.msra.mxu0 0.0
    %4002 = vmatprep.subr.mxu0 0.0
    %4003 = vmatpush1.msra.mxu0 0.0
    %4004 = vmatprep.subr.mxu0 0.0
    %4005 = vmatpush1.msra.mxu0 0.0
    %4006 = vmatprep.subr.mxu0 0.0
    %4007 = vmatpush1.msra.mxu0 0.0
    %4008 = vmatprep.subr.mxu0 0.0
    %4009 = vmatpush1.msra.mxu0 0.0
    %4010 = vmatprep.subr.mxu0 0.0
    %4011 = vmatpush1.msra.mxu0 0.0
    %4012 = vmatprep.subr.mxu0 0.0
    %4013 = vmatpush1.msra.mxu0 0.0
    %4014 = vmatprep.subr.mxu0 0.0
    %4015 = vmatpush1.msra.mxu0 0.0
    %4016 = vmatprep.subr.mxu0 0.0
    %4017 = vmatpush1.msra.mxu0 0.0
    %4018 = vmatprep.subr.mxu0 0.0
    %4019 = vmatpush1.msra.mxu0 0.0
    %4020 = vmatprep.subr.mxu0 0.0
    %4021 = vmatpush1.msra.mxu0 0.0
    %4022 = vmatprep.subr.mxu0 0.0
    %4023 = vmatpush1.msra.mxu0 0.0
    %4024 = vmatprep.subr.mxu0 0.0
    %4025 = vmatpush1.msra.mxu0 0.0
    %4026 = vmatprep.subr.mxu0 0.0
    %4027 = vmatpush1.msra.mxu0 0.0
    %4028 = vmatprep.subr.mxu0 0.0
    %4029 = vmatpush1.msra.mxu0 0.0
    %4030 = vmatprep.subr.mxu0 0.0
    %4031 = vmatpush1.msra.mxu0 0.0
    %4032 = vmatprep.subr.mxu0 0.0
    %4033 = vmatpush1.msra.mxu0 0.0
    %4034 = vmatprep.subr.mxu0 0.0
    %4035 = vmatpush1.msra.mxu0 0.0
    %4036 = vmatprep.subr.mxu0 0.0
    %4037 = vmatpush1.msra.mxu0 0.0
    %4038 = vmatprep.subr.mxu0 0.0
    %4039 = vmatpush1.msra.mxu0 0.0
    %4040 = vmatprep.subr.mxu0 0.0
    %4041 = vmatpush1.msra.mxu0 0.0
    %4042 = vmatprep.subr.mxu0 0.0
    %4043 = vmatpush1.msra.mxu0 0.0
    %4044 = vmatprep.subr.mxu0 0.0
    %4045 = vmatpush1.msra.mxu0 0.0
    %4046 = vmatprep.subr.mxu0 0.0
    %4047 = vmatpush1.msra.mxu0 0.0
    %4048 = vmatprep.subr.mxu0 0.0
    %4049 = vmatpush1.msra.mxu0 0.0
    %4050 = vmatprep.subr.mxu0 0.0
    %4051 = vmatpush1.msra.mxu0 0.0
    %4052 = vmatprep.subr.mxu0 0.0
    %4053 = vmatpush1.msra.mxu0 0.0
    %4054 = vmatprep.mubr.f32.mxu0 0.0
    %4055 = vmatmul.mubr.f32.gmra.mrb[0].mxu0 %v3988
    %v4056 = vpop.f32.mrb[0].mxu0
    %v4057 = vadd.f32 0.0, %v4056
    %v4058 = vpop.f32.mrb[0].mxu0
    %4059 = vdwg.mxu0
    %4060 = vrot.lane.b32.xlu0 %v3620, 88
    %v4061 = vpop.permute.xlu0 %4060
    %4062 = vrot.lane.b32.xlu0 %v3800, 120
    %v4063 = vpop.permute.xlu0 %4062
    %4064 = vrot.lane.b32.xlu0 %v3805, 120
    %v4065 = vpop.permute.xlu0 %4064
    %v4066 = vsel %vm1161, %v4061, 0
    %v4068 = vsel %vm1161, %v4063, 0
    %v4070 = vsel %vm1161, %v4065, 0
    %4072 = vmatprep.subr.mxu0 0.0
    %4073 = vmatpush1.xpose.msra.mxu0 %v4068
    %4074 = vmatprep.subr.mxu0 0.0
    %4075 = vmatpush1.xpose.msra.mxu0 %v4070
    %4076 = vmatprep.subr.mxu0 0.0
    %4077 = vmatpush1.xpose.msra.mxu0 0.0
    %4078 = vmatprep.subr.mxu0 0.0
    %4079 = vmatpush1.xpose.msra.mxu0 0.0
    %4080 = vmatprep.subr.mxu0 0.0
    %4081 = vmatpush1.xpose.msra.mxu0 0.0
    %4082 = vmatprep.subr.mxu0 0.0
    %4083 = vmatpush1.xpose.msra.mxu0 0.0
    %4084 = vmatprep.subr.mxu0 0.0
    %4085 = vmatpush1.xpose.msra.mxu0 0.0
    %4086 = vmatprep.subr.mxu0 0.0
    %4087 = vmatpush1.xpose.msra.mxu0 0.0
    %4088 = vmatprep.subr.mxu0 0.0
    %4089 = vmatpush1.xpose.msra.mxu0 0.0
    %4090 = vmatprep.subr.mxu0 0.0
    %4091 = vmatpush1.xpose.msra.mxu0 0.0
    %4092 = vmatprep.subr.mxu0 0.0
    %4093 = vmatpush1.xpose.msra.mxu0 0.0
    %4094 = vmatprep.subr.mxu0 0.0
    %4095 = vmatpush1.xpose.msra.mxu0 0.0
    %4096 = vmatprep.subr.mxu0 0.0
    %4097 = vmatpush1.xpose.msra.mxu0 0.0
    %4098 = vmatprep.subr.mxu0 0.0
    %4099 = vmatpush1.xpose.msra.mxu0 0.0
    %4100 = vmatprep.subr.mxu0 0.0
    %4101 = vmatpush1.xpose.msra.mxu0 0.0
    %4102 = vmatprep.subr.mxu0 0.0
    %4103 = vmatpush1.xpose.msra.mxu0 0.0
    %4104 = vmatprep.subr.mxu0 0.0
    %4105 = vmatpush1.xpose.msra.mxu0 0.0
    %4106 = vmatprep.subr.mxu0 0.0
    %4107 = vmatpush1.xpose.msra.mxu0 0.0
    %4108 = vmatprep.subr.mxu0 0.0
    %4109 = vmatpush1.xpose.msra.mxu0 0.0
    %4110 = vmatprep.subr.mxu0 0.0
    %4111 = vmatpush1.xpose.msra.mxu0 0.0
    %4112 = vmatprep.subr.mxu0 0.0
    %4113 = vmatpush1.xpose.msra.mxu0 0.0
    %4114 = vmatprep.subr.mxu0 0.0
    %4115 = vmatpush1.xpose.msra.mxu0 0.0
    %4116 = vmatprep.subr.mxu0 0.0
    %4117 = vmatpush1.xpose.msra.mxu0 0.0
    %4118 = vmatprep.subr.mxu0 0.0
    %4119 = vmatpush1.xpose.msra.mxu0 0.0
    %4120 = vmatprep.subr.mxu0 0.0
    %4121 = vmatpush1.xpose.msra.mxu0 0.0
    %4122 = vmatprep.subr.mxu0 0.0
    %4123 = vmatpush1.xpose.msra.mxu0 0.0
    %4124 = vmatprep.subr.mxu0 0.0
    %4125 = vmatpush1.xpose.msra.mxu0 0.0
    %4126 = vmatprep.subr.mxu0 0.0
    %4127 = vmatpush1.xpose.msra.mxu0 0.0
    %4128 = vmatprep.subr.mxu0 0.0
    %4129 = vmatpush1.xpose.msra.mxu0 0.0
    %4130 = vmatprep.subr.mxu0 0.0
    %4131 = vmatpush1.xpose.msra.mxu0 0.0
    %4132 = vmatprep.subr.mxu0 0.0
    %4133 = vmatpush1.xpose.msra.mxu0 0.0
    %4134 = vmatprep.subr.mxu0 0.0
    %4135 = vmatpush1.xpose.msra.mxu0 0.0
    %4136 = vmatprep.mubr.f32.mxu0 0.0
    %4137 = vmatmul.mubr.f32.gmra.mrb[0].mxu0 %v4066
    %v4138 = vpop.f32.mrb[0].mxu0
    %v4139 = vadd.f32 0.0, %v4138
    %v4140 = vpop.f32.mrb[0].mxu0
    %4141 = vdwg.mxu0
    %v4142 = vsel %vm2159, %v4139, -1e+30
    %v4143 = vsel %vm473, %v4142, -inf
    %4144 = vmax.xlane.f32.xlu0 %v4143
    %v4145 = vpop.xlane.xlu0 %4144
    %v4146 = vsub.f32 %v4142, %v4145
    %v4147 = vmul.f32 %v4146, 1.442695
    %v4148 = vpow.pop %v4147
    %v4149 = vsel %vm2159, %v4148, 0.0
    %v4150 = vsel %vm473, %v4149, 0.0
    %4151 = vadd.xlane.f32.xlu0 %v4150
    %v4152 = vpop.xlane.xlu0 %4151
    %vm4153 = vcmp.gt.f32.partialorder %v4152, 0.0
    %v4154 = vsel %vm4153, %v4152, 1.0
    %v4155 = vrcp.pop %v4154
    %v4156 = vmul.f32 %v4149, %v4155
    %4159 = vrot.lane.b32.xlu0 %v3883, 120
    %v4160 = vpop.permute.xlu0 %4159
    %4161 = vrot.lane.b32.xlu0 %v3888, 120
    %v4162 = vpop.permute.xlu0 %4161
    %v4166 = vsel %vm473, %v4156, 0
    %4168 = vmatprep.subr.mxu0 0.0
    %4169 = vmatpush1.msra.mxu0 %v4160
    %4170 = vmatprep.subr.mxu0 0.0
    %4171 = vmatpush1.msra.mxu0 %v4162
    %4172 = vmatprep.subr.mxu0 0.0
    %4173 = vmatpush1.msra.mxu0 0.0
    %4174 = vmatprep.subr.mxu0 0.0
    %4175 = vmatpush1.msra.mxu0 0.0
    %4176 = vmatprep.subr.mxu0 0.0
    %4177 = vmatpush1.msra.mxu0 0.0
    %4178 = vmatprep.subr.mxu0 0.0
    %4179 = vmatpush1.msra.mxu0 0.0
    %4180 = vmatprep.subr.mxu0 0.0
    %4181 = vmatpush1.msra.mxu0 0.0
    %4182 = vmatprep.subr.mxu0 0.0
    %4183 = vmatpush1.msra.mxu0 0.0
    %4184 = vmatprep.subr.mxu0 0.0
    %4185 = vmatpush1.msra.mxu0 0.0
    %4186 = vmatprep.subr.mxu0 0.0
    %4187 = vmatpush1.msra.mxu0 0.0
    %4188 = vmatprep.subr.mxu0 0.0
    %4189 = vmatpush1.msra.mxu0 0.0
    %4190 = vmatprep.subr.mxu0 0.0
    %4191 = vmatpush1.msra.mxu0 0.0
    %4192 = vmatprep.subr.mxu0 0.0
    %4193 = vmatpush1.msra.mxu0 0.0
    %4194 = vmatprep.subr.mxu0 0.0
    %4195 = vmatpush1.msra.mxu0 0.0
    %4196 = vmatprep.subr.mxu0 0.0
    %4197 = vmatpush1.msra.mxu0 0.0
    %4198 = vmatprep.subr.mxu0 0.0
    %4199 = vmatpush1.msra.mxu0 0.0
    %4200 = vmatprep.subr.mxu0 0.0
    %4201 = vmatpush1.msra.mxu0 0.0
    %4202 = vmatprep.subr.mxu0 0.0
    %4203 = vmatpush1.msra.mxu0 0.0
    %4204 = vmatprep.subr.mxu0 0.0
    %4205 = vmatpush1.msra.mxu0 0.0
    %4206 = vmatprep.subr.mxu0 0.0
    %4207 = vmatpush1.msra.mxu0 0.0
    %4208 = vmatprep.subr.mxu0 0.0
    %4209 = vmatpush1.msra.mxu0 0.0
    %4210 = vmatprep.subr.mxu0 0.0
    %4211 = vmatpush1.msra.mxu0 0.0
    %4212 = vmatprep.subr.mxu0 0.0
    %4213 = vmatpush1.msra.mxu0 0.0
    %4214 = vmatprep.subr.mxu0 0.0
    %4215 = vmatpush1.msra.mxu0 0.0
    %4216 = vmatprep.subr.mxu0 0.0
    %4217 = vmatpush1.msra.mxu0 0.0
    %4218 = vmatprep.subr.mxu0 0.0
    %4219 = vmatpush1.msra.mxu0 0.0
    %4220 = vmatprep.subr.mxu0 0.0
    %4221 = vmatpush1.msra.mxu0 0.0
    %4222 = vmatprep.subr.mxu0 0.0
    %4223 = vmatpush1.msra.mxu0 0.0
    %4224 = vmatprep.subr.mxu0 0.0
    %4225 = vmatpush1.msra.mxu0 0.0
    %4226 = vmatprep.subr.mxu0 0.0
    %4227 = vmatpush1.msra.mxu0 0.0
    %4228 = vmatprep.subr.mxu0 0.0
    %4229 = vmatpush1.msra.mxu0 0.0
    %4230 = vmatprep.subr.mxu0 0.0
    %4231 = vmatpush1.msra.mxu0 0.0
    %4232 = vmatprep.mubr.f32.mxu0 0.0
    %4233 = vmatmul.mubr.f32.gmra.mrb[0].mxu0 %v4166
    %v4234 = vpop.f32.mrb[0].mxu0
    %v4235 = vadd.f32 0.0, %v4234
    %v4236 = vpop.f32.mrb[0].mxu0
    %4237 = vdwg.mxu0
    %4238 = vrot.lane.b32.xlu0 %v3620, 80
    %v4239 = vpop.permute.xlu0 %4238
    %4240 = vrot.lane.b32.xlu0 %v3800, 112
    %v4241 = vpop.permute.xlu0 %4240
    %4242 = vrot.lane.b32.xlu0 %v3805, 112
    %v4243 = vpop.permute.xlu0 %4242
    %v4244 = vsel %vm1161, %v4239, 0
    %v4246 = vsel %vm1161, %v4241, 0
    %v4248 = vsel %vm1161, %v4243, 0
    %4250 = vmatprep.subr.mxu0 0.0
    %4251 = vmatpush1.xpose.msra.mxu0 %v4246
    %4252 = vmatprep.subr.mxu0 0.0
    %4253 = vmatpush1.xpose.msra.mxu0 %v4248
    %4254 = vmatprep.subr.mxu0 0.0
    %4255 = vmatpush1.xpose.msra.mxu0 0.0
    %4256 = vmatprep.subr.mxu0 0.0
    %4257 = vmatpush1.xpose.msra.mxu0 0.0
    %4258 = vmatprep.subr.mxu0 0.0
    %4259 = vmatpush1.xpose.msra.mxu0 0.0
    %4260 = vmatprep.subr.mxu0 0.0
    %4261 = vmatpush1.xpose.msra.mxu0 0.0
    %4262 = vmatprep.subr.mxu0 0.0
    %4263 = vmatpush1.xpose.msra.mxu0 0.0
    %4264 = vmatprep.subr.mxu0 0.0
    %4265 = vmatpush1.xpose.msra.mxu0 0.0
    %4266 = vmatprep.subr.mxu0 0.0
    %4267 = vmatpush1.xpose.msra.mxu0 0.0
    %4268 = vmatprep.subr.mxu0 0.0
    %4269 = vmatpush1.xpose.msra.mxu0 0.0
    %4270 = vmatprep.subr.mxu0 0.0
    %4271 = vmatpush1.xpose.msra.mxu0 0.0
    %4272 = vmatprep.subr.mxu0 0.0
    %4273 = vmatpush1.xpose.msra.mxu0 0.0
    %4274 = vmatprep.subr.mxu0 0.0
    %4275 = vmatpush1.xpose.msra.mxu0 0.0
    %4276 = vmatprep.subr.mxu0 0.0
    %4277 = vmatpush1.xpose.msra.mxu0 0.0
    %4278 = vmatprep.subr.mxu0 0.0
    %4279 = vmatpush1.xpose.msra.mxu0 0.0
    %4280 = vmatprep.subr.mxu0 0.0
    %4281 = vmatpush1.xpose.msra.mxu0 0.0
    %4282 = vmatprep.subr.mxu0 0.0
    %4283 = vmatpush1.xpose.msra.mxu0 0.0
    %4284 = vmatprep.subr.mxu0 0.0
    %4285 = vmatpush1.xpose.msra.mxu0 0.0
    %4286 = vmatprep.subr.mxu0 0.0
    %4287 = vmatpush1.xpose.msra.mxu0 0.0
    %4288 = vmatprep.subr.mxu0 0.0
    %4289 = vmatpush1.xpose.msra.mxu0 0.0
    %4290 = vmatprep.subr.mxu0 0.0
    %4291 = vmatpush1.xpose.msra.mxu0 0.0
    %4292 = vmatprep.subr.mxu0 0.0
    %4293 = vmatpush1.xpose.msra.mxu0 0.0
    %4294 = vmatprep.subr.mxu0 0.0
    %4295 = vmatpush1.xpose.msra.mxu0 0.0
    %4296 = vmatprep.subr.mxu0 0.0
    %4297 = vmatpush1.xpose.msra.mxu0 0.0
    %4298 = vmatprep.subr.mxu0 0.0
    %4299 = vmatpush1.xpose.msra.mxu0 0.0
    %4300 = vmatprep.subr.mxu0 0.0
    %4301 = vmatpush1.xpose.msra.mxu0 0.0
    %4302 = vmatprep.subr.mxu0 0.0
    %4303 = vmatpush1.xpose.msra.mxu0 0.0
    %4304 = vmatprep.subr.mxu0 0.0
    %4305 = vmatpush1.xpose.msra.mxu0 0.0
    %4306 = vmatprep.subr.mxu0 0.0
    %4307 = vmatpush1.xpose.msra.mxu0 0.0
    %4308 = vmatprep.subr.mxu0 0.0
    %4309 = vmatpush1.xpose.msra.mxu0 0.0
    %4310 = vmatprep.subr.mxu0 0.0
    %4311 = vmatpush1.xpose.msra.mxu0 0.0
    %4312 = vmatprep.subr.mxu0 0.0
    %4313 = vmatpush1.xpose.msra.mxu0 0.0
    %4314 = vmatprep.mubr.f32.mxu0 0.0
    %4315 = vmatmul.mubr.f32.gmra.mrb[0].mxu0 %v4244
    %v4316 = vpop.f32.mrb[0].mxu0
    %v4317 = vadd.f32 0.0, %v4316
    %v4318 = vpop.f32.mrb[0].mxu0
    %4319 = vdwg.mxu0
    %v4320 = vsel %vm2159, %v4317, -1e+30
    %v4321 = vsel %vm473, %v4320, -inf
    %4322 = vmax.xlane.f32.xlu0 %v4321
    %v4323 = vpop.xlane.xlu0 %4322
    %v4324 = vsub.f32 %v4320, %v4323
    %v4325 = vmul.f32 %v4324, 1.442695
    %v4326 = vpow.pop %v4325
    %v4327 = vsel %vm2159, %v4326, 0.0
    %v4328 = vsel %vm473, %v4327, 0.0
    %4329 = vadd.xlane.f32.xlu0 %v4328
    %v4330 = vpop.xlane.xlu0 %4329
    %vm4331 = vcmp.gt.f32.partialorder %v4330, 0.0
    %v4332 = vsel %vm4331, %v4330, 1.0
    %v4333 = vrcp.pop %v4332
    %v4334 = vmul.f32 %v4327, %v4333
    %4335 = vrot.lane.b32.xlu0 %v3883, 112
    %v4336 = vpop.permute.xlu0 %4335
    %4337 = vrot.lane.b32.xlu0 %v3888, 112
    %v4338 = vpop.permute.xlu0 %4337
    %v4342 = vsel %vm473, %v4334, 0
    %4344 = vmatprep.subr.mxu0 0.0
    %4345 = vmatpush1.msra.mxu0 %v4336
    %4346 = vmatprep.subr.mxu0 0.0
    %4347 = vmatpush1.msra.mxu0 %v4338
    %4348 = vmatprep.subr.mxu0 0.0
    %4349 = vmatpush1.msra.mxu0 0.0
    %4350 = vmatprep.subr.mxu0 0.0
    %4351 = vmatpush1.msra.mxu0 0.0
    %4352 = vmatprep.subr.mxu0 0.0
    %4353 = vmatpush1.msra.mxu0 0.0
    %4354 = vmatprep.subr.mxu0 0.0
    %4355 = vmatpush1.msra.mxu0 0.0
    %4356 = vmatprep.subr.mxu0 0.0
    %4357 = vmatpush1.msra.mxu0 0.0
    %4358 = vmatprep.subr.mxu0 0.0
    %4359 = vmatpush1.msra.mxu0 0.0
    %4360 = vmatprep.subr.mxu0 0.0
    %4361 = vmatpush1.msra.mxu0 0.0
    %4362 = vmatprep.subr.mxu0 0.0
    %4363 = vmatpush1.msra.mxu0 0.0
    %4364 = vmatprep.subr.mxu0 0.0
    %4365 = vmatpush1.msra.mxu0 0.0
    %4366 = vmatprep.subr.mxu0 0.0
    %4367 = vmatpush1.msra.mxu0 0.0
    %4368 = vmatprep.subr.mxu0 0.0
    %4369 = vmatpush1.msra.mxu0 0.0
    %4370 = vmatprep.subr.mxu0 0.0
    %4371 = vmatpush1.msra.mxu0 0.0
    %4372 = vmatprep.subr.mxu0 0.0
    %4373 = vmatpush1.msra.mxu0 0.0
    %4374 = vmatprep.subr.mxu0 0.0
    %4375 = vmatpush1.msra.mxu0 0.0
    %4376 = vmatprep.subr.mxu0 0.0
    %4377 = vmatpush1.msra.mxu0 0.0
    %4378 = vmatprep.subr.mxu0 0.0
    %4379 = vmatpush1.msra.mxu0 0.0
    %4380 = vmatprep.subr.mxu0 0.0
    %4381 = vmatpush1.msra.mxu0 0.0
    %4382 = vmatprep.subr.mxu0 0.0
    %4383 = vmatpush1.msra.mxu0 0.0
    %4384 = vmatprep.subr.mxu0 0.0
    %4385 = vmatpush1.msra.mxu0 0.0
    %4386 = vmatprep.subr.mxu0 0.0
    %4387 = vmatpush1.msra.mxu0 0.0
    %4388 = vmatprep.subr.mxu0 0.0
    %4389 = vmatpush1.msra.mxu0 0.0
    %4390 = vmatprep.subr.mxu0 0.0
    %4391 = vmatpush1.msra.mxu0 0.0
    %4392 = vmatprep.subr.mxu0 0.0
    %4393 = vmatpush1.msra.mxu0 0.0
    %4394 = vmatprep.subr.mxu0 0.0
    %4395 = vmatpush1.msra.mxu0 0.0
    %4396 = vmatprep.subr.mxu0 0.0
    %4397 = vmatpush1.msra.mxu0 0.0
    %4398 = vmatprep.subr.mxu0 0.0
    %4399 = vmatpush1.msra.mxu0 0.0
    %4400 = vmatprep.subr.mxu0 0.0
    %4401 = vmatpush1.msra.mxu0 0.0
    %4402 = vmatprep.subr.mxu0 0.0
    %4403 = vmatpush1.msra.mxu0 0.0
    %4404 = vmatprep.subr.mxu0 0.0
    %4405 = vmatpush1.msra.mxu0 0.0
    %4406 = vmatprep.subr.mxu0 0.0
    %4407 = vmatpush1.msra.mxu0 0.0
    %4408 = vmatprep.mubr.f32.mxu0 0.0
    %4409 = vmatmul.mubr.f32.gmra.mrb[0].mxu0 %v4342
    %v4410 = vpop.f32.mrb[0].mxu0
    %v4411 = vadd.f32 0.0, %v4410
    %v4412 = vpop.f32.mrb[0].mxu0
    %4413 = vdwg.mxu0
    %4414 = vrot.lane.b32.xlu0 %v3620, 72
    %v4415 = vpop.permute.xlu0 %4414
    %4416 = vrot.lane.b32.xlu0 %v3800, 104
    %v4417 = vpop.permute.xlu0 %4416
    %4418 = vrot.lane.b32.xlu0 %v3805, 104
    %v4419 = vpop.permute.xlu0 %4418
    %v4420 = vsel %vm1161, %v4415, 0
    %v4422 = vsel %vm1161, %v4417, 0
    %v4424 = vsel %vm1161, %v4419, 0
    %4426 = vmatprep.subr.mxu0 0.0
    %4427 = vmatpush1.xpose.msra.mxu0 %v4422
    %4428 = vmatprep.subr.mxu0 0.0
    %4429 = vmatpush1.xpose.msra.mxu0 %v4424
    %4430 = vmatprep.subr.mxu0 0.0
    %4431 = vmatpush1.xpose.msra.mxu0 0.0
    %4432 = vmatprep.subr.mxu0 0.0
    %4433 = vmatpush1.xpose.msra.mxu0 0.0
    %4434 = vmatprep.subr.mxu0 0.0
    %4435 = vmatpush1.xpose.msra.mxu0 0.0
    %4436 = vmatprep.subr.mxu0 0.0
    %4437 = vmatpush1.xpose.msra.mxu0 0.0
    %4438 = vmatprep.subr.mxu0 0.0
    %4439 = vmatpush1.xpose.msra.mxu0 0.0
    %4440 = vmatprep.subr.mxu0 0.0
    %4441 = vmatpush1.xpose.msra.mxu0 0.0
    %4442 = vmatprep.subr.mxu0 0.0
    %4443 = vmatpush1.xpose.msra.mxu0 0.0
    %4444 = vmatprep.subr.mxu0 0.0
    %4445 = vmatpush1.xpose.msra.mxu0 0.0
    %4446 = vmatprep.subr.mxu0 0.0
    %4447 = vmatpush1.xpose.msra.mxu0 0.0
    %4448 = vmatprep.subr.mxu0 0.0
    %4449 = vmatpush1.xpose.msra.mxu0 0.0
    %4450 = vmatprep.subr.mxu0 0.0
    %4451 = vmatpush1.xpose.msra.mxu0 0.0
    %4452 = vmatprep.subr.mxu0 0.0
    %4453 = vmatpush1.xpose.msra.mxu0 0.0
    %4454 = vmatprep.subr.mxu0 0.0
    %4455 = vmatpush1.xpose.msra.mxu0 0.0
    %4456 = vmatprep.subr.mxu0 0.0
    %4457 = vmatpush1.xpose.msra.mxu0 0.0
    %4458 = vmatprep.subr.mxu0 0.0
    %4459 = vmatpush1.xpose.msra.mxu0 0.0
    %4460 = vmatprep.subr.mxu0 0.0
    %4461 = vmatpush1.xpose.msra.mxu0 0.0
    %4462 = vmatprep.subr.mxu0 0.0
    %4463 = vmatpush1.xpose.msra.mxu0 0.0
    %4464 = vmatprep.subr.mxu0 0.0
    %4465 = vmatpush1.xpose.msra.mxu0 0.0
    %4466 = vmatprep.subr.mxu0 0.0
    %4467 = vmatpush1.xpose.msra.mxu0 0.0
    %4468 = vmatprep.subr.mxu0 0.0
    %4469 = vmatpush1.xpose.msra.mxu0 0.0
    %4470 = vmatprep.subr.mxu0 0.0
    %4471 = vmatpush1.xpose.msra.mxu0 0.0
    %4472 = vmatprep.subr.mxu0 0.0
    %4473 = vmatpush1.xpose.msra.mxu0 0.0
    %4474 = vmatprep.subr.mxu0 0.0
    %4475 = vmatpush1.xpose.msra.mxu0 0.0
    %4476 = vmatprep.subr.mxu0 0.0
    %4477 = vmatpush1.xpose.msra.mxu0 0.0
    %4478 = vmatprep.subr.mxu0 0.0
    %4479 = vmatpush1.xpose.msra.mxu0 0.0
    %4480 = vmatprep.subr.mxu0 0.0
    %4481 = vmatpush1.xpose.msra.mxu0 0.0
    %4482 = vmatprep.subr.mxu0 0.0
    %4483 = vmatpush1.xpose.msra.mxu0 0.0
    %4484 = vmatprep.subr.mxu0 0.0
    %4485 = vmatpush1.xpose.msra.mxu0 0.0
    %4486 = vmatprep.subr.mxu0 0.0
    %4487 = vmatpush1.xpose.msra.mxu0 0.0
    %4488 = vmatprep.subr.mxu0 0.0
    %4489 = vmatpush1.xpose.msra.mxu0 0.0
    %4490 = vmatprep.mubr.f32.mxu0 0.0
    %4491 = vmatmul.mubr.f32.gmra.mrb[0].mxu0 %v4420
    %v4492 = vpop.f32.mrb[0].mxu0
    %v4493 = vadd.f32 0.0, %v4492
    %v4494 = vpop.f32.mrb[0].mxu0
    %4495 = vdwg.mxu0
    %v4496 = vsel %vm2159, %v4493, -1e+30
    %v4497 = vsel %vm473, %v4496, -inf
    %4498 = vmax.xlane.f32.xlu0 %v4497
    %v4499 = vpop.xlane.xlu0 %4498
    %v4500 = vsub.f32 %v4496, %v4499
    %v4501 = vmul.f32 %v4500, 1.442695
    %v4502 = vpow.pop %v4501
    %v4503 = vsel %vm2159, %v4502, 0.0
    %v4504 = vsel %vm473, %v4503, 0.0
    %4505 = vadd.xlane.f32.xlu0 %v4504
    %v4506 = vpop.xlane.xlu0 %4505
    %vm4507 = vcmp.gt.f32.partialorder %v4506, 0.0
    %v4508 = vsel %vm4507, %v4506, 1.0
    %v4509 = vrcp.pop %v4508
    %v4510 = vmul.f32 %v4503, %v4509
    %4511 = vrot.lane.b32.xlu0 %v3883, 104
    %v4512 = vpop.permute.xlu0 %4511
    %4513 = vrot.lane.b32.xlu0 %v3888, 104
    %v4514 = vpop.permute.xlu0 %4513
    %v4518 = vsel %vm473, %v4510, 0
    %4520 = vmatprep.subr.mxu0 0.0
    %4521 = vmatpush1.msra.mxu0 %v4512
    %4522 = vmatprep.subr.mxu0 0.0
    %4523 = vmatpush1.msra.mxu0 %v4514
    %4524 = vmatprep.subr.mxu0 0.0
    %4525 = vmatpush1.msra.mxu0 0.0
    %4526 = vmatprep.subr.mxu0 0.0
    %4527 = vmatpush1.msra.mxu0 0.0
    %4528 = vmatprep.subr.mxu0 0.0
    %4529 = vmatpush1.msra.mxu0 0.0
    %4530 = vmatprep.subr.mxu0 0.0
    %4531 = vmatpush1.msra.mxu0 0.0
    %4532 = vmatprep.subr.mxu0 0.0
    %4533 = vmatpush1.msra.mxu0 0.0
    %4534 = vmatprep.subr.mxu0 0.0
    %4535 = vmatpush1.msra.mxu0 0.0
    %4536 = vmatprep.subr.mxu0 0.0
    %4537 = vmatpush1.msra.mxu0 0.0
    %4538 = vmatprep.subr.mxu0 0.0
    %4539 = vmatpush1.msra.mxu0 0.0
    %4540 = vmatprep.subr.mxu0 0.0
    %4541 = vmatpush1.msra.mxu0 0.0
    %4542 = vmatprep.subr.mxu0 0.0
    %4543 = vmatpush1.msra.mxu0 0.0
    %4544 = vmatprep.subr.mxu0 0.0
    %4545 = vmatpush1.msra.mxu0 0.0
    %4546 = vmatprep.subr.mxu0 0.0
    %4547 = vmatpush1.msra.mxu0 0.0
    %4548 = vmatprep.subr.mxu0 0.0
    %4549 = vmatpush1.msra.mxu0 0.0
    %4550 = vmatprep.subr.mxu0 0.0
    %4551 = vmatpush1.msra.mxu0 0.0
    %4552 = vmatprep.subr.mxu0 0.0
    %4553 = vmatpush1.msra.mxu0 0.0
    %4554 = vmatprep.subr.mxu0 0.0
    %4555 = vmatpush1.msra.mxu0 0.0
    %4556 = vmatprep.subr.mxu0 0.0
    %4557 = vmatpush1.msra.mxu0 0.0
    %4558 = vmatprep.subr.mxu0 0.0
    %4559 = vmatpush1.msra.mxu0 0.0
    %4560 = vmatprep.subr.mxu0 0.0
    %4561 = vmatpush1.msra.mxu0 0.0
    %4562 = vmatprep.subr.mxu0 0.0
    %4563 = vmatpush1.msra.mxu0 0.0
    %4564 = vmatprep.subr.mxu0 0.0
    %4565 = vmatpush1.msra.mxu0 0.0
    %4566 = vmatprep.subr.mxu0 0.0
    %4567 = vmatpush1.msra.mxu0 0.0
    %4568 = vmatprep.subr.mxu0 0.0
    %4569 = vmatpush1.msra.mxu0 0.0
    %4570 = vmatprep.subr.mxu0 0.0
    %4571 = vmatpush1.msra.mxu0 0.0
    %4572 = vmatprep.subr.mxu0 0.0
    %4573 = vmatpush1.msra.mxu0 0.0
    %4574 = vmatprep.subr.mxu0 0.0
    %4575 = vmatpush1.msra.mxu0 0.0
    %4576 = vmatprep.subr.mxu0 0.0
    %4577 = vmatpush1.msra.mxu0 0.0
    %4578 = vmatprep.subr.mxu0 0.0
    %4579 = vmatpush1.msra.mxu0 0.0
    %4580 = vmatprep.subr.mxu0 0.0
    %4581 = vmatpush1.msra.mxu0 0.0
    %4582 = vmatprep.subr.mxu0 0.0
    %4583 = vmatpush1.msra.mxu0 0.0
    %4584 = vmatprep.mubr.f32.mxu0 0.0
    %4585 = vmatmul.mubr.f32.gmra.mrb[0].mxu0 %v4518
    %v4586 = vpop.f32.mrb[0].mxu0
    %v4587 = vadd.f32 0.0, %v4586
    %v4588 = vpop.f32.mrb[0].mxu0
    %4589 = vdwg.mxu0
    %4591 = vrot.lane.b32.xlu0 %v4235, 8
    %v4592 = vpop.permute.xlu0 %4591
    %4595 = vrot.lane.b32.xlu0 %v4411, 16
    %v4596 = vpop.permute.xlu0 %4595
    %4599 = vrot.lane.b32.xlu0 %v4587, 24
    %v4600 = vpop.permute.xlu0 %4599
    %v4602 = vsel %vm1161, %v4057, %v4592
    %v4603 = vsel %vm473, %v4602, %v4596
    %v4604 = vsel %vm646, %v4603, %v4600
    %s4605 = scalar_lea.vmem [#allocation29], 32
    %v4606 = vld [vmem:[%s4605] sm:$0xff]
    %v4607 = vld [vmem:[%s4605 + $0x8] sm:$0xff]
    %v4608 = vld [vmem:[%s4605 + $0x10] sm:$0xff]
    %v4609 = vld [vmem:[%s4605 + $0x18] sm:$0xff]
    %s4610 = scalar_lea.vmem [#allocation31], 1
    %v4611 = vld [vmem:[%s4610] sm:$0x1]
    %s4612 = scalar_lea.vmem %s49, 1
    %v4613 = vld [vmem:[%s4612] sm:$0x1]
    %v4614 = vmul.f32 %v4604, 0.5
    %v4615 = vmul.f32 %v4604, 0.70710677
    %v4616 = vand.u32 2147483647, %v4615
    %v4617 = vmul.f32 %v4616, 0.3275911
    %v4618 = vadd.f32 %v4617, 1.0
    %v4619 = vrcp.pop %v4618
    %v4620 = vmul.f32 1.0, %v4619
    %v4621 = vmul.f32 %v4620, 1.0614054
    %v4622 = vadd.f32 %v4621, -1.4531521
    %v4623 = vmul.f32 %v4622, %v4620
    %v4624 = vadd.f32 %v4623, 1.4214138
    %v4625 = vmul.f32 %v4624, %v4620
    %v4626 = vadd.f32 %v4625, -0.28449672
    %v4627 = vmul.f32 %v4626, %v4620
    %v4628 = vadd.f32 %v4627, 0.2548296
    %v4629 = vmul.f32 %v4628, %v4620
    %v4630 = vmul.f32 %v4616, %v4616
    %v4631 = vsub.f32 0.0, %v4630
    %v4632 = vmul.f32 %v4631, 1.442695
    %v4633 = vpow.pop %v4632
    %v4634 = vmul.f32 %v4629, %v4633
    %v4635 = vsub.f32 1.0, %v4634
    %vm4636 = vcmp.ge.f32.partialorder %v4615, 0.0
    %v4637 = vsub.f32 0.0, %v4635
    %v4638 = vsel %vm4636, %v4635, %v4637
    %v4639 = vadd.f32 %v4638, 1.0
    %v4640 = vmul.f32 %v4614, %v4639
    %v4642 = vlaneseq
    %v4643 = vshrl.u32 %v4642, 7
    %v4644 = vsub.s32 0, %v4643
    %v4645 = vrot.slane %v4611, %v4644
    %v4648 = vsel %vm554, %v4640, 0
    %4650 = vmatprep.subr.mxu0 0.0
    %4651 = vmatpush1.msra.mxu0 %v4606
    %4652 = vmatprep.subr.mxu0 0.0
    %4653 = vmatpush1.msra.mxu0 %v4607
    %4654 = vmatprep.subr.mxu0 0.0
    %4655 = vmatpush1.msra.mxu0 %v4608
    %4656 = vmatprep.subr.mxu0 0.0
    %4657 = vmatpush1.msra.mxu0 %v4609
    %4658 = vmatprep.subr.mxu0 0.0
    %4659 = vmatpush1.msra.mxu0 0.0
    %4660 = vmatprep.subr.mxu0 0.0
    %4661 = vmatpush1.msra.mxu0 0.0
    %4662 = vmatprep.subr.mxu0 0.0
    %4663 = vmatpush1.msra.mxu0 0.0
    %4664 = vmatprep.subr.mxu0 0.0
    %4665 = vmatpush1.msra.mxu0 0.0
    %4666 = vmatprep.subr.mxu0 0.0
    %4667 = vmatpush1.msra.mxu0 0.0
    %4668 = vmatprep.subr.mxu0 0.0
    %4669 = vmatpush1.msra.mxu0 0.0
    %4670 = vmatprep.subr.mxu0 0.0
    %4671 = vmatpush1.msra.mxu0 0.0
    %4672 = vmatprep.subr.mxu0 0.0
    %4673 = vmatpush1.msra.mxu0 0.0
    %4674 = vmatprep.subr.mxu0 0.0
    %4675 = vmatpush1.msra.mxu0 0.0
    %4676 = vmatprep.subr.mxu0 0.0
    %4677 = vmatpush1.msra.mxu0 0.0
    %4678 = vmatprep.subr.mxu0 0.0
    %4679 = vmatpush1.msra.mxu0 0.0
    %4680 = vmatprep.subr.mxu0 0.0
    %4681 = vmatpush1.msra.mxu0 0.0
    %4682 = vmatprep.subr.mxu0 0.0
    %4683 = vmatpush1.msra.mxu0 0.0
    %4684 = vmatprep.subr.mxu0 0.0
    %4685 = vmatpush1.msra.mxu0 0.0
    %4686 = vmatprep.subr.mxu0 0.0
    %4687 = vmatpush1.msra.mxu0 0.0
    %4688 = vmatprep.subr.mxu0 0.0
    %4689 = vmatpush1.msra.mxu0 0.0
    %4690 = vmatprep.subr.mxu0 0.0
    %4691 = vmatpush1.msra.mxu0 0.0
    %4692 = vmatprep.subr.mxu0 0.0
    %4693 = vmatpush1.msra.mxu0 0.0
    %4694 = vmatprep.subr.mxu0 0.0
    %4695 = vmatpush1.msra.mxu0 0.0
    %4696 = vmatprep.subr.mxu0 0.0
    %4697 = vmatpush1.msra.mxu0 0.0
    %4698 = vmatprep.subr.mxu0 0.0
    %4699 = vmatpush1.msra.mxu0 0.0
    %4700 = vmatprep.subr.mxu0 0.0
    %4701 = vmatpush1.msra.mxu0 0.0
    %4702 = vmatprep.subr.mxu0 0.0
    %4703 = vmatpush1.msra.mxu0 0.0
    %4704 = vmatprep.subr.mxu0 0.0
    %4705 = vmatpush1.msra.mxu0 0.0
    %4706 = vmatprep.subr.mxu0 0.0
    %4707 = vmatpush1.msra.mxu0 0.0
    %4708 = vmatprep.subr.mxu0 0.0
    %4709 = vmatpush1.msra.mxu0 0.0
    %4710 = vmatprep.subr.mxu0 0.0
    %4711 = vmatpush1.msra.mxu0 0.0
    %4712 = vmatprep.subr.mxu0 0.0
    %4713 = vmatpush1.msra.mxu0 0.0
    %4714 = vmatprep.mubr.f32.mxu0 0.0
    %4715 = vmatmul.mubr.f32.gmra.mrb[0].mxu0 %v4648
    %v4716 = vpop.f32.mrb[0].mxu0
    %v4717 = vadd.f32 %v4645, %v4716
    %v4718 = vpop.f32.mrb[0].mxu0
    %4719 = vdwg.mxu0
    %v4721 = vlaneseq
    %v4722 = vshrl.u32 %v4721, 7
    %v4723 = vsub.s32 0, %v4722
    %v4724 = vrot.slane %v4613, %v4723
    %4725 = vset.pattern.permute.xlu0 0
    %4726 = vperm.xlu0 %4725, %v4724
    %v4727 = vpop.permute.xlu0 %4726
    %v4729 = vmul.f32 %v4727, %v4717
    %v4730 = vsub.f32 1.0, %v4613
    %v4732 = vlaneseq
    %v4733 = vshrl.u32 %v4732, 7
    %v4734 = vsub.s32 0, %v4733
    %v4735 = vrot.slane %v4730, %v4734
    %4736 = vset.pattern.permute.xlu0 0
    %4737 = vperm.xlu0 %4736, %v4735
    %v4738 = vpop.permute.xlu0 %4737
    %v4740 = vmul.f32 %v4738, %v3348
    %v4741 = vadd.f32 %v4729, %v4740
    %s4742 = scalar_lea.vmem %s53, 32
    %v4743 = vld [vmem:[%s4742] sm:$0xff]
    %v4744 = vld [vmem:[%s4742 + $0x8] sm:$0xff]
    %v4745 = vld [vmem:[%s4742 + $0x10] sm:$0xff]
    %v4746 = vld [vmem:[%s4742 + $0x18] sm:$0xff]
    %s4747 = scalar_lea.vmem %s55, 1
    %v4748 = vld [vmem:[%s4747] sm:$0x1]
    %s4749 = scalar_lea.vmem [#allocation35], 32
    %v4750 = vld [vmem:[%s4749] sm:$0xff]
    %v4751 = vld [vmem:[%s4749 + $0x8] sm:$0xff]
    %v4752 = vld [vmem:[%s4749 + $0x10] sm:$0xff]
    %v4753 = vld [vmem:[%s4749 + $0x18] sm:$0xff]
    %s4754 = scalar_lea.vmem %s59, 1
    %v4755 = vld [vmem:[%s4754] sm:$0x1]
    %v4757 = vlaneseq
    %v4758 = vshrl.u32 %v4757, 7
    %v4759 = vsub.s32 0, %v4758
    %v4760 = vrot.slane %v4748, %v4759
    %v4763 = vsel %vm554, %v4741, 0
    %4765 = vmatprep.subr.mxu0 0.0
    %4766 = vmatpush1.msra.mxu0 %v4743
    %4767 = vmatprep.subr.mxu0 0.0
    %4768 = vmatpush1.msra.mxu0 %v4744
    %4769 = vmatprep.subr.mxu0 0.0
    %4770 = vmatpush1.msra.mxu0 %v4745
    %4771 = vmatprep.subr.mxu0 0.0
    %4772 = vmatpush1.msra.mxu0 %v4746
    %4773 = vmatprep.subr.mxu0 0.0
    %4774 = vmatpush1.msra.mxu0 0.0
    %4775 = vmatprep.subr.mxu0 0.0
    %4776 = vmatpush1.msra.mxu0 0.0
    %4777 = vmatprep.subr.mxu0 0.0
    %4778 = vmatpush1.msra.mxu0 0.0
    %4779 = vmatprep.subr.mxu0 0.0
    %4780 = vmatpush1.msra.mxu0 0.0
    %4781 = vmatprep.subr.mxu0 0.0
    %4782 = vmatpush1.msra.mxu0 0.0
    %4783 = vmatprep.subr.mxu0 0.0
    %4784 = vmatpush1.msra.mxu0 0.0
    %4785 = vmatprep.subr.mxu0 0.0
    %4786 = vmatpush1.msra.mxu0 0.0
    %4787 = vmatprep.subr.mxu0 0.0
    %4788 = vmatpush1.msra.mxu0 0.0
    %4789 = vmatprep.subr.mxu0 0.0
    %4790 = vmatpush1.msra.mxu0 0.0
    %4791 = vmatprep.subr.mxu0 0.0
    %4792 = vmatpush1.msra.mxu0 0.0
    %4793 = vmatprep.subr.mxu0 0.0
    %4794 = vmatpush1.msra.mxu0 0.0
    %4795 = vmatprep.subr.mxu0 0.0
    %4796 = vmatpush1.msra.mxu0 0.0
    %4797 = vmatprep.subr.mxu0 0.0
    %4798 = vmatpush1.msra.mxu0 0.0
    %4799 = vmatprep.subr.mxu0 0.0
    %4800 = vmatpush1.msra.mxu0 0.0
    %4801 = vmatprep.subr.mxu0 0.0
    %4802 = vmatpush1.msra.mxu0 0.0
    %4803 = vmatprep.subr.mxu0 0.0
    %4804 = vmatpush1.msra.mxu0 0.0
    %4805 = vmatprep.subr.mxu0 0.0
    %4806 = vmatpush1.msra.mxu0 0.0
    %4807 = vmatprep.subr.mxu0 0.0
    %4808 = vmatpush1.msra.mxu0 0.0
    %4809 = vmatprep.subr.mxu0 0.0
    %4810 = vmatpush1.msra.mxu0 0.0
    %4811 = vmatprep.subr.mxu0 0.0
    %4812 = vmatpush1.msra.mxu0 0.0
    %4813 = vmatprep.subr.mxu0 0.0
    %4814 = vmatpush1.msra.mxu0 0.0
    %4815 = vmatprep.subr.mxu0 0.0
    %4816 = vmatpush1.msra.mxu0 0.0
    %4817 = vmatprep.subr.mxu0 0.0
    %4818 = vmatpush1.msra.mxu0 0.0
    %4819 = vmatprep.subr.mxu0 0.0
    %4820 = vmatpush1.msra.mxu0 0.0
    %4821 = vmatprep.subr.mxu0 0.0
    %4822 = vmatpush1.msra.mxu0 0.0
    %4823 = vmatprep.subr.mxu0 0.0
    %4824 = vmatpush1.msra.mxu0 0.0
    %4825 = vmatprep.subr.mxu0 0.0
    %4826 = vmatpush1.msra.mxu0 0.0
    %4827 = vmatprep.subr.mxu0 0.0
    %4828 = vmatpush1.msra.mxu0 0.0
    %4829 = vmatprep.mubr.f32.mxu0 0.0
    %4830 = vmatmul.mubr.f32.gmra.mrb[0].mxu0 %v4763
    %v4831 = vpop.f32.mrb[0].mxu0
    %v4832 = vadd.f32 %v4760, %v4831
    %v4833 = vpop.f32.mrb[0].mxu0
    %4834 = vdwg.mxu0
    %v4835 = vmax.f32 %v4832, 0.0
    %v4837 = vlaneseq
    %v4838 = vshrl.u32 %v4837, 7
    %v4839 = vsub.s32 0, %v4838
    %v4840 = vrot.slane %v4755, %v4839
    %v4843 = vsel %vm554, %v4835, 0
    %4845 = vmatprep.subr.mxu0 0.0
    %4846 = vmatpush1.msra.mxu0 %v4750
    %4847 = vmatprep.subr.mxu0 0.0
    %4848 = vmatpush1.msra.mxu0 %v4751
    %4849 = vmatprep.subr.mxu0 0.0
    %4850 = vmatpush1.msra.mxu0 %v4752
    %4851 = vmatprep.subr.mxu0 0.0
    %4852 = vmatpush1.msra.mxu0 %v4753
    %4853 = vmatprep.subr.mxu0 0.0
    %4854 = vmatpush1.msra.mxu0 0.0
    %4855 = vmatprep.subr.mxu0 0.0
    %4856 = vmatpush1.msra.mxu0 0.0
    %4857 = vmatprep.subr.mxu0 0.0
    %4858 = vmatpush1.msra.mxu0 0.0
    %4859 = vmatprep.subr.mxu0 0.0
    %4860 = vmatpush1.msra.mxu0 0.0
    %4861 = vmatprep.subr.mxu0 0.0
    %4862 = vmatpush1.msra.mxu0 0.0
    %4863 = vmatprep.subr.mxu0 0.0
    %4864 = vmatpush1.msra.mxu0 0.0
    %4865 = vmatprep.subr.mxu0 0.0
    %4866 = vmatpush1.msra.mxu0 0.0
    %4867 = vmatprep.subr.mxu0 0.0
    %4868 = vmatpush1.msra.mxu0 0.0
    %4869 = vmatprep.subr.mxu0 0.0
    %4870 = vmatpush1.msra.mxu0 0.0
    %4871 = vmatprep.subr.mxu0 0.0
    %4872 = vmatpush1.msra.mxu0 0.0
    %4873 = vmatprep.subr.mxu0 0.0
    %4874 = vmatpush1.msra.mxu0 0.0
    %4875 = vmatprep.subr.mxu0 0.0
    %4876 = vmatpush1.msra.mxu0 0.0
    %4877 = vmatprep.subr.mxu0 0.0
    %4878 = vmatpush1.msra.mxu0 0.0
    %4879 = vmatprep.subr.mxu0 0.0
    %4880 = vmatpush1.msra.mxu0 0.0
    %4881 = vmatprep.subr.mxu0 0.0
    %4882 = vmatpush1.msra.mxu0 0.0
    %4883 = vmatprep.subr.mxu0 0.0
    %4884 = vmatpush1.msra.mxu0 0.0
    %4885 = vmatprep.subr.mxu0 0.0
    %4886 = vmatpush1.msra.mxu0 0.0
    %4887 = vmatprep.subr.mxu0 0.0
    %4888 = vmatpush1.msra.mxu0 0.0
    %4889 = vmatprep.subr.mxu0 0.0
    %4890 = vmatpush1.msra.mxu0 0.0
    %4891 = vmatprep.subr.mxu0 0.0
    %4892 = vmatpush1.msra.mxu0 0.0
    %4893 = vmatprep.subr.mxu0 0.0
    %4894 = vmatpush1.msra.mxu0 0.0
    %4895 = vmatprep.subr.mxu0 0.0
    %4896 = vmatpush1.msra.mxu0 0.0
    %4897 = vmatprep.subr.mxu0 0.0
    %4898 = vmatpush1.msra.mxu0 0.0
    %4899 = vmatprep.subr.mxu0 0.0
    %4900 = vmatpush1.msra.mxu0 0.0
    %4901 = vmatprep.subr.mxu0 0.0
    %4902 = vmatpush1.msra.mxu0 0.0
    %4903 = vmatprep.subr.mxu0 0.0
    %4904 = vmatpush1.msra.mxu0 0.0
    %4905 = vmatprep.subr.mxu0 0.0
    %4906 = vmatpush1.msra.mxu0 0.0
    %4907 = vmatprep.subr.mxu0 0.0
    %4908 = vmatpush1.msra.mxu0 0.0
    %4909 = vmatprep.mubr.f32.mxu0 0.0
    %4910 = vmatmul.mubr.f32.gmra.mrb[0].mxu0 %v4843
    %v4911 = vpop.f32.mrb[0].mxu0
    %v4912 = vadd.f32 %v4840, %v4911
    %v4913 = vpop.f32.mrb[0].mxu0
    %4914 = vdwg.mxu0
    %v4915 = vmax.f32 %v4912, 0.0
    %4916 = vst.msk [vmem:[#allocation40] sm:$0xff] %vm554, %v4915
    // Predicated region
    $region234: #{tpu_custom_call.1} parent=1 // pred_check
      _
    $region235: #{tpu_custom_call.1} parent=1 // pred_check_branch
      %4918 = sbr.rel (0) target = $region237
    $region236: #{tpu_custom_call.1} parent=1 // pred_region
      %s4920 = ssub.s32 128, 128
      %4921 = vsyncadd [#allocation4], %s4920
      %s4923 = sshll.u32 [#allocation40], 4
      %s4924 = int_to_ptr.vmem [resolvable:$true] %s4923
      %4926 = dma.vmem_to_hbm [thread:$0]  %s4924, 128, %s69, [#allocation4]
    $region237: #{tpu_custom_call.1} parent=1 // pred_fallthru
      _
    // Predicated region
    $region238: #{tpu_custom_call.1} parent=1 // pred_check
      _
    $region239: #{tpu_custom_call.1} parent=1 // pred_check_branch
      %4928 = sbr.rel (0) target = $region241
    $region240: #{tpu_custom_call.1} parent=1 // pred_region
      %4929 = dma.done [#allocation4], 128
    $region241: #{tpu_custom_call.1} parent=1 // pred_fallthru
      _
    %4930 = vsyncpa [#allocation3], 1
    %4931 = vsyncpa [#allocation6], 1
    %4932 = vsyncpa [#allocation9], 1
    %4933 = vsyncpa [#allocation12], 1
    %4934 = vsyncpa [#allocation15], 1
    %4935 = vsyncpa [#allocation18], 1
    %4936 = vsyncpa [#allocation21], 1
    %4937 = vsyncpa [#allocation24], 1
    %4938 = vsyncpa [#allocation27], 1
    %4939 = vsyncpa [#allocation30], 1
    %4940 = vsyncpa [#allocation33], 1
    %4941 = vsyncpa [#allocation36], 1
    %4942 = vsyncpa [#allocation39], 1
    %4943 = vsyncpa [#allocation4], 1

</llo_original>
